<compile_context>
chip_gen: v7x
topology: tpu7x:2x2x1
jax: 0.10.0
libtpu: 0.0.40
codegen_flags: <defaults>
</compile_context>

<pallas_src>
import functools

import jax
import jax.numpy as jnp
from jax.experimental import pallas as pl
from jax.experimental.pallas import tpu as pltpu

HIDDEN = 400
HIDDEN_PAD = 512     # lane-dense multiple of 128
LATENT_PAD = 128     # lane-dense multiple of 128


def _vae_kernel(x_ref, eps_ref,
                w1_ref, b1_ref, w2_ref, b2_ref,
                wml_ref, bml_ref,
                dw1_ref, db1_ref, dw2_ref, db2_ref,
                mulogvar_ref, out_ref):
    f32 = jnp.float32
    bf16 = jnp.bfloat16

    # ---- encoder ----
    x = x_ref[...].astype(bf16)                                   # [B, D]
    h = jnp.dot(x, w1_ref[...], preferred_element_type=f32) + b1_ref[...]
    h = jnp.maximum(h, 0.0)                                       # en_relu1 (f32)
    h = jnp.dot(h.astype(bf16), w2_ref[...], preferred_element_type=f32) + b2_ref[...]
    h = jnp.maximum(h, 0.0)                                       # en_relu2 (f32)

    # fused mu||logvar projection -> single lane-dense [B, 2*Lp] block
    ml = jnp.dot(h.astype(bf16), wml_ref[...], preferred_element_type=f32) + bml_ref[...]
    mulogvar_ref[...] = ml

    lp = ml.shape[1] // 2
    mu = ml[:, :lp]
    logvar = ml[:, lp:]

    # ---- reparameterize: z = mu + eps * exp(0.5 * logvar)  (f32 VPU/EUP) ----
    std = jnp.exp(0.5 * logvar)
    z = mu + eps_ref[...] * std                                   # [B, Lp]

    # ---- decoder ----
    d = jnp.dot(z.astype(bf16), dw1_ref[...], preferred_element_type=f32) + db1_ref[...]
    d = jnp.maximum(d, 0.0)                                       # de_relu1
    logits = jnp.dot(d.astype(bf16), dw2_ref[...], preferred_element_type=f32) + db2_ref[...]
    out_ref[...] = jax.nn.sigmoid(logits)                         # [B, D]


def _vmem_spec():
    # Whole-array blocks resident in VMEM (total footprint ~2 MiB in bf16).
    return pl.BlockSpec(memory_space=pltpu.MemorySpace.VMEM)


@functools.partial(jax.jit, static_argnames=("input_dim",))
def vae_forward(x, eps, packed, *, input_dim):
    """Mirrors VAE.forward: returns (en_mu, en_logvar, output)."""
    B = x.shape[0]
    D = 1
    for d in input_dim:
        D *= d
    L = eps.shape[1]                         # true latent dim (20)
    Lp = packed["wml"].shape[1] // 2         # padded latent dim (128)
    Hp = packed["w1"].shape[1]               # padded hidden dim (512)

    x_flat = x.reshape(B, D).astype(jnp.float32)                  # x.view(-1, flat)
    eps_p = jnp.pad(eps.astype(jnp.float32), ((0, 0), (0, Lp - L)))

    args = (
        x_flat, eps_p,
        packed["w1"], packed["b1"], packed["w2"], packed["b2"],
        packed["wml"], packed["bml"],
        packed["dw1"], packed["db1"], packed["dw2"], packed["db2"],
    )

    # Advisory cost hint: weight-DMA dominated (bf16 weights) + small matmuls.
    flops = 2 * B * (D * Hp + Hp * Hp + Hp * 2 * Lp + Lp * Hp + Hp * D)
    transcendentals = B * (Lp + D)           # exp(std) + sigmoid
    weight_bytes = 2 * (D * Hp + Hp * Hp + Hp * 2 * Lp + Lp * Hp + Hp * D)   # bf16
    bias_bytes = 4 * (Hp + Hp + 2 * Lp + Hp + D)
    io_bytes = 4 * (B * D + B * Lp + B * 2 * Lp + B * D)
    cost = pl.CostEstimate(flops=flops, transcendentals=transcendentals,
                           bytes_accessed=weight_bytes + bias_bytes + io_bytes)

    mulogvar, out_flat = pl.pallas_call(
        _vae_kernel,
        out_shape=(
            jax.ShapeDtypeStruct((B, 2 * Lp), jnp.float32),
            jax.ShapeDtypeStruct((B, D), jnp.float32),
        ),
        in_specs=[_vmem_spec() for _ in args],
        out_specs=(_vmem_spec(), _vmem_spec()),
        cost_estimate=cost,
    )(*args)

    mu = mulogvar[:, :L]
    logvar = mulogvar[:, Lp:Lp + L]
    output = out_flat.reshape((B,) + tuple(input_dim))            # x.view(out_dim).sigmoid()
    return mu, logvar, output


def init_params(key, input_dim_flat, latent_dim=20, hidden=HIDDEN):
    """Deterministic PyTorch-Linear-style init; weights stored transposed as [in, out]."""
    def linear(key, fan_in, fan_out):
        kw, kb = jax.random.split(key)
        bound = 1.0 / jnp.sqrt(fan_in)
        w = jax.random.uniform(kw, (fan_in, fan_out), jnp.float32, -bound, bound)
        b = jax.random.uniform(kb, (1, fan_out), jnp.float32, -bound, bound)
        return w, b

    keys = jax.random.split(key, 7)
    w1, b1 = linear(keys[0], input_dim_flat, hidden)      # en_fc1
    w2, b2 = linear(keys[1], hidden, hidden)              # en_fc2
    wmu, bmu = linear(keys[2], hidden, latent_dim)        # en_mu
    wlv, blv = linear(keys[3], hidden, latent_dim)        # en_logvar
    dw1, db1 = linear(keys[4], latent_dim, hidden)        # de_fc1
    dw2, db2 = linear(keys[5], hidden, input_dim_flat)    # de_fc2
    return dict(w1=w1, b1=b1, w2=w2, b2=b2, wmu=wmu, bmu=bmu,
                wlv=wlv, blv=blv, dw1=dw1, db1=db1, dw2=dw2, db2=db2)


def pack_params(params, *, input_dim_flat, hidden_pad=HIDDEN_PAD, latent_pad=LATENT_PAD):
    """Zero-pad to lane-dense shapes, cast weights to bf16, fuse mu||logvar head."""
    def padw(w, rows, cols):
        return jnp.pad(w, ((0, rows - w.shape[0]), (0, cols - w.shape[1])))

    def padb(b, cols):
        return jnp.pad(b, ((0, 0), (0, cols - b.shape[1])))

    w1 = padw(params["w1"], input_dim_flat, hidden_pad).astype(jnp.bfloat16)
    b1 = padb(params["b1"], hidden_pad)
    w2 = padw(params["w2"], hidden_pad, hidden_pad).astype(jnp.bfloat16)
    b2 = padb(params["b2"], hidden_pad)
    wml = jnp.concatenate(
        [padw(params["wmu"], hidden_pad, latent_pad),
         padw(params["wlv"], hidden_pad, latent_pad)], axis=1).astype(jnp.bfloat16)
    bml = jnp.concatenate(
        [padb(params["bmu"], latent_pad), padb(params["blv"], latent_pad)], axis=1)
    dw1 = padw(params["dw1"], latent_pad, hidden_pad).astype(jnp.bfloat16)
    db1 = padb(params["db1"], hidden_pad)
    dw2 = padw(params["dw2"], hidden_pad, input_dim_flat).astype(jnp.bfloat16)
    db2 = padb(params["db2"], input_dim_flat)
    return dict(w1=w1, b1=b1, w2=w2, b2=b2, wml=wml, bml=bml,
                dw1=dw1, db1=db1, dw2=dw2, db2=db2)


def vae_forward_ref(x, eps, params, input_dim):
    """Pure-JAX f32 reference for correctness checking (unpadded, unfused)."""
    B = x.shape[0]
    D = 1
    for d in input_dim:
        D *= d
    xf = x.reshape(B, D).astype(jnp.float32)
    h = jnp.maximum(xf @ params["w1"] + params["b1"], 0.0)
    h = jnp.maximum(h @ params["w2"] + params["b2"], 0.0)
    mu = h @ params["wmu"] + params["bmu"]
    logvar = h @ params["wlv"] + params["blv"]
    z = mu + eps * jnp.exp(0.5 * logvar)
    d = jnp.maximum(z @ params["dw1"] + params["db1"], 0.0)
    out = jax.nn.sigmoid(d @ params["dw2"] + params["db2"])
    return mu, logvar, out.reshape((B,) + tuple(input_dim))


if __name__ == "__main__":
    key = jax.random.PRNGKey(0)
    k_x, k_eps, k_p = jax.random.split(key, 3)

    B = 2
    input_dim = (4, 16, 16)          # C, H, W  (NCHW input -> x: [2, 4, 16, 16])
    latent_dim = 20
    input_dim_flat = 4 * 16 * 16     # 1024

    x = jax.random.normal(k_x, (B,) + input_dim, dtype=jnp.float32)
    eps = jax.random.normal(k_eps, (B, latent_dim), dtype=jnp.float32)
    params = init_params(k_p, input_dim_flat, latent_dim)
    packed = pack_params(params, input_dim_flat=input_dim_flat)

    mu, logvar, output = vae_forward(x, eps, packed, input_dim=input_dim)
    jax.block_until_ready((mu, logvar, output))

    # Sanity check against full-precision pure-JAX reference (bf16 weights in the
    # kernel -> loosened tolerance per review).
    mu_r, logvar_r, out_r = vae_forward_ref(x, eps, params, input_dim)
    assert mu.shape == (B, latent_dim)
    assert logvar.shape == (B, latent_dim)
    assert output.shape == (B,) + input_dim
    assert jnp.allclose(mu, mu_r, atol=2e-2, rtol=2e-2)
    assert jnp.allclose(logvar, logvar_r, atol=2e-2, rtol=2e-2)
    assert jnp.allclose(output, out_r, atol=2e-2, rtol=2e-2)

    print("KERNEL_OK")
</pallas_src>

<mosaic_0001>
module attributes {stable_mosaic.version = 11 : i64} {
  func.func @_vae_kernel(%arg0: memref<2x1024xf32, #tpu.memory_space<vmem>>, %arg1: memref<2x128xf32, #tpu.memory_space<vmem>>, %arg2: memref<1024x512xbf16, #tpu.memory_space<vmem>>, %arg3: memref<1x512xf32, #tpu.memory_space<vmem>>, %arg4: memref<512x512xbf16, #tpu.memory_space<vmem>>, %arg5: memref<1x512xf32, #tpu.memory_space<vmem>>, %arg6: memref<512x256xbf16, #tpu.memory_space<vmem>>, %arg7: memref<1x256xf32, #tpu.memory_space<vmem>>, %arg8: memref<128x512xbf16, #tpu.memory_space<vmem>>, %arg9: memref<1x512xf32, #tpu.memory_space<vmem>>, %arg10: memref<512x1024xbf16, #tpu.memory_space<vmem>>, %arg11: memref<1x1024xf32, #tpu.memory_space<vmem>>, %arg12: memref<2x256xf32, #tpu.memory_space<vmem>>, %arg13: memref<2x1024xf32, #tpu.memory_space<vmem>>) attributes {dimension_semantics = [], scalar_prefetch = 0 : i64, scratch_operands = 0 : i64, tpu.core_type = #tpu.core_type<tc>} {
    %c0 = arith.constant 0 : index
    %c0_0 = arith.constant 0 : index
    %0 = vector.load %arg0[%c0, %c0_0] : memref<2x1024xf32, #tpu.memory_space<vmem>>, vector<2x1024xf32>
    %1 = arith.truncf %0 : vector<2x1024xf32> to vector<2x1024xbf16>
    %c0_1 = arith.constant 0 : index
    %c0_2 = arith.constant 0 : index
    %2 = vector.load %arg2[%c0_1, %c0_2] : memref<1024x512xbf16, #tpu.memory_space<vmem>>, vector<1024x512xbf16>
    %cst = arith.constant dense<0.000000e+00> : vector<2x512xf32>
    %3 = tpu.matmul %1, %2, %cst {dimension_numbers = #tpu.dot_dimension_numbers<[1], [0], [0], [1], [0, 0, 1, 1], [], []>} : vector<2x1024xbf16>, vector<1024x512xbf16>, vector<2x512xf32> -> vector<2x512xf32>
    %c0_3 = arith.constant 0 : index
    %c0_4 = arith.constant 0 : index
    %4 = vector.load %arg3[%c0_3, %c0_4] : memref<1x512xf32, #tpu.memory_space<vmem>>, vector<1x512xf32>
    %5 = vector.broadcast %4 : vector<1x512xf32> to vector<2x512xf32>
    %6 = arith.addf %3, %5 : vector<2x512xf32>
    %cst_5 = arith.constant 0.000000e+00 : f32
    %7 = vector.broadcast %cst_5 : f32 to vector<2x512xf32>
    %8 = arith.maximumf %6, %7 : vector<2x512xf32>
    %9 = arith.truncf %8 : vector<2x512xf32> to vector<2x512xbf16>
    %c0_6 = arith.constant 0 : index
    %c0_7 = arith.constant 0 : index
    %10 = vector.load %arg4[%c0_6, %c0_7] : memref<512x512xbf16, #tpu.memory_space<vmem>>, vector<512x512xbf16>
    %cst_8 = arith.constant dense<0.000000e+00> : vector<2x512xf32>
    %11 = tpu.matmul %9, %10, %cst_8 {dimension_numbers = #tpu.dot_dimension_numbers<[1], [0], [0], [1], [0, 0, 1, 1], [], []>} : vector<2x512xbf16>, vector<512x512xbf16>, vector<2x512xf32> -> vector<2x512xf32>
    %c0_9 = arith.constant 0 : index
    %c0_10 = arith.constant 0 : index
    %12 = vector.load %arg5[%c0_9, %c0_10] : memref<1x512xf32, #tpu.memory_space<vmem>>, vector<1x512xf32>
    %13 = vector.broadcast %12 : vector<1x512xf32> to vector<2x512xf32>
    %14 = arith.addf %11, %13 : vector<2x512xf32>
    %cst_11 = arith.constant 0.000000e+00 : f32
    %15 = vector.broadcast %cst_11 : f32 to vector<2x512xf32>
    %16 = arith.maximumf %14, %15 : vector<2x512xf32>
    %17 = arith.truncf %16 : vector<2x512xf32> to vector<2x512xbf16>
    %c0_12 = arith.constant 0 : index
    %c0_13 = arith.constant 0 : index
    %18 = vector.load %arg6[%c0_12, %c0_13] : memref<512x256xbf16, #tpu.memory_space<vmem>>, vector<512x256xbf16>
    %cst_14 = arith.constant dense<0.000000e+00> : vector<2x256xf32>
    %19 = tpu.matmul %17, %18, %cst_14 {dimension_numbers = #tpu.dot_dimension_numbers<[1], [0], [0], [1], [0, 0, 1, 1], [], []>} : vector<2x512xbf16>, vector<512x256xbf16>, vector<2x256xf32> -> vector<2x256xf32>
    %c0_15 = arith.constant 0 : index
    %c0_16 = arith.constant 0 : index
    %20 = vector.load %arg7[%c0_15, %c0_16] : memref<1x256xf32, #tpu.memory_space<vmem>>, vector<1x256xf32>
    %21 = vector.broadcast %20 : vector<1x256xf32> to vector<2x256xf32>
    %22 = arith.addf %19, %21 : vector<2x256xf32>
    %c0_17 = arith.constant 0 : index
    %c0_18 = arith.constant 0 : index
    %23 = vector.load %arg12[%c0_17, %c0_18] : memref<2x256xf32, #tpu.memory_space<vmem>>, vector<2x256xf32>
    tpu.vector_store %arg12[%c0_17, %c0_18], %22 {strides = array<i32>} : memref<2x256xf32, #tpu.memory_space<vmem>>, vector<2x256xf32>,
    %24 = vector.extract_strided_slice %22 {offsets = [0, 0], sizes = [2, 128], strides = [1, 1]} : vector<2x256xf32> to vector<2x128xf32>
    %25 = vector.extract_strided_slice %22 {offsets = [0, 128], sizes = [2, 128], strides = [1, 1]} : vector<2x256xf32> to vector<2x128xf32>
    %cst_19 = arith.constant 5.000000e-01 : f32
    %26 = vector.broadcast %cst_19 : f32 to vector<2x128xf32>
    %27 = arith.mulf %26, %25 : vector<2x128xf32>
    %28 = math.exp %27 : vector<2x128xf32>
    %c0_20 = arith.constant 0 : index
    %c0_21 = arith.constant 0 : index
    %29 = vector.load %arg1[%c0_20, %c0_21] : memref<2x128xf32, #tpu.memory_space<vmem>>, vector<2x128xf32>
    %30 = arith.mulf %29, %28 : vector<2x128xf32>
    %31 = arith.addf %24, %30 : vector<2x128xf32>
    %32 = arith.truncf %31 : vector<2x128xf32> to vector<2x128xbf16>
    %c0_22 = arith.constant 0 : index
    %c0_23 = arith.constant 0 : index
    %33 = vector.load %arg8[%c0_22, %c0_23] : memref<128x512xbf16, #tpu.memory_space<vmem>>, vector<128x512xbf16>
    %cst_24 = arith.constant dense<0.000000e+00> : vector<2x512xf32>
    %34 = tpu.matmul %32, %33, %cst_24 {dimension_numbers = #tpu.dot_dimension_numbers<[1], [0], [0], [1], [0, 0, 1, 1], [], []>} : vector<2x128xbf16>, vector<128x512xbf16>, vector<2x512xf32> -> vector<2x512xf32>
    %c0_25 = arith.constant 0 : index
    %c0_26 = arith.constant 0 : index
    %35 = vector.load %arg9[%c0_25, %c0_26] : memref<1x512xf32, #tpu.memory_space<vmem>>, vector<1x512xf32>
    %36 = vector.broadcast %35 : vector<1x512xf32> to vector<2x512xf32>
    %37 = arith.addf %34, %36 : vector<2x512xf32>
    %cst_27 = arith.constant 0.000000e+00 : f32
    %38 = vector.broadcast %cst_27 : f32 to vector<2x512xf32>
    %39 = arith.maximumf %37, %38 : vector<2x512xf32>
    %40 = arith.truncf %39 : vector<2x512xf32> to vector<2x512xbf16>
    %c0_28 = arith.constant 0 : index
    %c0_29 = arith.constant 0 : index
    %41 = vector.load %arg10[%c0_28, %c0_29] : memref<512x1024xbf16, #tpu.memory_space<vmem>>, vector<512x1024xbf16>
    %cst_30 = arith.constant dense<0.000000e+00> : vector<2x1024xf32>
    %42 = tpu.matmul %40, %41, %cst_30 {dimension_numbers = #tpu.dot_dimension_numbers<[1], [0], [0], [1], [0, 0, 1, 1], [], []>} : vector<2x512xbf16>, vector<512x1024xbf16>, vector<2x1024xf32> -> vector<2x1024xf32>
    %c0_31 = arith.constant 0 : index
    %c0_32 = arith.constant 0 : index
    %43 = vector.load %arg11[%c0_31, %c0_32] : memref<1x1024xf32, #tpu.memory_space<vmem>>, vector<1x1024xf32>
    %44 = vector.broadcast %43 : vector<1x1024xf32> to vector<2x1024xf32>
    %45 = arith.addf %42, %44 : vector<2x1024xf32>
    %46 = arith.negf %45 : vector<2x1024xf32>
    %47 = math.exp %46 : vector<2x1024xf32>
    %cst_33 = arith.constant 1.000000e+00 : f32
    %48 = vector.broadcast %cst_33 : f32 to vector<2x1024xf32>
    %49 = arith.addf %48, %47 : vector<2x1024xf32>
    %50 = arith.divf %48, %49 : vector<2x1024xf32>
    %c0_34 = arith.constant 0 : index
    %c0_35 = arith.constant 0 : index
    %51 = vector.load %arg13[%c0_34, %c0_35] : memref<2x1024xf32, #tpu.memory_space<vmem>>, vector<2x1024xf32>
    tpu.vector_store %arg13[%c0_34, %c0_35], %50 {strides = array<i32>} : memref<2x1024xf32, #tpu.memory_space<vmem>>, vector<2x1024xf32>,
    return
  }
}

</mosaic_0001>

<llo_original>
// kernel: vae_forward.1
$region0: #{vae_forward.1}
  #allocation0 [shape = 'u32[]', space=smem, size = 0x4, offset = 0x4, fixed_abs, tag = 'smem constant byte address 0x4 - core index']
  #allocation1 [shape = 'u32[144,128]{1,0:T(1,128)}', space=vmem, size = 0x12000, scoped, tag = 'internal scratch']
  %s0 = inlined_call_operand.vmem [shape: f32[2,1024], index: 0, kind: input, shape index: {}]
  %s1 = inlined_call_operand.vmem [shape: f32[2,128], index: 1, kind: input, shape index: {}]
  %s2 = inlined_call_operand.hbm [shape: bf16[1024,512], index: 2, kind: input, shape index: {}]
  %s3 = inlined_call_operand.vmem [shape: f32[1,512], index: 3, kind: input, shape index: {}]
  %s4 = inlined_call_operand.hbm [shape: bf16[512,512], index: 4, kind: input, shape index: {}]
  %s5 = inlined_call_operand.vmem [shape: f32[1,512], index: 5, kind: input, shape index: {}]
  %s6 = inlined_call_operand.hbm [shape: bf16[512,256], index: 6, kind: input, shape index: {}]
  %s7 = inlined_call_operand.vmem [shape: f32[1,256], index: 7, kind: input, shape index: {}]
  %s8 = inlined_call_operand.hbm [shape: bf16[128,512], index: 8, kind: input, shape index: {}]
  %s9 = inlined_call_operand.vmem [shape: f32[1,512], index: 9, kind: input, shape index: {}]
  %s10 = inlined_call_operand.hbm [shape: bf16[512,1024], index: 10, kind: input, shape index: {}]
  %s11 = inlined_call_operand.vmem [shape: f32[1,1024], index: 11, kind: input, shape index: {}]
  %s12 = inlined_call_operand.vmem [shape: f32[2,256], index: 12, kind: output, shape index: {0}]
  %s13 = inlined_call_operand.vmem [shape: f32[2,1024], index: 13, kind: output, shape index: {1}]
  %14 = xla_tuple %s12, %s13
  %s15 = sld [smem:[#allocation0]]
  $region86: #{vae_forward.1} parent=0
    _
  %s17 = ssub.s32 1, %s15
  %s18 = scalar_select 0, %s17, %s15
  $region1: #{vae_forward.1} parent=0
    #allocation2 [shape = 'u8[1048576]{0}', space=vmem, size = 0x100000, scoped, tag = 'input window, operand 2, single buffered']
    #allocation3 [shape = 's32[1]{0}', space=sflag, size = 0x4, scoped, tag = 'scoped memory for vae_forward.1']
    #allocation4 [shape = 'u8[524288]{0}', space=vmem, size = 0x80000, scoped, tag = 'input window, operand 4, single buffered']
    #allocation5 [shape = 's32[1]{0}', space=sflag, size = 0x4, scoped, tag = 'scoped memory for vae_forward.1']
    #allocation6 [shape = 'u8[262144]{0}', space=vmem, size = 0x40000, scoped, tag = 'input window, operand 6, single buffered']
    #allocation7 [shape = 'u8[131072]{0}', space=vmem, size = 0x20000, scoped, tag = 'input window, operand 8, single buffered']
    #allocation8 [shape = 's32[1]{0}', space=sflag, size = 0x4, scoped, tag = 'scoped memory for vae_forward.1']
    #allocation9 [shape = 'u8[1048576]{0}', space=vmem, size = 0x100000, scoped, tag = 'input window, operand 10, single buffered']
    %19 = vsyncpa [#allocation3], 0
    %20 = vsyncpa [#allocation5], 0
    %21 = vsyncpa [#allocation8], 0
    // Predicated region
    $region2: #{vae_forward.1} parent=1 // pred_check
      _
    $region3: #{vae_forward.1} parent=1 // pred_check_branch
      %23 = sbr.rel (0) target = $region5
    $region4: #{vae_forward.1} parent=1 // pred_region
      _
    $region5: #{vae_forward.1} parent=1 // pred_fallthru
      _
    // Predicated region
    $region6: #{vae_forward.1} parent=1 // pred_check
      _
    $region7: #{vae_forward.1} parent=1 // pred_check_branch
      %25 = sbr.rel (0) target = $region9
    $region8: #{vae_forward.1} parent=1 // pred_region
      _
    $region9: #{vae_forward.1} parent=1 // pred_fallthru
      _
    // Predicated region
    $region10: #{vae_forward.1} parent=1 // pred_check
      _
    $region11: #{vae_forward.1} parent=1 // pred_check_branch
      %27 = sbr.rel (0) target = $region13
    $region12: #{vae_forward.1} parent=1 // pred_region
      %s29 = ssub.s32 32768, 32768
      %30 = vsyncadd [#allocation3], %s29
      %s31 = sshll.u32 [#allocation2], 4
      %s32 = int_to_ptr.vmem [resolvable:$true] %s31
      %37 = dma.hbm_to_vmem [thread:$0]  %s2, 32768, %s32, [#allocation3], 256, 256, 16
    $region13: #{vae_forward.1} parent=1 // pred_fallthru
      _
    // Predicated region
    $region14: #{vae_forward.1} parent=1 // pred_check
      _
    $region15: #{vae_forward.1} parent=1 // pred_check_branch
      %39 = sbr.rel (0) target = $region17
    $region16: #{vae_forward.1} parent=1 // pred_region
      _
    $region17: #{vae_forward.1} parent=1 // pred_fallthru
      _
    // Predicated region
    $region18: #{vae_forward.1} parent=1 // pred_check
      _
    $region19: #{vae_forward.1} parent=1 // pred_check_branch
      %41 = sbr.rel (0) target = $region21
    $region20: #{vae_forward.1} parent=1 // pred_region
      %s43 = ssub.s32 16384, 16384
      %44 = vsyncadd [#allocation5], %s43
      %s45 = sshll.u32 [#allocation4], 4
      %s46 = int_to_ptr.vmem [resolvable:$true] %s45
      %51 = dma.hbm_to_vmem [thread:$0]  %s4, 16384, %s46, [#allocation5], 256, 256, 16
    $region21: #{vae_forward.1} parent=1 // pred_fallthru
      _
    // Predicated region
    $region22: #{vae_forward.1} parent=1 // pred_check
      _
    $region23: #{vae_forward.1} parent=1 // pred_check_branch
      %53 = sbr.rel (0) target = $region25
    $region24: #{vae_forward.1} parent=1 // pred_region
      _
    $region25: #{vae_forward.1} parent=1 // pred_fallthru
      _
    // Predicated region
    $region26: #{vae_forward.1} parent=1 // pred_check
      _
    $region27: #{vae_forward.1} parent=1 // pred_check_branch
      %55 = sbr.rel (0) target = $region29
    $region28: #{vae_forward.1} parent=1 // pred_region
      %s57 = ssub.s32 8192, 8192
      %58 = vsyncadd [#allocation5], %s57
      %s59 = sshll.u32 [#allocation6], 4
      %s60 = int_to_ptr.vmem [resolvable:$true] %s59
      %65 = dma.hbm_to_vmem [thread:$0]  %s6, 8192, %s60, [#allocation5], 128, 128, 8
    $region29: #{vae_forward.1} parent=1 // pred_fallthru
      _
    // Predicated region
    $region30: #{vae_forward.1} parent=1 // pred_check
      _
    $region31: #{vae_forward.1} parent=1 // pred_check_branch
      %67 = sbr.rel (0) target = $region33
    $region32: #{vae_forward.1} parent=1 // pred_region
      _
    $region33: #{vae_forward.1} parent=1 // pred_fallthru
      _
    // Predicated region
    $region34: #{vae_forward.1} parent=1 // pred_check
      _
    $region35: #{vae_forward.1} parent=1 // pred_check_branch
      %69 = sbr.rel (0) target = $region37
    $region36: #{vae_forward.1} parent=1 // pred_region
      %s71 = ssub.s32 4096, 4096
      %72 = vsyncadd [#allocation8], %s71
      %s73 = sshll.u32 [#allocation7], 4
      %s74 = int_to_ptr.vmem [resolvable:$true] %s73
      %79 = dma.hbm_to_vmem [thread:$0]  %s8, 4096, %s74, [#allocation8], 256, 256, 16
    $region37: #{vae_forward.1} parent=1 // pred_fallthru
      _
    // Predicated region
    $region38: #{vae_forward.1} parent=1 // pred_check
      _
    $region39: #{vae_forward.1} parent=1 // pred_check_branch
      %81 = sbr.rel (0) target = $region41
    $region40: #{vae_forward.1} parent=1 // pred_region
      _
    $region41: #{vae_forward.1} parent=1 // pred_fallthru
      _
    // Predicated region
    $region42: #{vae_forward.1} parent=1 // pred_check
      _
    $region43: #{vae_forward.1} parent=1 // pred_check_branch
      %83 = sbr.rel (0) target = $region45
    $region44: #{vae_forward.1} parent=1 // pred_region
      %s85 = ssub.s32 32768, 32768
      %86 = vsyncadd [#allocation8], %s85
      %s87 = sshll.u32 [#allocation9], 4
      %s88 = int_to_ptr.vmem [resolvable:$true] %s87
      %93 = dma.hbm_to_vmem [thread:$0]  %s10, 32768, %s88, [#allocation8], 512, 512, 32
    $region45: #{vae_forward.1} parent=1 // pred_fallthru
      _
    // Predicated region
    $region46: #{vae_forward.1} parent=1 // pred_check
      _
    $region47: #{vae_forward.1} parent=1 // pred_check_branch
      %95 = sbr.rel (0) target = $region49
    $region48: #{vae_forward.1} parent=1 // pred_region
      _
    $region49: #{vae_forward.1} parent=1 // pred_fallthru
      _
    // Predicated region
    $region50: #{vae_forward.1} parent=1 // pred_check
      _
    $region51: #{vae_forward.1} parent=1 // pred_check_branch
      %97 = sbr.rel (0) target = $region53
    $region52: #{vae_forward.1} parent=1 // pred_region
      %98 = dma.done [#allocation3], 32768
    $region53: #{vae_forward.1} parent=1 // pred_fallthru
      _
    // Predicated region
    $region54: #{vae_forward.1} parent=1 // pred_check
      _
    $region55: #{vae_forward.1} parent=1 // pred_check_branch
      %100 = sbr.rel (0) target = $region57
    $region56: #{vae_forward.1} parent=1 // pred_region
      %101 = dma.done [#allocation5], 16384
    $region57: #{vae_forward.1} parent=1 // pred_fallthru
      _
    // Predicated region
    $region58: #{vae_forward.1} parent=1 // pred_check
      _
    $region59: #{vae_forward.1} parent=1 // pred_check_branch
      %103 = sbr.rel (0) target = $region61
    $region60: #{vae_forward.1} parent=1 // pred_region
      %104 = dma.done [#allocation5], 8192
    $region61: #{vae_forward.1} parent=1 // pred_fallthru
      _
    // Predicated region
    $region62: #{vae_forward.1} parent=1 // pred_check
      _
    $region63: #{vae_forward.1} parent=1 // pred_check_branch
      %106 = sbr.rel (0) target = $region65
    $region64: #{vae_forward.1} parent=1 // pred_region
      %107 = dma.done [#allocation8], 4096
    $region65: #{vae_forward.1} parent=1 // pred_fallthru
      _
    // Predicated region
    $region66: #{vae_forward.1} parent=1 // pred_check
      _
    $region67: #{vae_forward.1} parent=1 // pred_check_branch
      %109 = sbr.rel (0) target = $region69
    $region68: #{vae_forward.1} parent=1 // pred_region
      %110 = dma.done [#allocation8], 32768
    $region69: #{vae_forward.1} parent=1 // pred_fallthru
      _
    %v112 = vld [vmem:[%s0] sm:$0xff]
    %v113 = vld [vmem:[%s0 + $0x8] sm:$0xff]
    %v116 = vcombine.high %v112, %v112
    %v118 = vunpack.c.l.s4 1983009808
    %v119 = vunpack.c.0.s8 %v118
    %v120 = vlaneseq
    %v121 = vshrl.u32 %v120, 7
    %v122 = vsub.s32 %v119, %v121
    %v123 = vrot.slane %v112, %v122
    %v125 = vunpack.c.l.s4 1983009808
    %v126 = vunpack.c.0.s8 %v125
    %v127 = vlaneseq
    %v128 = vshrl.u32 %v127, 7
    %v129 = vsub.s32 %v126, %v128
    %v130 = vrot.slane %v116, %v129
    %v131 = vcombine.high %v123, %v123
    %v132 = vcombine.high %v130, %v130
    %v133 = vcombine.high %v113, %v113
    %v135 = vunpack.c.l.s4 1983009808
    %v136 = vunpack.c.0.s8 %v135
    %v137 = vlaneseq
    %v138 = vshrl.u32 %v137, 7
    %v139 = vsub.s32 %v136, %v138
    %v140 = vrot.slane %v113, %v139
    %v142 = vunpack.c.l.s4 1983009808
    %v143 = vunpack.c.0.s8 %v142
    %v144 = vlaneseq
    %v145 = vshrl.u32 %v144, 7
    %v146 = vsub.s32 %v143, %v145
    %v147 = vrot.slane %v133, %v146
    %v148 = vcombine.high %v140, %v140
    %v149 = vcombine.high %v147, %v147
    %v158 = vpack.c.bf16 %v123, %v123
    %v159 = vpack.c.bf16 %v131, %v131
    %v160 = vpack.c.bf16 %v130, %v130
    %v161 = vpack.c.bf16 %v132, %v132
    %v162 = vpack.c.bf16 %v140, %v140
    %v163 = vpack.c.bf16 %v148, %v148
    %v164 = vpack.c.bf16 %v147, %v147
    %v165 = vpack.c.bf16 %v149, %v149
    %v166 = vld [vmem:[#allocation2] sm:$0xff]
    %v167 = vld [vmem:[#allocation2 + $0x8] sm:$0xff]
    %v168 = vld [vmem:[#allocation2 + $0x10] sm:$0xff]
    %v169 = vld [vmem:[#allocation2 + $0x18] sm:$0xff]
    %v170 = vld [vmem:[#allocation2 + $0x20] sm:$0xff]
    %v171 = vld [vmem:[#allocation2 + $0x28] sm:$0xff]
    %v172 = vld [vmem:[#allocation2 + $0x30] sm:$0xff]
    %v173 = vld [vmem:[#allocation2 + $0x38] sm:$0xff]
    %v174 = vld [vmem:[#allocation2 + $0x40] sm:$0xff]
    %v175 = vld [vmem:[#allocation2 + $0x48] sm:$0xff]
    %v176 = vld [vmem:[#allocation2 + $0x50] sm:$0xff]
    %v177 = vld [vmem:[#allocation2 + $0x58] sm:$0xff]
    %v178 = vld [vmem:[#allocation2 + $0x60] sm:$0xff]
    %v179 = vld [vmem:[#allocation2 + $0x68] sm:$0xff]
    %v180 = vld [vmem:[#allocation2 + $0x70] sm:$0xff]
    %v181 = vld [vmem:[#allocation2 + $0x78] sm:$0xff]
    %v182 = vld [vmem:[#allocation2 + $0x80] sm:$0xff]
    %v183 = vld [vmem:[#allocation2 + $0x88] sm:$0xff]
    %v184 = vld [vmem:[#allocation2 + $0x90] sm:$0xff]
    %v185 = vld [vmem:[#allocation2 + $0x98] sm:$0xff]
    %v186 = vld [vmem:[#allocation2 + $0xa0] sm:$0xff]
    %v187 = vld [vmem:[#allocation2 + $0xa8] sm:$0xff]
    %v188 = vld [vmem:[#allocation2 + $0xb0] sm:$0xff]
    %v189 = vld [vmem:[#allocation2 + $0xb8] sm:$0xff]
    %v190 = vld [vmem:[#allocation2 + $0xc0] sm:$0xff]
    %v191 = vld [vmem:[#allocation2 + $0xc8] sm:$0xff]
    %v192 = vld [vmem:[#allocation2 + $0xd0] sm:$0xff]
    %v193 = vld [vmem:[#allocation2 + $0xd8] sm:$0xff]
    %v194 = vld [vmem:[#allocation2 + $0xe0] sm:$0xff]
    %v195 = vld [vmem:[#allocation2 + $0xe8] sm:$0xff]
    %v196 = vld [vmem:[#allocation2 + $0xf0] sm:$0xff]
    %v197 = vld [vmem:[#allocation2 + $0xf8] sm:$0xff]
    %v198 = vld [vmem:[#allocation2 + $0x100] sm:$0xff]
    %v199 = vld [vmem:[#allocation2 + $0x108] sm:$0xff]
    %v200 = vld [vmem:[#allocation2 + $0x110] sm:$0xff]
    %v201 = vld [vmem:[#allocation2 + $0x118] sm:$0xff]
    %v202 = vld [vmem:[#allocation2 + $0x120] sm:$0xff]
    %v203 = vld [vmem:[#allocation2 + $0x128] sm:$0xff]
    %v204 = vld [vmem:[#allocation2 + $0x130] sm:$0xff]
    %v205 = vld [vmem:[#allocation2 + $0x138] sm:$0xff]
    %v206 = vld [vmem:[#allocation2 + $0x140] sm:$0xff]
    %v207 = vld [vmem:[#allocation2 + $0x148] sm:$0xff]
    %v208 = vld [vmem:[#allocation2 + $0x150] sm:$0xff]
    %v209 = vld [vmem:[#allocation2 + $0x158] sm:$0xff]
    %v210 = vld [vmem:[#allocation2 + $0x160] sm:$0xff]
    %v211 = vld [vmem:[#allocation2 + $0x168] sm:$0xff]
    %v212 = vld [vmem:[#allocation2 + $0x170] sm:$0xff]
    %v213 = vld [vmem:[#allocation2 + $0x178] sm:$0xff]
    %v214 = vld [vmem:[#allocation2 + $0x180] sm:$0xff]
    %v215 = vld [vmem:[#allocation2 + $0x188] sm:$0xff]
    %v216 = vld [vmem:[#allocation2 + $0x190] sm:$0xff]
    %v217 = vld [vmem:[#allocation2 + $0x198] sm:$0xff]
    %v218 = vld [vmem:[#allocation2 + $0x1a0] sm:$0xff]
    %v219 = vld [vmem:[#allocation2 + $0x1a8] sm:$0xff]
    %v220 = vld [vmem:[#allocation2 + $0x1b0] sm:$0xff]
    %v221 = vld [vmem:[#allocation2 + $0x1b8] sm:$0xff]
    %v222 = vld [vmem:[#allocation2 + $0x1c0] sm:$0xff]
    %v223 = vld [vmem:[#allocation2 + $0x1c8] sm:$0xff]
    %v224 = vld [vmem:[#allocation2 + $0x1d0] sm:$0xff]
    %v225 = vld [vmem:[#allocation2 + $0x1d8] sm:$0xff]
    %v226 = vld [vmem:[#allocation2 + $0x1e0] sm:$0xff]
    %v227 = vld [vmem:[#allocation2 + $0x1e8] sm:$0xff]
    %v228 = vld [vmem:[#allocation2 + $0x1f0] sm:$0xff]
    %v229 = vld [vmem:[#allocation2 + $0x1f8] sm:$0xff]
    %v230 = vld [vmem:[#allocation2 + $0x200] sm:$0xff]
    %v231 = vld [vmem:[#allocation2 + $0x208] sm:$0xff]
    %v232 = vld [vmem:[#allocation2 + $0x210] sm:$0xff]
    %v233 = vld [vmem:[#allocation2 + $0x218] sm:$0xff]
    %v234 = vld [vmem:[#allocation2 + $0x220] sm:$0xff]
    %v235 = vld [vmem:[#allocation2 + $0x228] sm:$0xff]
    %v236 = vld [vmem:[#allocation2 + $0x230] sm:$0xff]
    %v237 = vld [vmem:[#allocation2 + $0x238] sm:$0xff]
    %v238 = vld [vmem:[#allocation2 + $0x240] sm:$0xff]
    %v239 = vld [vmem:[#allocation2 + $0x248] sm:$0xff]
    %v240 = vld [vmem:[#allocation2 + $0x250] sm:$0xff]
    %v241 = vld [vmem:[#allocation2 + $0x258] sm:$0xff]
    %v242 = vld [vmem:[#allocation2 + $0x260] sm:$0xff]
    %v243 = vld [vmem:[#allocation2 + $0x268] sm:$0xff]
    %v244 = vld [vmem:[#allocation2 + $0x270] sm:$0xff]
    %v245 = vld [vmem:[#allocation2 + $0x278] sm:$0xff]
    %v246 = vld [vmem:[#allocation2 + $0x280] sm:$0xff]
    %v247 = vld [vmem:[#allocation2 + $0x288] sm:$0xff]
    %v248 = vld [vmem:[#allocation2 + $0x290] sm:$0xff]
    %v249 = vld [vmem:[#allocation2 + $0x298] sm:$0xff]
    %v250 = vld [vmem:[#allocation2 + $0x2a0] sm:$0xff]
    %v251 = vld [vmem:[#allocation2 + $0x2a8] sm:$0xff]
    %v252 = vld [vmem:[#allocation2 + $0x2b0] sm:$0xff]
    %v253 = vld [vmem:[#allocation2 + $0x2b8] sm:$0xff]
    %v254 = vld [vmem:[#allocation2 + $0x2c0] sm:$0xff]
    %v255 = vld [vmem:[#allocation2 + $0x2c8] sm:$0xff]
    %v256 = vld [vmem:[#allocation2 + $0x2d0] sm:$0xff]
    %v257 = vld [vmem:[#allocation2 + $0x2d8] sm:$0xff]
    %v258 = vld [vmem:[#allocation2 + $0x2e0] sm:$0xff]
    %v259 = vld [vmem:[#allocation2 + $0x2e8] sm:$0xff]
    %v260 = vld [vmem:[#allocation2 + $0x2f0] sm:$0xff]
    %v261 = vld [vmem:[#allocation2 + $0x2f8] sm:$0xff]
    %v262 = vld [vmem:[#allocation2 + $0x300] sm:$0xff]
    %v263 = vld [vmem:[#allocation2 + $0x308] sm:$0xff]
    %v264 = vld [vmem:[#allocation2 + $0x310] sm:$0xff]
    %v265 = vld [vmem:[#allocation2 + $0x318] sm:$0xff]
    %v266 = vld [vmem:[#allocation2 + $0x320] sm:$0xff]
    %v267 = vld [vmem:[#allocation2 + $0x328] sm:$0xff]
    %v268 = vld [vmem:[#allocation2 + $0x330] sm:$0xff]
    %v269 = vld [vmem:[#allocation2 + $0x338] sm:$0xff]
    %v270 = vld [vmem:[#allocation2 + $0x340] sm:$0xff]
    %v271 = vld [vmem:[#allocation2 + $0x348] sm:$0xff]
    %v272 = vld [vmem:[#allocation2 + $0x350] sm:$0xff]
    %v273 = vld [vmem:[#allocation2 + $0x358] sm:$0xff]
    %v274 = vld [vmem:[#allocation2 + $0x360] sm:$0xff]
    %v275 = vld [vmem:[#allocation2 + $0x368] sm:$0xff]
    %v276 = vld [vmem:[#allocation2 + $0x370] sm:$0xff]
    %v277 = vld [vmem:[#allocation2 + $0x378] sm:$0xff]
    %v278 = vld [vmem:[#allocation2 + $0x380] sm:$0xff]
    %v279 = vld [vmem:[#allocation2 + $0x388] sm:$0xff]
    %v280 = vld [vmem:[#allocation2 + $0x390] sm:$0xff]
    %v281 = vld [vmem:[#allocation2 + $0x398] sm:$0xff]
    %v282 = vld [vmem:[#allocation2 + $0x3a0] sm:$0xff]
    %v283 = vld [vmem:[#allocation2 + $0x3a8] sm:$0xff]
    %v284 = vld [vmem:[#allocation2 + $0x3b0] sm:$0xff]
    %v285 = vld [vmem:[#allocation2 + $0x3b8] sm:$0xff]
    %v286 = vld [vmem:[#allocation2 + $0x3c0] sm:$0xff]
    %v287 = vld [vmem:[#allocation2 + $0x3c8] sm:$0xff]
    %v288 = vld [vmem:[#allocation2 + $0x3d0] sm:$0xff]
    %v289 = vld [vmem:[#allocation2 + $0x3d8] sm:$0xff]
    %v290 = vld [vmem:[#allocation2 + $0x3e0] sm:$0xff]
    %v291 = vld [vmem:[#allocation2 + $0x3e8] sm:$0xff]
    %v292 = vld [vmem:[#allocation2 + $0x3f0] sm:$0xff]
    %v293 = vld [vmem:[#allocation2 + $0x3f8] sm:$0xff]
    %v294 = vld [vmem:[#allocation2 + $0x400] sm:$0xff]
    %v295 = vld [vmem:[#allocation2 + $0x408] sm:$0xff]
    %v296 = vld [vmem:[#allocation2 + $0x410] sm:$0xff]
    %v297 = vld [vmem:[#allocation2 + $0x418] sm:$0xff]
    %v298 = vld [vmem:[#allocation2 + $0x420] sm:$0xff]
    %v299 = vld [vmem:[#allocation2 + $0x428] sm:$0xff]
    %v300 = vld [vmem:[#allocation2 + $0x430] sm:$0xff]
    %v301 = vld [vmem:[#allocation2 + $0x438] sm:$0xff]
    %v302 = vld [vmem:[#allocation2 + $0x440] sm:$0xff]
    %v303 = vld [vmem:[#allocation2 + $0x448] sm:$0xff]
    %v304 = vld [vmem:[#allocation2 + $0x450] sm:$0xff]
    %v305 = vld [vmem:[#allocation2 + $0x458] sm:$0xff]
    %v306 = vld [vmem:[#allocation2 + $0x460] sm:$0xff]
    %v307 = vld [vmem:[#allocation2 + $0x468] sm:$0xff]
    %v308 = vld [vmem:[#allocation2 + $0x470] sm:$0xff]
    %v309 = vld [vmem:[#allocation2 + $0x478] sm:$0xff]
    %v310 = vld [vmem:[#allocation2 + $0x480] sm:$0xff]
    %v311 = vld [vmem:[#allocation2 + $0x488] sm:$0xff]
    %v312 = vld [vmem:[#allocation2 + $0x490] sm:$0xff]
    %v313 = vld [vmem:[#allocation2 + $0x498] sm:$0xff]
    %v314 = vld [vmem:[#allocation2 + $0x4a0] sm:$0xff]
    %v315 = vld [vmem:[#allocation2 + $0x4a8] sm:$0xff]
    %v316 = vld [vmem:[#allocation2 + $0x4b0] sm:$0xff]
    %v317 = vld [vmem:[#allocation2 + $0x4b8] sm:$0xff]
    %v318 = vld [vmem:[#allocation2 + $0x4c0] sm:$0xff]
    %v319 = vld [vmem:[#allocation2 + $0x4c8] sm:$0xff]
    %v320 = vld [vmem:[#allocation2 + $0x4d0] sm:$0xff]
    %v321 = vld [vmem:[#allocation2 + $0x4d8] sm:$0xff]
    %v322 = vld [vmem:[#allocation2 + $0x4e0] sm:$0xff]
    %v323 = vld [vmem:[#allocation2 + $0x4e8] sm:$0xff]
    %v324 = vld [vmem:[#allocation2 + $0x4f0] sm:$0xff]
    %v325 = vld [vmem:[#allocation2 + $0x4f8] sm:$0xff]
    %v326 = vld [vmem:[#allocation2 + $0x500] sm:$0xff]
    %v327 = vld [vmem:[#allocation2 + $0x508] sm:$0xff]
    %v328 = vld [vmem:[#allocation2 + $0x510] sm:$0xff]
    %v329 = vld [vmem:[#allocation2 + $0x518] sm:$0xff]
    %v330 = vld [vmem:[#allocation2 + $0x520] sm:$0xff]
    %v331 = vld [vmem:[#allocation2 + $0x528] sm:$0xff]
    %v332 = vld [vmem:[#allocation2 + $0x530] sm:$0xff]
    %v333 = vld [vmem:[#allocation2 + $0x538] sm:$0xff]
    %v334 = vld [vmem:[#allocation2 + $0x540] sm:$0xff]
    %v335 = vld [vmem:[#allocation2 + $0x548] sm:$0xff]
    %v336 = vld [vmem:[#allocation2 + $0x550] sm:$0xff]
    %v337 = vld [vmem:[#allocation2 + $0x558] sm:$0xff]
    %v338 = vld [vmem:[#allocation2 + $0x560] sm:$0xff]
    %v339 = vld [vmem:[#allocation2 + $0x568] sm:$0xff]
    %v340 = vld [vmem:[#allocation2 + $0x570] sm:$0xff]
    %v341 = vld [vmem:[#allocation2 + $0x578] sm:$0xff]
    %v342 = vld [vmem:[#allocation2 + $0x580] sm:$0xff]
    %v343 = vld [vmem:[#allocation2 + $0x588] sm:$0xff]
    %v344 = vld [vmem:[#allocation2 + $0x590] sm:$0xff]
    %v345 = vld [vmem:[#allocation2 + $0x598] sm:$0xff]
    %v346 = vld [vmem:[#allocation2 + $0x5a0] sm:$0xff]
    %v347 = vld [vmem:[#allocation2 + $0x5a8] sm:$0xff]
    %v348 = vld [vmem:[#allocation2 + $0x5b0] sm:$0xff]
    %v349 = vld [vmem:[#allocation2 + $0x5b8] sm:$0xff]
    %v350 = vld [vmem:[#allocation2 + $0x5c0] sm:$0xff]
    %v351 = vld [vmem:[#allocation2 + $0x5c8] sm:$0xff]
    %v352 = vld [vmem:[#allocation2 + $0x5d0] sm:$0xff]
    %v353 = vld [vmem:[#allocation2 + $0x5d8] sm:$0xff]
    %v354 = vld [vmem:[#allocation2 + $0x5e0] sm:$0xff]
    %v355 = vld [vmem:[#allocation2 + $0x5e8] sm:$0xff]
    %v356 = vld [vmem:[#allocation2 + $0x5f0] sm:$0xff]
    %v357 = vld [vmem:[#allocation2 + $0x5f8] sm:$0xff]
    %v358 = vld [vmem:[#allocation2 + $0x600] sm:$0xff]
    %v359 = vld [vmem:[#allocation2 + $0x608] sm:$0xff]
    %v360 = vld [vmem:[#allocation2 + $0x610] sm:$0xff]
    %v361 = vld [vmem:[#allocation2 + $0x618] sm:$0xff]
    %v362 = vld [vmem:[#allocation2 + $0x620] sm:$0xff]
    %v363 = vld [vmem:[#allocation2 + $0x628] sm:$0xff]
    %v364 = vld [vmem:[#allocation2 + $0x630] sm:$0xff]
    %v365 = vld [vmem:[#allocation2 + $0x638] sm:$0xff]
    %v366 = vld [vmem:[#allocation2 + $0x640] sm:$0xff]
    %v367 = vld [vmem:[#allocation2 + $0x648] sm:$0xff]
    %v368 = vld [vmem:[#allocation2 + $0x650] sm:$0xff]
    %v369 = vld [vmem:[#allocation2 + $0x658] sm:$0xff]
    %v370 = vld [vmem:[#allocation2 + $0x660] sm:$0xff]
    %v371 = vld [vmem:[#allocation2 + $0x668] sm:$0xff]
    %v372 = vld [vmem:[#allocation2 + $0x670] sm:$0xff]
    %v373 = vld [vmem:[#allocation2 + $0x678] sm:$0xff]
    %v374 = vld [vmem:[#allocation2 + $0x680] sm:$0xff]
    %v375 = vld [vmem:[#allocation2 + $0x688] sm:$0xff]
    %v376 = vld [vmem:[#allocation2 + $0x690] sm:$0xff]
    %v377 = vld [vmem:[#allocation2 + $0x698] sm:$0xff]
    %v378 = vld [vmem:[#allocation2 + $0x6a0] sm:$0xff]
    %v379 = vld [vmem:[#allocation2 + $0x6a8] sm:$0xff]
    %v380 = vld [vmem:[#allocation2 + $0x6b0] sm:$0xff]
    %v381 = vld [vmem:[#allocation2 + $0x6b8] sm:$0xff]
    %v382 = vld [vmem:[#allocation2 + $0x6c0] sm:$0xff]
    %v383 = vld [vmem:[#allocation2 + $0x6c8] sm:$0xff]
    %v384 = vld [vmem:[#allocation2 + $0x6d0] sm:$0xff]
    %v385 = vld [vmem:[#allocation2 + $0x6d8] sm:$0xff]
    %v386 = vld [vmem:[#allocation2 + $0x6e0] sm:$0xff]
    %v387 = vld [vmem:[#allocation2 + $0x6e8] sm:$0xff]
    %v388 = vld [vmem:[#allocation2 + $0x6f0] sm:$0xff]
    %v389 = vld [vmem:[#allocation2 + $0x6f8] sm:$0xff]
    %v390 = vld [vmem:[#allocation2 + $0x700] sm:$0xff]
    %v391 = vld [vmem:[#allocation2 + $0x708] sm:$0xff]
    %v392 = vld [vmem:[#allocation2 + $0x710] sm:$0xff]
    %v393 = vld [vmem:[#allocation2 + $0x718] sm:$0xff]
    %v394 = vld [vmem:[#allocation2 + $0x720] sm:$0xff]
    %v395 = vld [vmem:[#allocation2 + $0x728] sm:$0xff]
    %v396 = vld [vmem:[#allocation2 + $0x730] sm:$0xff]
    %v397 = vld [vmem:[#allocation2 + $0x738] sm:$0xff]
    %v398 = vld [vmem:[#allocation2 + $0x740] sm:$0xff]
    %v399 = vld [vmem:[#allocation2 + $0x748] sm:$0xff]
    %v400 = vld [vmem:[#allocation2 + $0x750] sm:$0xff]
    %v401 = vld [vmem:[#allocation2 + $0x758] sm:$0xff]
    %v402 = vld [vmem:[#allocation2 + $0x760] sm:$0xff]
    %v403 = vld [vmem:[#allocation2 + $0x768] sm:$0xff]
    %v404 = vld [vmem:[#allocation2 + $0x770] sm:$0xff]
    %v405 = vld [vmem:[#allocation2 + $0x778] sm:$0xff]
    %v406 = vld [vmem:[#allocation2 + $0x780] sm:$0xff]
    %v407 = vld [vmem:[#allocation2 + $0x788] sm:$0xff]
    %v408 = vld [vmem:[#allocation2 + $0x790] sm:$0xff]
    %v409 = vld [vmem:[#allocation2 + $0x798] sm:$0xff]
    %v410 = vld [vmem:[#allocation2 + $0x7a0] sm:$0xff]
    %v411 = vld [vmem:[#allocation2 + $0x7a8] sm:$0xff]
    %v412 = vld [vmem:[#allocation2 + $0x7b0] sm:$0xff]
    %v413 = vld [vmem:[#allocation2 + $0x7b8] sm:$0xff]
    %v414 = vld [vmem:[#allocation2 + $0x7c0] sm:$0xff]
    %v415 = vld [vmem:[#allocation2 + $0x7c8] sm:$0xff]
    %v416 = vld [vmem:[#allocation2 + $0x7d0] sm:$0xff]
    %v417 = vld [vmem:[#allocation2 + $0x7d8] sm:$0xff]
    %v418 = vld [vmem:[#allocation2 + $0x7e0] sm:$0xff]
    %v419 = vld [vmem:[#allocation2 + $0x7e8] sm:$0xff]
    %v420 = vld [vmem:[#allocation2 + $0x7f0] sm:$0xff]
    %v421 = vld [vmem:[#allocation2 + $0x7f8] sm:$0xff]
    %v422 = vld [vmem:[%s3] sm:$0xf]
    %v424 = vlaneseq
    %v425 = vshrl.u32 %v424, 7
    %v426 = vsub.s32 0, %v425
    %v427 = vrot.slane %v422, %v426
    %v428 = vlaneseq
    %v429 = vshrl.u32 %v428, 7
    %v430 = vsub.s32 1, %v429
    %v431 = vrot.slane %v422, %v430
    %v432 = vlaneseq
    %v433 = vshrl.u32 %v432, 7
    %v434 = vsub.s32 2, %v433
    %v435 = vrot.slane %v422, %v434
    %v436 = vlaneseq
    %v437 = vshrl.u32 %v436, 7
    %v438 = vsub.s32 3, %v437
    %v439 = vrot.slane %v422, %v438
    %v700 = vunpack.c.l.b16 %v166
    %v701 = vunpack.c.h.b16 %v166
    %v702 = vunpack.c.l.b16 %v167
    %v703 = vunpack.c.h.b16 %v167
    %v704 = vunpack.c.l.b16 %v168
    %v705 = vunpack.c.h.b16 %v168
    %v706 = vunpack.c.l.b16 %v169
    %v707 = vunpack.c.h.b16 %v169
    %v708 = vunpack.c.l.b16 %v170
    %v709 = vunpack.c.h.b16 %v170
    %v710 = vunpack.c.l.b16 %v171
    %v711 = vunpack.c.h.b16 %v171
    %v712 = vunpack.c.l.b16 %v172
    %v713 = vunpack.c.h.b16 %v172
    %v714 = vunpack.c.l.b16 %v173
    %v715 = vunpack.c.h.b16 %v173
    %v716 = vunpack.c.l.b16 %v174
    %v717 = vunpack.c.h.b16 %v174
    %v718 = vunpack.c.l.b16 %v175
    %v719 = vunpack.c.h.b16 %v175
    %v720 = vunpack.c.l.b16 %v176
    %v721 = vunpack.c.h.b16 %v176
    %v722 = vunpack.c.l.b16 %v177
    %v723 = vunpack.c.h.b16 %v177
    %v724 = vunpack.c.l.b16 %v178
    %v725 = vunpack.c.h.b16 %v178
    %v726 = vunpack.c.l.b16 %v179
    %v727 = vunpack.c.h.b16 %v179
    %v728 = vunpack.c.l.b16 %v180
    %v729 = vunpack.c.h.b16 %v180
    %v730 = vunpack.c.l.b16 %v181
    %v731 = vunpack.c.h.b16 %v181
    %v732 = vunpack.c.l.b16 %v182
    %v733 = vunpack.c.h.b16 %v182
    %v734 = vunpack.c.l.b16 %v183
    %v735 = vunpack.c.h.b16 %v183
    %v736 = vunpack.c.l.b16 %v184
    %v737 = vunpack.c.h.b16 %v184
    %v738 = vunpack.c.l.b16 %v185
    %v739 = vunpack.c.h.b16 %v185
    %v740 = vunpack.c.l.b16 %v186
    %v741 = vunpack.c.h.b16 %v186
    %v742 = vunpack.c.l.b16 %v187
    %v743 = vunpack.c.h.b16 %v187
    %v744 = vunpack.c.l.b16 %v188
    %v745 = vunpack.c.h.b16 %v188
    %v746 = vunpack.c.l.b16 %v189
    %v747 = vunpack.c.h.b16 %v189
    %v748 = vunpack.c.l.b16 %v190
    %v749 = vunpack.c.h.b16 %v190
    %v750 = vunpack.c.l.b16 %v191
    %v751 = vunpack.c.h.b16 %v191
    %v752 = vunpack.c.l.b16 %v192
    %v753 = vunpack.c.h.b16 %v192
    %v754 = vunpack.c.l.b16 %v193
    %v755 = vunpack.c.h.b16 %v193
    %v756 = vunpack.c.l.b16 %v194
    %v757 = vunpack.c.h.b16 %v194
    %v758 = vunpack.c.l.b16 %v195
    %v759 = vunpack.c.h.b16 %v195
    %v760 = vunpack.c.l.b16 %v196
    %v761 = vunpack.c.h.b16 %v196
    %v762 = vunpack.c.l.b16 %v197
    %v763 = vunpack.c.h.b16 %v197
    %v764 = vunpack.c.l.b16 %v198
    %v765 = vunpack.c.h.b16 %v198
    %v766 = vunpack.c.l.b16 %v199
    %v767 = vunpack.c.h.b16 %v199
    %v768 = vunpack.c.l.b16 %v200
    %v769 = vunpack.c.h.b16 %v200
    %v770 = vunpack.c.l.b16 %v201
    %v771 = vunpack.c.h.b16 %v201
    %v772 = vunpack.c.l.b16 %v202
    %v773 = vunpack.c.h.b16 %v202
    %v774 = vunpack.c.l.b16 %v203
    %v775 = vunpack.c.h.b16 %v203
    %v776 = vunpack.c.l.b16 %v204
    %v777 = vunpack.c.h.b16 %v204
    %v778 = vunpack.c.l.b16 %v205
    %v779 = vunpack.c.h.b16 %v205
    %v780 = vunpack.c.l.b16 %v206
    %v781 = vunpack.c.h.b16 %v206
    %v782 = vunpack.c.l.b16 %v207
    %v783 = vunpack.c.h.b16 %v207
    %v784 = vunpack.c.l.b16 %v208
    %v785 = vunpack.c.h.b16 %v208
    %v786 = vunpack.c.l.b16 %v209
    %v787 = vunpack.c.h.b16 %v209
    %v788 = vunpack.c.l.b16 %v210
    %v789 = vunpack.c.h.b16 %v210
    %v790 = vunpack.c.l.b16 %v211
    %v791 = vunpack.c.h.b16 %v211
    %v792 = vunpack.c.l.b16 %v212
    %v793 = vunpack.c.h.b16 %v212
    %v794 = vunpack.c.l.b16 %v213
    %v795 = vunpack.c.h.b16 %v213
    %v796 = vunpack.c.l.b16 %v214
    %v797 = vunpack.c.h.b16 %v214
    %v798 = vunpack.c.l.b16 %v215
    %v799 = vunpack.c.h.b16 %v215
    %v800 = vunpack.c.l.b16 %v216
    %v801 = vunpack.c.h.b16 %v216
    %v802 = vunpack.c.l.b16 %v217
    %v803 = vunpack.c.h.b16 %v217
    %v804 = vunpack.c.l.b16 %v218
    %v805 = vunpack.c.h.b16 %v218
    %v806 = vunpack.c.l.b16 %v219
    %v807 = vunpack.c.h.b16 %v219
    %v808 = vunpack.c.l.b16 %v220
    %v809 = vunpack.c.h.b16 %v220
    %v810 = vunpack.c.l.b16 %v221
    %v811 = vunpack.c.h.b16 %v221
    %v812 = vunpack.c.l.b16 %v222
    %v813 = vunpack.c.h.b16 %v222
    %v814 = vunpack.c.l.b16 %v223
    %v815 = vunpack.c.h.b16 %v223
    %v816 = vunpack.c.l.b16 %v224
    %v817 = vunpack.c.h.b16 %v224
    %v818 = vunpack.c.l.b16 %v225
    %v819 = vunpack.c.h.b16 %v225
    %v820 = vunpack.c.l.b16 %v226
    %v821 = vunpack.c.h.b16 %v226
    %v822 = vunpack.c.l.b16 %v227
    %v823 = vunpack.c.h.b16 %v227
    %v824 = vunpack.c.l.b16 %v228
    %v825 = vunpack.c.h.b16 %v228
    %v826 = vunpack.c.l.b16 %v229
    %v827 = vunpack.c.h.b16 %v229
    %v828 = vunpack.c.l.b16 %v230
    %v829 = vunpack.c.h.b16 %v230
    %v830 = vunpack.c.l.b16 %v231
    %v831 = vunpack.c.h.b16 %v231
    %v832 = vunpack.c.l.b16 %v232
    %v833 = vunpack.c.h.b16 %v232
    %v834 = vunpack.c.l.b16 %v233
    %v835 = vunpack.c.h.b16 %v233
    %v836 = vunpack.c.l.b16 %v234
    %v837 = vunpack.c.h.b16 %v234
    %v838 = vunpack.c.l.b16 %v235
    %v839 = vunpack.c.h.b16 %v235
    %v840 = vunpack.c.l.b16 %v236
    %v841 = vunpack.c.h.b16 %v236
    %v842 = vunpack.c.l.b16 %v237
    %v843 = vunpack.c.h.b16 %v237
    %v844 = vunpack.c.l.b16 %v238
    %v845 = vunpack.c.h.b16 %v238
    %v846 = vunpack.c.l.b16 %v239
    %v847 = vunpack.c.h.b16 %v239
    %v848 = vunpack.c.l.b16 %v240
    %v849 = vunpack.c.h.b16 %v240
    %v850 = vunpack.c.l.b16 %v241
    %v851 = vunpack.c.h.b16 %v241
    %v852 = vunpack.c.l.b16 %v242
    %v853 = vunpack.c.h.b16 %v242
    %v854 = vunpack.c.l.b16 %v243
    %v855 = vunpack.c.h.b16 %v243
    %v856 = vunpack.c.l.b16 %v244
    %v857 = vunpack.c.h.b16 %v244
    %v858 = vunpack.c.l.b16 %v245
    %v859 = vunpack.c.h.b16 %v245
    %v860 = vunpack.c.l.b16 %v246
    %v861 = vunpack.c.h.b16 %v246
    %v862 = vunpack.c.l.b16 %v247
    %v863 = vunpack.c.h.b16 %v247
    %v864 = vunpack.c.l.b16 %v248
    %v865 = vunpack.c.h.b16 %v248
    %v866 = vunpack.c.l.b16 %v249
    %v867 = vunpack.c.h.b16 %v249
    %v868 = vunpack.c.l.b16 %v250
    %v869 = vunpack.c.h.b16 %v250
    %v870 = vunpack.c.l.b16 %v251
    %v871 = vunpack.c.h.b16 %v251
    %v872 = vunpack.c.l.b16 %v252
    %v873 = vunpack.c.h.b16 %v252
    %v874 = vunpack.c.l.b16 %v253
    %v875 = vunpack.c.h.b16 %v253
    %v876 = vunpack.c.l.b16 %v254
    %v877 = vunpack.c.h.b16 %v254
    %v878 = vunpack.c.l.b16 %v255
    %v879 = vunpack.c.h.b16 %v255
    %v880 = vunpack.c.l.b16 %v256
    %v881 = vunpack.c.h.b16 %v256
    %v882 = vunpack.c.l.b16 %v257
    %v883 = vunpack.c.h.b16 %v257
    %v884 = vunpack.c.l.b16 %v258
    %v885 = vunpack.c.h.b16 %v258
    %v886 = vunpack.c.l.b16 %v259
    %v887 = vunpack.c.h.b16 %v259
    %v888 = vunpack.c.l.b16 %v260
    %v889 = vunpack.c.h.b16 %v260
    %v890 = vunpack.c.l.b16 %v261
    %v891 = vunpack.c.h.b16 %v261
    %v892 = vunpack.c.l.b16 %v262
    %v893 = vunpack.c.h.b16 %v262
    %v894 = vunpack.c.l.b16 %v263
    %v895 = vunpack.c.h.b16 %v263
    %v896 = vunpack.c.l.b16 %v264
    %v897 = vunpack.c.h.b16 %v264
    %v898 = vunpack.c.l.b16 %v265
    %v899 = vunpack.c.h.b16 %v265
    %v900 = vunpack.c.l.b16 %v266
    %v901 = vunpack.c.h.b16 %v266
    %v902 = vunpack.c.l.b16 %v267
    %v903 = vunpack.c.h.b16 %v267
    %v904 = vunpack.c.l.b16 %v268
    %v905 = vunpack.c.h.b16 %v268
    %v906 = vunpack.c.l.b16 %v269
    %v907 = vunpack.c.h.b16 %v269
    %v908 = vunpack.c.l.b16 %v270
    %v909 = vunpack.c.h.b16 %v270
    %v910 = vunpack.c.l.b16 %v271
    %v911 = vunpack.c.h.b16 %v271
    %v912 = vunpack.c.l.b16 %v272
    %v913 = vunpack.c.h.b16 %v272
    %v914 = vunpack.c.l.b16 %v273
    %v915 = vunpack.c.h.b16 %v273
    %v916 = vunpack.c.l.b16 %v274
    %v917 = vunpack.c.h.b16 %v274
    %v918 = vunpack.c.l.b16 %v275
    %v919 = vunpack.c.h.b16 %v275
    %v920 = vunpack.c.l.b16 %v276
    %v921 = vunpack.c.h.b16 %v276
    %v922 = vunpack.c.l.b16 %v277
    %v923 = vunpack.c.h.b16 %v277
    %v924 = vunpack.c.l.b16 %v278
    %v925 = vunpack.c.h.b16 %v278
    %v926 = vunpack.c.l.b16 %v279
    %v927 = vunpack.c.h.b16 %v279
    %v928 = vunpack.c.l.b16 %v280
    %v929 = vunpack.c.h.b16 %v280
    %v930 = vunpack.c.l.b16 %v281
    %v931 = vunpack.c.h.b16 %v281
    %v932 = vunpack.c.l.b16 %v282
    %v933 = vunpack.c.h.b16 %v282
    %v934 = vunpack.c.l.b16 %v283
    %v935 = vunpack.c.h.b16 %v283
    %v936 = vunpack.c.l.b16 %v284
    %v937 = vunpack.c.h.b16 %v284
    %v938 = vunpack.c.l.b16 %v285
    %v939 = vunpack.c.h.b16 %v285
    %v940 = vunpack.c.l.b16 %v286
    %v941 = vunpack.c.h.b16 %v286
    %v942 = vunpack.c.l.b16 %v287
    %v943 = vunpack.c.h.b16 %v287
    %v944 = vunpack.c.l.b16 %v288
    %v945 = vunpack.c.h.b16 %v288
    %v946 = vunpack.c.l.b16 %v289
    %v947 = vunpack.c.h.b16 %v289
    %v948 = vunpack.c.l.b16 %v290
    %v949 = vunpack.c.h.b16 %v290
    %v950 = vunpack.c.l.b16 %v291
    %v951 = vunpack.c.h.b16 %v291
    %v952 = vunpack.c.l.b16 %v292
    %v953 = vunpack.c.h.b16 %v292
    %v954 = vunpack.c.l.b16 %v293
    %v955 = vunpack.c.h.b16 %v293
    %v956 = vunpack.c.l.b16 %v294
    %v957 = vunpack.c.h.b16 %v294
    %v958 = vunpack.c.l.b16 %v295
    %v959 = vunpack.c.h.b16 %v295
    %v960 = vunpack.c.l.b16 %v296
    %v961 = vunpack.c.h.b16 %v296
    %v962 = vunpack.c.l.b16 %v297
    %v963 = vunpack.c.h.b16 %v297
    %v964 = vunpack.c.l.b16 %v298
    %v965 = vunpack.c.h.b16 %v298
    %v966 = vunpack.c.l.b16 %v299
    %v967 = vunpack.c.h.b16 %v299
    %v968 = vunpack.c.l.b16 %v300
    %v969 = vunpack.c.h.b16 %v300
    %v970 = vunpack.c.l.b16 %v301
    %v971 = vunpack.c.h.b16 %v301
    %v972 = vunpack.c.l.b16 %v302
    %v973 = vunpack.c.h.b16 %v302
    %v974 = vunpack.c.l.b16 %v303
    %v975 = vunpack.c.h.b16 %v303
    %v976 = vunpack.c.l.b16 %v304
    %v977 = vunpack.c.h.b16 %v304
    %v978 = vunpack.c.l.b16 %v305
    %v979 = vunpack.c.h.b16 %v305
    %v980 = vunpack.c.l.b16 %v306
    %v981 = vunpack.c.h.b16 %v306
    %v982 = vunpack.c.l.b16 %v307
    %v983 = vunpack.c.h.b16 %v307
    %v984 = vunpack.c.l.b16 %v308
    %v985 = vunpack.c.h.b16 %v308
    %v986 = vunpack.c.l.b16 %v309
    %v987 = vunpack.c.h.b16 %v309
    %v988 = vunpack.c.l.b16 %v310
    %v989 = vunpack.c.h.b16 %v310
    %v990 = vunpack.c.l.b16 %v311
    %v991 = vunpack.c.h.b16 %v311
    %v992 = vunpack.c.l.b16 %v312
    %v993 = vunpack.c.h.b16 %v312
    %v994 = vunpack.c.l.b16 %v313
    %v995 = vunpack.c.h.b16 %v313
    %v996 = vunpack.c.l.b16 %v314
    %v997 = vunpack.c.h.b16 %v314
    %v998 = vunpack.c.l.b16 %v315
    %v999 = vunpack.c.h.b16 %v315
    %v1000 = vunpack.c.l.b16 %v316
    %v1001 = vunpack.c.h.b16 %v316
    %v1002 = vunpack.c.l.b16 %v317
    %v1003 = vunpack.c.h.b16 %v317
    %v1004 = vunpack.c.l.b16 %v318
    %v1005 = vunpack.c.h.b16 %v318
    %v1006 = vunpack.c.l.b16 %v319
    %v1007 = vunpack.c.h.b16 %v319
    %v1008 = vunpack.c.l.b16 %v320
    %v1009 = vunpack.c.h.b16 %v320
    %v1010 = vunpack.c.l.b16 %v321
    %v1011 = vunpack.c.h.b16 %v321
    %v1012 = vunpack.c.l.b16 %v322
    %v1013 = vunpack.c.h.b16 %v322
    %v1014 = vunpack.c.l.b16 %v323
    %v1015 = vunpack.c.h.b16 %v323
    %v1016 = vunpack.c.l.b16 %v324
    %v1017 = vunpack.c.h.b16 %v324
    %v1018 = vunpack.c.l.b16 %v325
    %v1019 = vunpack.c.h.b16 %v325
    %v1020 = vunpack.c.l.b16 %v326
    %v1021 = vunpack.c.h.b16 %v326
    %v1022 = vunpack.c.l.b16 %v327
    %v1023 = vunpack.c.h.b16 %v327
    %v1024 = vunpack.c.l.b16 %v328
    %v1025 = vunpack.c.h.b16 %v328
    %v1026 = vunpack.c.l.b16 %v329
    %v1027 = vunpack.c.h.b16 %v329
    %v1028 = vunpack.c.l.b16 %v330
    %v1029 = vunpack.c.h.b16 %v330
    %v1030 = vunpack.c.l.b16 %v331
    %v1031 = vunpack.c.h.b16 %v331
    %v1032 = vunpack.c.l.b16 %v332
    %v1033 = vunpack.c.h.b16 %v332
    %v1034 = vunpack.c.l.b16 %v333
    %v1035 = vunpack.c.h.b16 %v333
    %v1036 = vunpack.c.l.b16 %v334
    %v1037 = vunpack.c.h.b16 %v334
    %v1038 = vunpack.c.l.b16 %v335
    %v1039 = vunpack.c.h.b16 %v335
    %v1040 = vunpack.c.l.b16 %v336
    %v1041 = vunpack.c.h.b16 %v336
    %v1042 = vunpack.c.l.b16 %v337
    %v1043 = vunpack.c.h.b16 %v337
    %v1044 = vunpack.c.l.b16 %v338
    %v1045 = vunpack.c.h.b16 %v338
    %v1046 = vunpack.c.l.b16 %v339
    %v1047 = vunpack.c.h.b16 %v339
    %v1048 = vunpack.c.l.b16 %v340
    %v1049 = vunpack.c.h.b16 %v340
    %v1050 = vunpack.c.l.b16 %v341
    %v1051 = vunpack.c.h.b16 %v341
    %v1052 = vunpack.c.l.b16 %v342
    %v1053 = vunpack.c.h.b16 %v342
    %v1054 = vunpack.c.l.b16 %v343
    %v1055 = vunpack.c.h.b16 %v343
    %v1056 = vunpack.c.l.b16 %v344
    %v1057 = vunpack.c.h.b16 %v344
    %v1058 = vunpack.c.l.b16 %v345
    %v1059 = vunpack.c.h.b16 %v345
    %v1060 = vunpack.c.l.b16 %v346
    %v1061 = vunpack.c.h.b16 %v346
    %v1062 = vunpack.c.l.b16 %v347
    %v1063 = vunpack.c.h.b16 %v347
    %v1064 = vunpack.c.l.b16 %v348
    %v1065 = vunpack.c.h.b16 %v348
    %v1066 = vunpack.c.l.b16 %v349
    %v1067 = vunpack.c.h.b16 %v349
    %v1068 = vunpack.c.l.b16 %v350
    %v1069 = vunpack.c.h.b16 %v350
    %v1070 = vunpack.c.l.b16 %v351
    %v1071 = vunpack.c.h.b16 %v351
    %v1072 = vunpack.c.l.b16 %v352
    %v1073 = vunpack.c.h.b16 %v352
    %v1074 = vunpack.c.l.b16 %v353
    %v1075 = vunpack.c.h.b16 %v353
    %v1076 = vunpack.c.l.b16 %v354
    %v1077 = vunpack.c.h.b16 %v354
    %v1078 = vunpack.c.l.b16 %v355
    %v1079 = vunpack.c.h.b16 %v355
    %v1080 = vunpack.c.l.b16 %v356
    %v1081 = vunpack.c.h.b16 %v356
    %v1082 = vunpack.c.l.b16 %v357
    %v1083 = vunpack.c.h.b16 %v357
    %v1084 = vunpack.c.l.b16 %v358
    %v1085 = vunpack.c.h.b16 %v358
    %v1086 = vunpack.c.l.b16 %v359
    %v1087 = vunpack.c.h.b16 %v359
    %v1088 = vunpack.c.l.b16 %v360
    %v1089 = vunpack.c.h.b16 %v360
    %v1090 = vunpack.c.l.b16 %v361
    %v1091 = vunpack.c.h.b16 %v361
    %v1092 = vunpack.c.l.b16 %v362
    %v1093 = vunpack.c.h.b16 %v362
    %v1094 = vunpack.c.l.b16 %v363
    %v1095 = vunpack.c.h.b16 %v363
    %v1096 = vunpack.c.l.b16 %v364
    %v1097 = vunpack.c.h.b16 %v364
    %v1098 = vunpack.c.l.b16 %v365
    %v1099 = vunpack.c.h.b16 %v365
    %v1100 = vunpack.c.l.b16 %v366
    %v1101 = vunpack.c.h.b16 %v366
    %v1102 = vunpack.c.l.b16 %v367
    %v1103 = vunpack.c.h.b16 %v367
    %v1104 = vunpack.c.l.b16 %v368
    %v1105 = vunpack.c.h.b16 %v368
    %v1106 = vunpack.c.l.b16 %v369
    %v1107 = vunpack.c.h.b16 %v369
    %v1108 = vunpack.c.l.b16 %v370
    %v1109 = vunpack.c.h.b16 %v370
    %v1110 = vunpack.c.l.b16 %v371
    %v1111 = vunpack.c.h.b16 %v371
    %v1112 = vunpack.c.l.b16 %v372
    %v1113 = vunpack.c.h.b16 %v372
    %v1114 = vunpack.c.l.b16 %v373
    %v1115 = vunpack.c.h.b16 %v373
    %v1116 = vunpack.c.l.b16 %v374
    %v1117 = vunpack.c.h.b16 %v374
    %v1118 = vunpack.c.l.b16 %v375
    %v1119 = vunpack.c.h.b16 %v375
    %v1120 = vunpack.c.l.b16 %v376
    %v1121 = vunpack.c.h.b16 %v376
    %v1122 = vunpack.c.l.b16 %v377
    %v1123 = vunpack.c.h.b16 %v377
    %v1124 = vunpack.c.l.b16 %v378
    %v1125 = vunpack.c.h.b16 %v378
    %v1126 = vunpack.c.l.b16 %v379
    %v1127 = vunpack.c.h.b16 %v379
    %v1128 = vunpack.c.l.b16 %v380
    %v1129 = vunpack.c.h.b16 %v380
    %v1130 = vunpack.c.l.b16 %v381
    %v1131 = vunpack.c.h.b16 %v381
    %v1132 = vunpack.c.l.b16 %v382
    %v1133 = vunpack.c.h.b16 %v382
    %v1134 = vunpack.c.l.b16 %v383
    %v1135 = vunpack.c.h.b16 %v383
    %v1136 = vunpack.c.l.b16 %v384
    %v1137 = vunpack.c.h.b16 %v384
    %v1138 = vunpack.c.l.b16 %v385
    %v1139 = vunpack.c.h.b16 %v385
    %v1140 = vunpack.c.l.b16 %v386
    %v1141 = vunpack.c.h.b16 %v386
    %v1142 = vunpack.c.l.b16 %v387
    %v1143 = vunpack.c.h.b16 %v387
    %v1144 = vunpack.c.l.b16 %v388
    %v1145 = vunpack.c.h.b16 %v388
    %v1146 = vunpack.c.l.b16 %v389
    %v1147 = vunpack.c.h.b16 %v389
    %v1148 = vunpack.c.l.b16 %v390
    %v1149 = vunpack.c.h.b16 %v390
    %v1150 = vunpack.c.l.b16 %v391
    %v1151 = vunpack.c.h.b16 %v391
    %v1152 = vunpack.c.l.b16 %v392
    %v1153 = vunpack.c.h.b16 %v392
    %v1154 = vunpack.c.l.b16 %v393
    %v1155 = vunpack.c.h.b16 %v393
    %v1156 = vunpack.c.l.b16 %v394
    %v1157 = vunpack.c.h.b16 %v394
    %v1158 = vunpack.c.l.b16 %v395
    %v1159 = vunpack.c.h.b16 %v395
    %v1160 = vunpack.c.l.b16 %v396
    %v1161 = vunpack.c.h.b16 %v396
    %v1162 = vunpack.c.l.b16 %v397
    %v1163 = vunpack.c.h.b16 %v397
    %v1164 = vunpack.c.l.b16 %v398
    %v1165 = vunpack.c.h.b16 %v398
    %v1166 = vunpack.c.l.b16 %v399
    %v1167 = vunpack.c.h.b16 %v399
    %v1168 = vunpack.c.l.b16 %v400
    %v1169 = vunpack.c.h.b16 %v400
    %v1170 = vunpack.c.l.b16 %v401
    %v1171 = vunpack.c.h.b16 %v401
    %v1172 = vunpack.c.l.b16 %v402
    %v1173 = vunpack.c.h.b16 %v402
    %v1174 = vunpack.c.l.b16 %v403
    %v1175 = vunpack.c.h.b16 %v403
    %v1176 = vunpack.c.l.b16 %v404
    %v1177 = vunpack.c.h.b16 %v404
    %v1178 = vunpack.c.l.b16 %v405
    %v1179 = vunpack.c.h.b16 %v405
    %v1180 = vunpack.c.l.b16 %v406
    %v1181 = vunpack.c.h.b16 %v406
    %v1182 = vunpack.c.l.b16 %v407
    %v1183 = vunpack.c.h.b16 %v407
    %v1184 = vunpack.c.l.b16 %v408
    %v1185 = vunpack.c.h.b16 %v408
    %v1186 = vunpack.c.l.b16 %v409
    %v1187 = vunpack.c.h.b16 %v409
    %v1188 = vunpack.c.l.b16 %v410
    %v1189 = vunpack.c.h.b16 %v410
    %v1190 = vunpack.c.l.b16 %v411
    %v1191 = vunpack.c.h.b16 %v411
    %v1192 = vunpack.c.l.b16 %v412
    %v1193 = vunpack.c.h.b16 %v412
    %v1194 = vunpack.c.l.b16 %v413
    %v1195 = vunpack.c.h.b16 %v413
    %v1196 = vunpack.c.l.b16 %v414
    %v1197 = vunpack.c.h.b16 %v414
    %v1198 = vunpack.c.l.b16 %v415
    %v1199 = vunpack.c.h.b16 %v415
    %v1200 = vunpack.c.l.b16 %v416
    %v1201 = vunpack.c.h.b16 %v416
    %v1202 = vunpack.c.l.b16 %v417
    %v1203 = vunpack.c.h.b16 %v417
    %v1204 = vunpack.c.l.b16 %v418
    %v1205 = vunpack.c.h.b16 %v418
    %v1206 = vunpack.c.l.b16 %v419
    %v1207 = vunpack.c.h.b16 %v419
    %v1208 = vunpack.c.l.b16 %v420
    %v1209 = vunpack.c.h.b16 %v420
    %v1210 = vunpack.c.l.b16 %v421
    %v1211 = vunpack.c.h.b16 %v421
    %v1212 = vpack.c.b16 %v704, %v700
    %v1213 = vpack.c.b16 %v705, %v701
    %v1214 = vpack.c.b16 %v706, %v702
    %v1215 = vpack.c.b16 %v707, %v703
    %v1216 = vpack.c.b16 %v712, %v708
    %v1217 = vpack.c.b16 %v713, %v709
    %v1218 = vpack.c.b16 %v714, %v710
    %v1219 = vpack.c.b16 %v715, %v711
    %v1220 = vpack.c.b16 %v720, %v716
    %v1221 = vpack.c.b16 %v721, %v717
    %v1222 = vpack.c.b16 %v722, %v718
    %v1223 = vpack.c.b16 %v723, %v719
    %v1224 = vpack.c.b16 %v728, %v724
    %v1225 = vpack.c.b16 %v729, %v725
    %v1226 = vpack.c.b16 %v730, %v726
    %v1227 = vpack.c.b16 %v731, %v727
    %v1228 = vpack.c.b16 %v736, %v732
    %v1229 = vpack.c.b16 %v737, %v733
    %v1230 = vpack.c.b16 %v738, %v734
    %v1231 = vpack.c.b16 %v739, %v735
    %v1232 = vpack.c.b16 %v744, %v740
    %v1233 = vpack.c.b16 %v745, %v741
    %v1234 = vpack.c.b16 %v746, %v742
    %v1235 = vpack.c.b16 %v747, %v743
    %v1236 = vpack.c.b16 %v752, %v748
    %v1237 = vpack.c.b16 %v753, %v749
    %v1238 = vpack.c.b16 %v754, %v750
    %v1239 = vpack.c.b16 %v755, %v751
    %v1240 = vpack.c.b16 %v760, %v756
    %v1241 = vpack.c.b16 %v761, %v757
    %v1242 = vpack.c.b16 %v762, %v758
    %v1243 = vpack.c.b16 %v763, %v759
    %v1244 = vpack.c.b16 %v768, %v764
    %v1245 = vpack.c.b16 %v769, %v765
    %v1246 = vpack.c.b16 %v770, %v766
    %v1247 = vpack.c.b16 %v771, %v767
    %v1248 = vpack.c.b16 %v776, %v772
    %v1249 = vpack.c.b16 %v777, %v773
    %v1250 = vpack.c.b16 %v778, %v774
    %v1251 = vpack.c.b16 %v779, %v775
    %v1252 = vpack.c.b16 %v784, %v780
    %v1253 = vpack.c.b16 %v785, %v781
    %v1254 = vpack.c.b16 %v786, %v782
    %v1255 = vpack.c.b16 %v787, %v783
    %v1256 = vpack.c.b16 %v792, %v788
    %v1257 = vpack.c.b16 %v793, %v789
    %v1258 = vpack.c.b16 %v794, %v790
    %v1259 = vpack.c.b16 %v795, %v791
    %v1260 = vpack.c.b16 %v800, %v796
    %v1261 = vpack.c.b16 %v801, %v797
    %v1262 = vpack.c.b16 %v802, %v798
    %v1263 = vpack.c.b16 %v803, %v799
    %v1264 = vpack.c.b16 %v808, %v804
    %v1265 = vpack.c.b16 %v809, %v805
    %v1266 = vpack.c.b16 %v810, %v806
    %v1267 = vpack.c.b16 %v811, %v807
    %v1268 = vpack.c.b16 %v816, %v812
    %v1269 = vpack.c.b16 %v817, %v813
    %v1270 = vpack.c.b16 %v818, %v814
    %v1271 = vpack.c.b16 %v819, %v815
    %v1272 = vpack.c.b16 %v824, %v820
    %v1273 = vpack.c.b16 %v825, %v821
    %v1274 = vpack.c.b16 %v826, %v822
    %v1275 = vpack.c.b16 %v827, %v823
    %v1276 = vpack.c.b16 %v832, %v828
    %v1277 = vpack.c.b16 %v833, %v829
    %v1278 = vpack.c.b16 %v834, %v830
    %v1279 = vpack.c.b16 %v835, %v831
    %v1280 = vpack.c.b16 %v840, %v836
    %v1281 = vpack.c.b16 %v841, %v837
    %v1282 = vpack.c.b16 %v842, %v838
    %v1283 = vpack.c.b16 %v843, %v839
    %v1284 = vpack.c.b16 %v848, %v844
    %v1285 = vpack.c.b16 %v849, %v845
    %v1286 = vpack.c.b16 %v850, %v846
    %v1287 = vpack.c.b16 %v851, %v847
    %v1288 = vpack.c.b16 %v856, %v852
    %v1289 = vpack.c.b16 %v857, %v853
    %v1290 = vpack.c.b16 %v858, %v854
    %v1291 = vpack.c.b16 %v859, %v855
    %v1292 = vpack.c.b16 %v864, %v860
    %v1293 = vpack.c.b16 %v865, %v861
    %v1294 = vpack.c.b16 %v866, %v862
    %v1295 = vpack.c.b16 %v867, %v863
    %v1296 = vpack.c.b16 %v872, %v868
    %v1297 = vpack.c.b16 %v873, %v869
    %v1298 = vpack.c.b16 %v874, %v870
    %v1299 = vpack.c.b16 %v875, %v871
    %v1300 = vpack.c.b16 %v880, %v876
    %v1301 = vpack.c.b16 %v881, %v877
    %v1302 = vpack.c.b16 %v882, %v878
    %v1303 = vpack.c.b16 %v883, %v879
    %v1304 = vpack.c.b16 %v888, %v884
    %v1305 = vpack.c.b16 %v889, %v885
    %v1306 = vpack.c.b16 %v890, %v886
    %v1307 = vpack.c.b16 %v891, %v887
    %v1308 = vpack.c.b16 %v896, %v892
    %v1309 = vpack.c.b16 %v897, %v893
    %v1310 = vpack.c.b16 %v898, %v894
    %v1311 = vpack.c.b16 %v899, %v895
    %v1312 = vpack.c.b16 %v904, %v900
    %v1313 = vpack.c.b16 %v905, %v901
    %v1314 = vpack.c.b16 %v906, %v902
    %v1315 = vpack.c.b16 %v907, %v903
    %v1316 = vpack.c.b16 %v912, %v908
    %v1317 = vpack.c.b16 %v913, %v909
    %v1318 = vpack.c.b16 %v914, %v910
    %v1319 = vpack.c.b16 %v915, %v911
    %v1320 = vpack.c.b16 %v920, %v916
    %v1321 = vpack.c.b16 %v921, %v917
    %v1322 = vpack.c.b16 %v922, %v918
    %v1323 = vpack.c.b16 %v923, %v919
    %v1324 = vpack.c.b16 %v928, %v924
    %v1325 = vpack.c.b16 %v929, %v925
    %v1326 = vpack.c.b16 %v930, %v926
    %v1327 = vpack.c.b16 %v931, %v927
    %v1328 = vpack.c.b16 %v936, %v932
    %v1329 = vpack.c.b16 %v937, %v933
    %v1330 = vpack.c.b16 %v938, %v934
    %v1331 = vpack.c.b16 %v939, %v935
    %v1332 = vpack.c.b16 %v944, %v940
    %v1333 = vpack.c.b16 %v945, %v941
    %v1334 = vpack.c.b16 %v946, %v942
    %v1335 = vpack.c.b16 %v947, %v943
    %v1336 = vpack.c.b16 %v952, %v948
    %v1337 = vpack.c.b16 %v953, %v949
    %v1338 = vpack.c.b16 %v954, %v950
    %v1339 = vpack.c.b16 %v955, %v951
    %v1340 = vpack.c.b16 %v960, %v956
    %v1341 = vpack.c.b16 %v961, %v957
    %v1342 = vpack.c.b16 %v962, %v958
    %v1343 = vpack.c.b16 %v963, %v959
    %v1344 = vpack.c.b16 %v968, %v964
    %v1345 = vpack.c.b16 %v969, %v965
    %v1346 = vpack.c.b16 %v970, %v966
    %v1347 = vpack.c.b16 %v971, %v967
    %v1348 = vpack.c.b16 %v976, %v972
    %v1349 = vpack.c.b16 %v977, %v973
    %v1350 = vpack.c.b16 %v978, %v974
    %v1351 = vpack.c.b16 %v979, %v975
    %v1352 = vpack.c.b16 %v984, %v980
    %v1353 = vpack.c.b16 %v985, %v981
    %v1354 = vpack.c.b16 %v986, %v982
    %v1355 = vpack.c.b16 %v987, %v983
    %v1356 = vpack.c.b16 %v992, %v988
    %v1357 = vpack.c.b16 %v993, %v989
    %v1358 = vpack.c.b16 %v994, %v990
    %v1359 = vpack.c.b16 %v995, %v991
    %v1360 = vpack.c.b16 %v1000, %v996
    %v1361 = vpack.c.b16 %v1001, %v997
    %v1362 = vpack.c.b16 %v1002, %v998
    %v1363 = vpack.c.b16 %v1003, %v999
    %v1364 = vpack.c.b16 %v1008, %v1004
    %v1365 = vpack.c.b16 %v1009, %v1005
    %v1366 = vpack.c.b16 %v1010, %v1006
    %v1367 = vpack.c.b16 %v1011, %v1007
    %v1368 = vpack.c.b16 %v1016, %v1012
    %v1369 = vpack.c.b16 %v1017, %v1013
    %v1370 = vpack.c.b16 %v1018, %v1014
    %v1371 = vpack.c.b16 %v1019, %v1015
    %v1372 = vpack.c.b16 %v1024, %v1020
    %v1373 = vpack.c.b16 %v1025, %v1021
    %v1374 = vpack.c.b16 %v1026, %v1022
    %v1375 = vpack.c.b16 %v1027, %v1023
    %v1376 = vpack.c.b16 %v1032, %v1028
    %v1377 = vpack.c.b16 %v1033, %v1029
    %v1378 = vpack.c.b16 %v1034, %v1030
    %v1379 = vpack.c.b16 %v1035, %v1031
    %v1380 = vpack.c.b16 %v1040, %v1036
    %v1381 = vpack.c.b16 %v1041, %v1037
    %v1382 = vpack.c.b16 %v1042, %v1038
    %v1383 = vpack.c.b16 %v1043, %v1039
    %v1384 = vpack.c.b16 %v1048, %v1044
    %v1385 = vpack.c.b16 %v1049, %v1045
    %v1386 = vpack.c.b16 %v1050, %v1046
    %v1387 = vpack.c.b16 %v1051, %v1047
    %v1388 = vpack.c.b16 %v1056, %v1052
    %v1389 = vpack.c.b16 %v1057, %v1053
    %v1390 = vpack.c.b16 %v1058, %v1054
    %v1391 = vpack.c.b16 %v1059, %v1055
    %v1392 = vpack.c.b16 %v1064, %v1060
    %v1393 = vpack.c.b16 %v1065, %v1061
    %v1394 = vpack.c.b16 %v1066, %v1062
    %v1395 = vpack.c.b16 %v1067, %v1063
    %v1396 = vpack.c.b16 %v1072, %v1068
    %v1397 = vpack.c.b16 %v1073, %v1069
    %v1398 = vpack.c.b16 %v1074, %v1070
    %v1399 = vpack.c.b16 %v1075, %v1071
    %v1400 = vpack.c.b16 %v1080, %v1076
    %v1401 = vpack.c.b16 %v1081, %v1077
    %v1402 = vpack.c.b16 %v1082, %v1078
    %v1403 = vpack.c.b16 %v1083, %v1079
    %v1404 = vpack.c.b16 %v1088, %v1084
    %v1405 = vpack.c.b16 %v1089, %v1085
    %v1406 = vpack.c.b16 %v1090, %v1086
    %v1407 = vpack.c.b16 %v1091, %v1087
    %v1408 = vpack.c.b16 %v1096, %v1092
    %v1409 = vpack.c.b16 %v1097, %v1093
    %v1410 = vpack.c.b16 %v1098, %v1094
    %v1411 = vpack.c.b16 %v1099, %v1095
    %v1412 = vpack.c.b16 %v1104, %v1100
    %v1413 = vpack.c.b16 %v1105, %v1101
    %v1414 = vpack.c.b16 %v1106, %v1102
    %v1415 = vpack.c.b16 %v1107, %v1103
    %v1416 = vpack.c.b16 %v1112, %v1108
    %v1417 = vpack.c.b16 %v1113, %v1109
    %v1418 = vpack.c.b16 %v1114, %v1110
    %v1419 = vpack.c.b16 %v1115, %v1111
    %v1420 = vpack.c.b16 %v1120, %v1116
    %v1421 = vpack.c.b16 %v1121, %v1117
    %v1422 = vpack.c.b16 %v1122, %v1118
    %v1423 = vpack.c.b16 %v1123, %v1119
    %v1424 = vpack.c.b16 %v1128, %v1124
    %v1425 = vpack.c.b16 %v1129, %v1125
    %v1426 = vpack.c.b16 %v1130, %v1126
    %v1427 = vpack.c.b16 %v1131, %v1127
    %v1428 = vpack.c.b16 %v1136, %v1132
    %v1429 = vpack.c.b16 %v1137, %v1133
    %v1430 = vpack.c.b16 %v1138, %v1134
    %v1431 = vpack.c.b16 %v1139, %v1135
    %v1432 = vpack.c.b16 %v1144, %v1140
    %v1433 = vpack.c.b16 %v1145, %v1141
    %v1434 = vpack.c.b16 %v1146, %v1142
    %v1435 = vpack.c.b16 %v1147, %v1143
    %v1436 = vpack.c.b16 %v1152, %v1148
    %v1437 = vpack.c.b16 %v1153, %v1149
    %v1438 = vpack.c.b16 %v1154, %v1150
    %v1439 = vpack.c.b16 %v1155, %v1151
    %v1440 = vpack.c.b16 %v1160, %v1156
    %v1441 = vpack.c.b16 %v1161, %v1157
    %v1442 = vpack.c.b16 %v1162, %v1158
    %v1443 = vpack.c.b16 %v1163, %v1159
    %v1444 = vpack.c.b16 %v1168, %v1164
    %v1445 = vpack.c.b16 %v1169, %v1165
    %v1446 = vpack.c.b16 %v1170, %v1166
    %v1447 = vpack.c.b16 %v1171, %v1167
    %v1448 = vpack.c.b16 %v1176, %v1172
    %v1449 = vpack.c.b16 %v1177, %v1173
    %v1450 = vpack.c.b16 %v1178, %v1174
    %v1451 = vpack.c.b16 %v1179, %v1175
    %v1452 = vpack.c.b16 %v1184, %v1180
    %v1453 = vpack.c.b16 %v1185, %v1181
    %v1454 = vpack.c.b16 %v1186, %v1182
    %v1455 = vpack.c.b16 %v1187, %v1183
    %v1456 = vpack.c.b16 %v1192, %v1188
    %v1457 = vpack.c.b16 %v1193, %v1189
    %v1458 = vpack.c.b16 %v1194, %v1190
    %v1459 = vpack.c.b16 %v1195, %v1191
    %v1460 = vpack.c.b16 %v1200, %v1196
    %v1461 = vpack.c.b16 %v1201, %v1197
    %v1462 = vpack.c.b16 %v1202, %v1198
    %v1463 = vpack.c.b16 %v1203, %v1199
    %v1464 = vpack.c.b16 %v1208, %v1204
    %v1465 = vpack.c.b16 %v1209, %v1205
    %v1466 = vpack.c.b16 %v1210, %v1206
    %v1467 = vpack.c.b16 %v1211, %v1207
    %1724 = vmatprep.subr.bf16.mxu0 %v1213
    %1725 = vmatpush1.bf16.msra.mxu0 %v1212
    %1726 = vmatprep.subr.bf16.mxu0 %v1217
    %1727 = vmatpush1.bf16.msra.mxu0 %v1216
    %1728 = vmatprep.subr.bf16.mxu0 %v1221
    %1729 = vmatpush1.bf16.msra.mxu0 %v1220
    %1730 = vmatprep.subr.bf16.mxu0 %v1225
    %1731 = vmatpush1.bf16.msra.mxu0 %v1224
    %1732 = vmatprep.subr.bf16.mxu0 %v1229
    %1733 = vmatpush1.bf16.msra.mxu0 %v1228
    %1734 = vmatprep.subr.bf16.mxu0 %v1233
    %1735 = vmatpush1.bf16.msra.mxu0 %v1232
    %1736 = vmatprep.subr.bf16.mxu0 %v1237
    %1737 = vmatpush1.bf16.msra.mxu0 %v1236
    %1738 = vmatprep.subr.bf16.mxu0 %v1241
    %1739 = vmatpush1.bf16.msra.mxu0 %v1240
    %1740 = vmatprep.subr.bf16.mxu0 %v1245
    %1741 = vmatpush1.bf16.msra.mxu0 %v1244
    %1742 = vmatprep.subr.bf16.mxu0 %v1249
    %1743 = vmatpush1.bf16.msra.mxu0 %v1248
    %1744 = vmatprep.subr.bf16.mxu0 %v1253
    %1745 = vmatpush1.bf16.msra.mxu0 %v1252
    %1746 = vmatprep.subr.bf16.mxu0 %v1257
    %1747 = vmatpush1.bf16.msra.mxu0 %v1256
    %1748 = vmatprep.subr.bf16.mxu0 %v1261
    %1749 = vmatpush1.bf16.msra.mxu0 %v1260
    %1750 = vmatprep.subr.bf16.mxu0 %v1265
    %1751 = vmatpush1.bf16.msra.mxu0 %v1264
    %1752 = vmatprep.subr.bf16.mxu0 %v1269
    %1753 = vmatpush1.bf16.msra.mxu0 %v1268
    %1754 = vmatprep.subr.bf16.mxu0 %v1273
    %1755 = vmatpush1.bf16.msra.mxu0 %v1272
    %1756 = vmatprep.mubr.bf16.mxu0 %v159
    %1757 = vmatmul.mubr.bf16.gmra.mrb[0].mxu0 %v158
    %v1758 = vpop.f32.mrb[0].mxu0
    %v1759 = vadd.f32 %v427, %v1758
    %v1760 = vpop.f32.mrb[0].mxu0
    %v1761 = vadd.f32 %v431, %v1760
    %v1762 = vpop.f32.mrb[0].mxu0
    %v1763 = vpop.f32.mrb[0].mxu0
    %1764 = vdwg.mxu0
    %1765 = vmatprep.subr.bf16.mxu0 %v1277
    %1766 = vmatpush1.bf16.msra.mxu0 %v1276
    %1767 = vmatprep.subr.bf16.mxu0 %v1281
    %1768 = vmatpush1.bf16.msra.mxu0 %v1280
    %1769 = vmatprep.subr.bf16.mxu0 %v1285
    %1770 = vmatpush1.bf16.msra.mxu0 %v1284
    %1771 = vmatprep.subr.bf16.mxu0 %v1289
    %1772 = vmatpush1.bf16.msra.mxu0 %v1288
    %1773 = vmatprep.subr.bf16.mxu0 %v1293
    %1774 = vmatpush1.bf16.msra.mxu0 %v1292
    %1775 = vmatprep.subr.bf16.mxu0 %v1297
    %1776 = vmatpush1.bf16.msra.mxu0 %v1296
    %1777 = vmatprep.subr.bf16.mxu0 %v1301
    %1778 = vmatpush1.bf16.msra.mxu0 %v1300
    %1779 = vmatprep.subr.bf16.mxu0 %v1305
    %1780 = vmatpush1.bf16.msra.mxu0 %v1304
    %1781 = vmatprep.subr.bf16.mxu0 %v1309
    %1782 = vmatpush1.bf16.msra.mxu0 %v1308
    %1783 = vmatprep.subr.bf16.mxu0 %v1313
    %1784 = vmatpush1.bf16.msra.mxu0 %v1312
    %1785 = vmatprep.subr.bf16.mxu0 %v1317
    %1786 = vmatpush1.bf16.msra.mxu0 %v1316
    %1787 = vmatprep.subr.bf16.mxu0 %v1321
    %1788 = vmatpush1.bf16.msra.mxu0 %v1320
    %1789 = vmatprep.subr.bf16.mxu0 %v1325
    %1790 = vmatpush1.bf16.msra.mxu0 %v1324
    %1791 = vmatprep.subr.bf16.mxu0 %v1329
    %1792 = vmatpush1.bf16.msra.mxu0 %v1328
    %1793 = vmatprep.subr.bf16.mxu0 %v1333
    %1794 = vmatpush1.bf16.msra.mxu0 %v1332
    %1795 = vmatprep.subr.bf16.mxu0 %v1337
    %1796 = vmatpush1.bf16.msra.mxu0 %v1336
    %1797 = vmatprep.mubr.bf16.mxu0 %v161
    %1798 = vmatmul.mubr.bf16.gmra.mrb[0].mxu0 %v160
    %v1799 = vpop.f32.mrb[0].mxu0
    %v1800 = vadd.f32 %v1759, %v1799
    %v1801 = vpop.f32.mrb[0].mxu0
    %v1802 = vadd.f32 %v1761, %v1801
    %v1803 = vpop.f32.mrb[0].mxu0
    %v1804 = vpop.f32.mrb[0].mxu0
    %1805 = vdwg.mxu0
    %1806 = vmatprep.subr.bf16.mxu0 %v1341
    %1807 = vmatpush1.bf16.msra.mxu0 %v1340
    %1808 = vmatprep.subr.bf16.mxu0 %v1345
    %1809 = vmatpush1.bf16.msra.mxu0 %v1344
    %1810 = vmatprep.subr.bf16.mxu0 %v1349
    %1811 = vmatpush1.bf16.msra.mxu0 %v1348
    %1812 = vmatprep.subr.bf16.mxu0 %v1353
    %1813 = vmatpush1.bf16.msra.mxu0 %v1352
    %1814 = vmatprep.subr.bf16.mxu0 %v1357
    %1815 = vmatpush1.bf16.msra.mxu0 %v1356
    %1816 = vmatprep.subr.bf16.mxu0 %v1361
    %1817 = vmatpush1.bf16.msra.mxu0 %v1360
    %1818 = vmatprep.subr.bf16.mxu0 %v1365
    %1819 = vmatpush1.bf16.msra.mxu0 %v1364
    %1820 = vmatprep.subr.bf16.mxu0 %v1369
    %1821 = vmatpush1.bf16.msra.mxu0 %v1368
    %1822 = vmatprep.subr.bf16.mxu0 %v1373
    %1823 = vmatpush1.bf16.msra.mxu0 %v1372
    %1824 = vmatprep.subr.bf16.mxu0 %v1377
    %1825 = vmatpush1.bf16.msra.mxu0 %v1376
    %1826 = vmatprep.subr.bf16.mxu0 %v1381
    %1827 = vmatpush1.bf16.msra.mxu0 %v1380
    %1828 = vmatprep.subr.bf16.mxu0 %v1385
    %1829 = vmatpush1.bf16.msra.mxu0 %v1384
    %1830 = vmatprep.subr.bf16.mxu0 %v1389
    %1831 = vmatpush1.bf16.msra.mxu0 %v1388
    %1832 = vmatprep.subr.bf16.mxu0 %v1393
    %1833 = vmatpush1.bf16.msra.mxu0 %v1392
    %1834 = vmatprep.subr.bf16.mxu0 %v1397
    %1835 = vmatpush1.bf16.msra.mxu0 %v1396
    %1836 = vmatprep.subr.bf16.mxu0 %v1401
    %1837 = vmatpush1.bf16.msra.mxu0 %v1400
    %1838 = vmatprep.mubr.bf16.mxu0 %v163
    %1839 = vmatmul.mubr.bf16.gmra.mrb[0].mxu0 %v162
    %v1840 = vpop.f32.mrb[0].mxu0
    %v1841 = vadd.f32 %v1800, %v1840
    %v1842 = vpop.f32.mrb[0].mxu0
    %v1843 = vadd.f32 %v1802, %v1842
    %v1844 = vpop.f32.mrb[0].mxu0
    %v1845 = vpop.f32.mrb[0].mxu0
    %1846 = vdwg.mxu0
    %1847 = vmatprep.subr.bf16.mxu0 %v1405
    %1848 = vmatpush1.bf16.msra.mxu0 %v1404
    %1849 = vmatprep.subr.bf16.mxu0 %v1409
    %1850 = vmatpush1.bf16.msra.mxu0 %v1408
    %1851 = vmatprep.subr.bf16.mxu0 %v1413
    %1852 = vmatpush1.bf16.msra.mxu0 %v1412
    %1853 = vmatprep.subr.bf16.mxu0 %v1417
    %1854 = vmatpush1.bf16.msra.mxu0 %v1416
    %1855 = vmatprep.subr.bf16.mxu0 %v1421
    %1856 = vmatpush1.bf16.msra.mxu0 %v1420
    %1857 = vmatprep.subr.bf16.mxu0 %v1425
    %1858 = vmatpush1.bf16.msra.mxu0 %v1424
    %1859 = vmatprep.subr.bf16.mxu0 %v1429
    %1860 = vmatpush1.bf16.msra.mxu0 %v1428
    %1861 = vmatprep.subr.bf16.mxu0 %v1433
    %1862 = vmatpush1.bf16.msra.mxu0 %v1432
    %1863 = vmatprep.subr.bf16.mxu0 %v1437
    %1864 = vmatpush1.bf16.msra.mxu0 %v1436
    %1865 = vmatprep.subr.bf16.mxu0 %v1441
    %1866 = vmatpush1.bf16.msra.mxu0 %v1440
    %1867 = vmatprep.subr.bf16.mxu0 %v1445
    %1868 = vmatpush1.bf16.msra.mxu0 %v1444
    %1869 = vmatprep.subr.bf16.mxu0 %v1449
    %1870 = vmatpush1.bf16.msra.mxu0 %v1448
    %1871 = vmatprep.subr.bf16.mxu0 %v1453
    %1872 = vmatpush1.bf16.msra.mxu0 %v1452
    %1873 = vmatprep.subr.bf16.mxu0 %v1457
    %1874 = vmatpush1.bf16.msra.mxu0 %v1456
    %1875 = vmatprep.subr.bf16.mxu0 %v1461
    %1876 = vmatpush1.bf16.msra.mxu0 %v1460
    %1877 = vmatprep.subr.bf16.mxu0 %v1465
    %1878 = vmatpush1.bf16.msra.mxu0 %v1464
    %1879 = vmatprep.mubr.bf16.mxu0 %v165
    %1880 = vmatmul.mubr.bf16.gmra.mrb[0].mxu0 %v164
    %v1881 = vpop.f32.mrb[0].mxu0
    %v1882 = vadd.f32 %v1841, %v1881
    %v1883 = vpop.f32.mrb[0].mxu0
    %v1884 = vadd.f32 %v1843, %v1883
    %v1885 = vpop.f32.mrb[0].mxu0
    %v1886 = vpop.f32.mrb[0].mxu0
    %1887 = vdwg.mxu0
    %1888 = vmatprep.subr.bf16.mxu0 %v1215
    %1889 = vmatpush1.bf16.msra.mxu0 %v1214
    %1890 = vmatprep.subr.bf16.mxu0 %v1219
    %1891 = vmatpush1.bf16.msra.mxu0 %v1218
    %1892 = vmatprep.subr.bf16.mxu0 %v1223
    %1893 = vmatpush1.bf16.msra.mxu0 %v1222
    %1894 = vmatprep.subr.bf16.mxu0 %v1227
    %1895 = vmatpush1.bf16.msra.mxu0 %v1226
    %1896 = vmatprep.subr.bf16.mxu0 %v1231
    %1897 = vmatpush1.bf16.msra.mxu0 %v1230
    %1898 = vmatprep.subr.bf16.mxu0 %v1235
    %1899 = vmatpush1.bf16.msra.mxu0 %v1234
    %1900 = vmatprep.subr.bf16.mxu0 %v1239
    %1901 = vmatpush1.bf16.msra.mxu0 %v1238
    %1902 = vmatprep.subr.bf16.mxu0 %v1243
    %1903 = vmatpush1.bf16.msra.mxu0 %v1242
    %1904 = vmatprep.subr.bf16.mxu0 %v1247
    %1905 = vmatpush1.bf16.msra.mxu0 %v1246
    %1906 = vmatprep.subr.bf16.mxu0 %v1251
    %1907 = vmatpush1.bf16.msra.mxu0 %v1250
    %1908 = vmatprep.subr.bf16.mxu0 %v1255
    %1909 = vmatpush1.bf16.msra.mxu0 %v1254
    %1910 = vmatprep.subr.bf16.mxu0 %v1259
    %1911 = vmatpush1.bf16.msra.mxu0 %v1258
    %1912 = vmatprep.subr.bf16.mxu0 %v1263
    %1913 = vmatpush1.bf16.msra.mxu0 %v1262
    %1914 = vmatprep.subr.bf16.mxu0 %v1267
    %1915 = vmatpush1.bf16.msra.mxu0 %v1266
    %1916 = vmatprep.subr.bf16.mxu0 %v1271
    %1917 = vmatpush1.bf16.msra.mxu0 %v1270
    %1918 = vmatprep.subr.bf16.mxu0 %v1275
    %1919 = vmatpush1.bf16.msra.mxu0 %v1274
    %1920 = vmatprep.mubr.bf16.mxu0 %v159
    %1921 = vmatmul.mubr.bf16.gmra.mrb[0].mxu0 %v158
    %v1922 = vpop.f32.mrb[0].mxu0
    %v1923 = vadd.f32 %v435, %v1922
    %v1924 = vpop.f32.mrb[0].mxu0
    %v1925 = vadd.f32 %v439, %v1924
    %v1926 = vpop.f32.mrb[0].mxu0
    %v1927 = vpop.f32.mrb[0].mxu0
    %1928 = vdwg.mxu0
    %1929 = vmatprep.subr.bf16.mxu0 %v1279
    %1930 = vmatpush1.bf16.msra.mxu0 %v1278
    %1931 = vmatprep.subr.bf16.mxu0 %v1283
    %1932 = vmatpush1.bf16.msra.mxu0 %v1282
    %1933 = vmatprep.subr.bf16.mxu0 %v1287
    %1934 = vmatpush1.bf16.msra.mxu0 %v1286
    %1935 = vmatprep.subr.bf16.mxu0 %v1291
    %1936 = vmatpush1.bf16.msra.mxu0 %v1290
    %1937 = vmatprep.subr.bf16.mxu0 %v1295
    %1938 = vmatpush1.bf16.msra.mxu0 %v1294
    %1939 = vmatprep.subr.bf16.mxu0 %v1299
    %1940 = vmatpush1.bf16.msra.mxu0 %v1298
    %1941 = vmatprep.subr.bf16.mxu0 %v1303
    %1942 = vmatpush1.bf16.msra.mxu0 %v1302
    %1943 = vmatprep.subr.bf16.mxu0 %v1307
    %1944 = vmatpush1.bf16.msra.mxu0 %v1306
    %1945 = vmatprep.subr.bf16.mxu0 %v1311
    %1946 = vmatpush1.bf16.msra.mxu0 %v1310
    %1947 = vmatprep.subr.bf16.mxu0 %v1315
    %1948 = vmatpush1.bf16.msra.mxu0 %v1314
    %1949 = vmatprep.subr.bf16.mxu0 %v1319
    %1950 = vmatpush1.bf16.msra.mxu0 %v1318
    %1951 = vmatprep.subr.bf16.mxu0 %v1323
    %1952 = vmatpush1.bf16.msra.mxu0 %v1322
    %1953 = vmatprep.subr.bf16.mxu0 %v1327
    %1954 = vmatpush1.bf16.msra.mxu0 %v1326
    %1955 = vmatprep.subr.bf16.mxu0 %v1331
    %1956 = vmatpush1.bf16.msra.mxu0 %v1330
    %1957 = vmatprep.subr.bf16.mxu0 %v1335
    %1958 = vmatpush1.bf16.msra.mxu0 %v1334
    %1959 = vmatprep.subr.bf16.mxu0 %v1339
    %1960 = vmatpush1.bf16.msra.mxu0 %v1338
    %1961 = vmatprep.mubr.bf16.mxu0 %v161
    %1962 = vmatmul.mubr.bf16.gmra.mrb[0].mxu0 %v160
    %v1963 = vpop.f32.mrb[0].mxu0
    %v1964 = vadd.f32 %v1923, %v1963
    %v1965 = vpop.f32.mrb[0].mxu0
    %v1966 = vadd.f32 %v1925, %v1965
    %v1967 = vpop.f32.mrb[0].mxu0
    %v1968 = vpop.f32.mrb[0].mxu0
    %1969 = vdwg.mxu0
    %1970 = vmatprep.subr.bf16.mxu0 %v1343
    %1971 = vmatpush1.bf16.msra.mxu0 %v1342
    %1972 = vmatprep.subr.bf16.mxu0 %v1347
    %1973 = vmatpush1.bf16.msra.mxu0 %v1346
    %1974 = vmatprep.subr.bf16.mxu0 %v1351
    %1975 = vmatpush1.bf16.msra.mxu0 %v1350
    %1976 = vmatprep.subr.bf16.mxu0 %v1355
    %1977 = vmatpush1.bf16.msra.mxu0 %v1354
    %1978 = vmatprep.subr.bf16.mxu0 %v1359
    %1979 = vmatpush1.bf16.msra.mxu0 %v1358
    %1980 = vmatprep.subr.bf16.mxu0 %v1363
    %1981 = vmatpush1.bf16.msra.mxu0 %v1362
    %1982 = vmatprep.subr.bf16.mxu0 %v1367
    %1983 = vmatpush1.bf16.msra.mxu0 %v1366
    %1984 = vmatprep.subr.bf16.mxu0 %v1371
    %1985 = vmatpush1.bf16.msra.mxu0 %v1370
    %1986 = vmatprep.subr.bf16.mxu0 %v1375
    %1987 = vmatpush1.bf16.msra.mxu0 %v1374
    %1988 = vmatprep.subr.bf16.mxu0 %v1379
    %1989 = vmatpush1.bf16.msra.mxu0 %v1378
    %1990 = vmatprep.subr.bf16.mxu0 %v1383
    %1991 = vmatpush1.bf16.msra.mxu0 %v1382
    %1992 = vmatprep.subr.bf16.mxu0 %v1387
    %1993 = vmatpush1.bf16.msra.mxu0 %v1386
    %1994 = vmatprep.subr.bf16.mxu0 %v1391
    %1995 = vmatpush1.bf16.msra.mxu0 %v1390
    %1996 = vmatprep.subr.bf16.mxu0 %v1395
    %1997 = vmatpush1.bf16.msra.mxu0 %v1394
    %1998 = vmatprep.subr.bf16.mxu0 %v1399
    %1999 = vmatpush1.bf16.msra.mxu0 %v1398
    %2000 = vmatprep.subr.bf16.mxu0 %v1403
    %2001 = vmatpush1.bf16.msra.mxu0 %v1402
    %2002 = vmatprep.mubr.bf16.mxu0 %v163
    %2003 = vmatmul.mubr.bf16.gmra.mrb[0].mxu0 %v162
    %v2004 = vpop.f32.mrb[0].mxu0
    %v2005 = vadd.f32 %v1964, %v2004
    %v2006 = vpop.f32.mrb[0].mxu0
    %v2007 = vadd.f32 %v1966, %v2006
    %v2008 = vpop.f32.mrb[0].mxu0
    %v2009 = vpop.f32.mrb[0].mxu0
    %2010 = vdwg.mxu0
    %2011 = vmatprep.subr.bf16.mxu0 %v1407
    %2012 = vmatpush1.bf16.msra.mxu0 %v1406
    %2013 = vmatprep.subr.bf16.mxu0 %v1411
    %2014 = vmatpush1.bf16.msra.mxu0 %v1410
    %2015 = vmatprep.subr.bf16.mxu0 %v1415
    %2016 = vmatpush1.bf16.msra.mxu0 %v1414
    %2017 = vmatprep.subr.bf16.mxu0 %v1419
    %2018 = vmatpush1.bf16.msra.mxu0 %v1418
    %2019 = vmatprep.subr.bf16.mxu0 %v1423
    %2020 = vmatpush1.bf16.msra.mxu0 %v1422
    %2021 = vmatprep.subr.bf16.mxu0 %v1427
    %2022 = vmatpush1.bf16.msra.mxu0 %v1426
    %2023 = vmatprep.subr.bf16.mxu0 %v1431
    %2024 = vmatpush1.bf16.msra.mxu0 %v1430
    %2025 = vmatprep.subr.bf16.mxu0 %v1435
    %2026 = vmatpush1.bf16.msra.mxu0 %v1434
    %2027 = vmatprep.subr.bf16.mxu0 %v1439
    %2028 = vmatpush1.bf16.msra.mxu0 %v1438
    %2029 = vmatprep.subr.bf16.mxu0 %v1443
    %2030 = vmatpush1.bf16.msra.mxu0 %v1442
    %2031 = vmatprep.subr.bf16.mxu0 %v1447
    %2032 = vmatpush1.bf16.msra.mxu0 %v1446
    %2033 = vmatprep.subr.bf16.mxu0 %v1451
    %2034 = vmatpush1.bf16.msra.mxu0 %v1450
    %2035 = vmatprep.subr.bf16.mxu0 %v1455
    %2036 = vmatpush1.bf16.msra.mxu0 %v1454
    %2037 = vmatprep.subr.bf16.mxu0 %v1459
    %2038 = vmatpush1.bf16.msra.mxu0 %v1458
    %2039 = vmatprep.subr.bf16.mxu0 %v1463
    %2040 = vmatpush1.bf16.msra.mxu0 %v1462
    %2041 = vmatprep.subr.bf16.mxu0 %v1467
    %2042 = vmatpush1.bf16.msra.mxu0 %v1466
    %2043 = vmatprep.mubr.bf16.mxu0 %v165
    %2044 = vmatmul.mubr.bf16.gmra.mrb[0].mxu0 %v164
    %v2045 = vpop.f32.mrb[0].mxu0
    %v2046 = vadd.f32 %v2005, %v2045
    %v2047 = vpop.f32.mrb[0].mxu0
    %v2048 = vadd.f32 %v2007, %v2047
    %v2049 = vpop.f32.mrb[0].mxu0
    %v2050 = vpop.f32.mrb[0].mxu0
    %2051 = vdwg.mxu0
    %v2052 = vmax.f32 %v1882, 0.0
    %v2053 = vmax.f32 %v1884, 0.0
    %v2054 = vmax.f32 %v2046, 0.0
    %v2055 = vmax.f32 %v2048, 0.0
    %v2056 = vpack.c.bf16 %v2052, %v2052
    %v2057 = vpack.c.bf16 %v2053, %v2053
    %v2058 = vpack.c.bf16 %v2054, %v2054
    %v2059 = vpack.c.bf16 %v2055, %v2055
    %v2060 = vld [vmem:[#allocation4] sm:$0xff]
    %v2061 = vld [vmem:[#allocation4 + $0x8] sm:$0xff]
    %v2062 = vld [vmem:[#allocation4 + $0x10] sm:$0xff]
    %v2063 = vld [vmem:[#allocation4 + $0x18] sm:$0xff]
    %v2064 = vld [vmem:[#allocation4 + $0x20] sm:$0xff]
    %v2065 = vld [vmem:[#allocation4 + $0x28] sm:$0xff]
    %v2066 = vld [vmem:[#allocation4 + $0x30] sm:$0xff]
    %v2067 = vld [vmem:[#allocation4 + $0x38] sm:$0xff]
    %v2068 = vld [vmem:[#allocation4 + $0x40] sm:$0xff]
    %v2069 = vld [vmem:[#allocation4 + $0x48] sm:$0xff]
    %v2070 = vld [vmem:[#allocation4 + $0x50] sm:$0xff]
    %v2071 = vld [vmem:[#allocation4 + $0x58] sm:$0xff]
    %v2072 = vld [vmem:[#allocation4 + $0x60] sm:$0xff]
    %v2073 = vld [vmem:[#allocation4 + $0x68] sm:$0xff]
    %v2074 = vld [vmem:[#allocation4 + $0x70] sm:$0xff]
    %v2075 = vld [vmem:[#allocation4 + $0x78] sm:$0xff]
    %v2076 = vld [vmem:[#allocation4 + $0x80] sm:$0xff]
    %v2077 = vld [vmem:[#allocation4 + $0x88] sm:$0xff]
    %v2078 = vld [vmem:[#allocation4 + $0x90] sm:$0xff]
    %v2079 = vld [vmem:[#allocation4 + $0x98] sm:$0xff]
    %v2080 = vld [vmem:[#allocation4 + $0xa0] sm:$0xff]
    %v2081 = vld [vmem:[#allocation4 + $0xa8] sm:$0xff]
    %v2082 = vld [vmem:[#allocation4 + $0xb0] sm:$0xff]
    %v2083 = vld [vmem:[#allocation4 + $0xb8] sm:$0xff]
    %v2084 = vld [vmem:[#allocation4 + $0xc0] sm:$0xff]
    %v2085 = vld [vmem:[#allocation4 + $0xc8] sm:$0xff]
    %v2086 = vld [vmem:[#allocation4 + $0xd0] sm:$0xff]
    %v2087 = vld [vmem:[#allocation4 + $0xd8] sm:$0xff]
    %v2088 = vld [vmem:[#allocation4 + $0xe0] sm:$0xff]
    %v2089 = vld [vmem:[#allocation4 + $0xe8] sm:$0xff]
    %v2090 = vld [vmem:[#allocation4 + $0xf0] sm:$0xff]
    %v2091 = vld [vmem:[#allocation4 + $0xf8] sm:$0xff]
    %v2092 = vld [vmem:[#allocation4 + $0x100] sm:$0xff]
    %v2093 = vld [vmem:[#allocation4 + $0x108] sm:$0xff]
    %v2094 = vld [vmem:[#allocation4 + $0x110] sm:$0xff]
    %v2095 = vld [vmem:[#allocation4 + $0x118] sm:$0xff]
    %v2096 = vld [vmem:[#allocation4 + $0x120] sm:$0xff]
    %v2097 = vld [vmem:[#allocation4 + $0x128] sm:$0xff]
    %v2098 = vld [vmem:[#allocation4 + $0x130] sm:$0xff]
    %v2099 = vld [vmem:[#allocation4 + $0x138] sm:$0xff]
    %v2100 = vld [vmem:[#allocation4 + $0x140] sm:$0xff]
    %v2101 = vld [vmem:[#allocation4 + $0x148] sm:$0xff]
    %v2102 = vld [vmem:[#allocation4 + $0x150] sm:$0xff]
    %v2103 = vld [vmem:[#allocation4 + $0x158] sm:$0xff]
    %v2104 = vld [vmem:[#allocation4 + $0x160] sm:$0xff]
    %v2105 = vld [vmem:[#allocation4 + $0x168] sm:$0xff]
    %v2106 = vld [vmem:[#allocation4 + $0x170] sm:$0xff]
    %v2107 = vld [vmem:[#allocation4 + $0x178] sm:$0xff]
    %v2108 = vld [vmem:[#allocation4 + $0x180] sm:$0xff]
    %v2109 = vld [vmem:[#allocation4 + $0x188] sm:$0xff]
    %v2110 = vld [vmem:[#allocation4 + $0x190] sm:$0xff]
    %v2111 = vld [vmem:[#allocation4 + $0x198] sm:$0xff]
    %v2112 = vld [vmem:[#allocation4 + $0x1a0] sm:$0xff]
    %v2113 = vld [vmem:[#allocation4 + $0x1a8] sm:$0xff]
    %v2114 = vld [vmem:[#allocation4 + $0x1b0] sm:$0xff]
    %v2115 = vld [vmem:[#allocation4 + $0x1b8] sm:$0xff]
    %v2116 = vld [vmem:[#allocation4 + $0x1c0] sm:$0xff]
    %v2117 = vld [vmem:[#allocation4 + $0x1c8] sm:$0xff]
    %v2118 = vld [vmem:[#allocation4 + $0x1d0] sm:$0xff]
    %v2119 = vld [vmem:[#allocation4 + $0x1d8] sm:$0xff]
    %v2120 = vld [vmem:[#allocation4 + $0x1e0] sm:$0xff]
    %v2121 = vld [vmem:[#allocation4 + $0x1e8] sm:$0xff]
    %v2122 = vld [vmem:[#allocation4 + $0x1f0] sm:$0xff]
    %v2123 = vld [vmem:[#allocation4 + $0x1f8] sm:$0xff]
    %v2124 = vld [vmem:[#allocation4 + $0x200] sm:$0xff]
    %v2125 = vld [vmem:[#allocation4 + $0x208] sm:$0xff]
    %v2126 = vld [vmem:[#allocation4 + $0x210] sm:$0xff]
    %v2127 = vld [vmem:[#allocation4 + $0x218] sm:$0xff]
    %v2128 = vld [vmem:[#allocation4 + $0x220] sm:$0xff]
    %v2129 = vld [vmem:[#allocation4 + $0x228] sm:$0xff]
    %v2130 = vld [vmem:[#allocation4 + $0x230] sm:$0xff]
    %v2131 = vld [vmem:[#allocation4 + $0x238] sm:$0xff]
    %v2132 = vld [vmem:[#allocation4 + $0x240] sm:$0xff]
    %v2133 = vld [vmem:[#allocation4 + $0x248] sm:$0xff]
    %v2134 = vld [vmem:[#allocation4 + $0x250] sm:$0xff]
    %v2135 = vld [vmem:[#allocation4 + $0x258] sm:$0xff]
    %v2136 = vld [vmem:[#allocation4 + $0x260] sm:$0xff]
    %v2137 = vld [vmem:[#allocation4 + $0x268] sm:$0xff]
    %v2138 = vld [vmem:[#allocation4 + $0x270] sm:$0xff]
    %v2139 = vld [vmem:[#allocation4 + $0x278] sm:$0xff]
    %v2140 = vld [vmem:[#allocation4 + $0x280] sm:$0xff]
    %v2141 = vld [vmem:[#allocation4 + $0x288] sm:$0xff]
    %v2142 = vld [vmem:[#allocation4 + $0x290] sm:$0xff]
    %v2143 = vld [vmem:[#allocation4 + $0x298] sm:$0xff]
    %v2144 = vld [vmem:[#allocation4 + $0x2a0] sm:$0xff]
    %v2145 = vld [vmem:[#allocation4 + $0x2a8] sm:$0xff]
    %v2146 = vld [vmem:[#allocation4 + $0x2b0] sm:$0xff]
    %v2147 = vld [vmem:[#allocation4 + $0x2b8] sm:$0xff]
    %v2148 = vld [vmem:[#allocation4 + $0x2c0] sm:$0xff]
    %v2149 = vld [vmem:[#allocation4 + $0x2c8] sm:$0xff]
    %v2150 = vld [vmem:[#allocation4 + $0x2d0] sm:$0xff]
    %v2151 = vld [vmem:[#allocation4 + $0x2d8] sm:$0xff]
    %v2152 = vld [vmem:[#allocation4 + $0x2e0] sm:$0xff]
    %v2153 = vld [vmem:[#allocation4 + $0x2e8] sm:$0xff]
    %v2154 = vld [vmem:[#allocation4 + $0x2f0] sm:$0xff]
    %v2155 = vld [vmem:[#allocation4 + $0x2f8] sm:$0xff]
    %v2156 = vld [vmem:[#allocation4 + $0x300] sm:$0xff]
    %v2157 = vld [vmem:[#allocation4 + $0x308] sm:$0xff]
    %v2158 = vld [vmem:[#allocation4 + $0x310] sm:$0xff]
    %v2159 = vld [vmem:[#allocation4 + $0x318] sm:$0xff]
    %v2160 = vld [vmem:[#allocation4 + $0x320] sm:$0xff]
    %v2161 = vld [vmem:[#allocation4 + $0x328] sm:$0xff]
    %v2162 = vld [vmem:[#allocation4 + $0x330] sm:$0xff]
    %v2163 = vld [vmem:[#allocation4 + $0x338] sm:$0xff]
    %v2164 = vld [vmem:[#allocation4 + $0x340] sm:$0xff]
    %v2165 = vld [vmem:[#allocation4 + $0x348] sm:$0xff]
    %v2166 = vld [vmem:[#allocation4 + $0x350] sm:$0xff]
    %v2167 = vld [vmem:[#allocation4 + $0x358] sm:$0xff]
    %v2168 = vld [vmem:[#allocation4 + $0x360] sm:$0xff]
    %v2169 = vld [vmem:[#allocation4 + $0x368] sm:$0xff]
    %v2170 = vld [vmem:[#allocation4 + $0x370] sm:$0xff]
    %v2171 = vld [vmem:[#allocation4 + $0x378] sm:$0xff]
    %v2172 = vld [vmem:[#allocation4 + $0x380] sm:$0xff]
    %v2173 = vld [vmem:[#allocation4 + $0x388] sm:$0xff]
    %v2174 = vld [vmem:[#allocation4 + $0x390] sm:$0xff]
    %v2175 = vld [vmem:[#allocation4 + $0x398] sm:$0xff]
    %v2176 = vld [vmem:[#allocation4 + $0x3a0] sm:$0xff]
    %v2177 = vld [vmem:[#allocation4 + $0x3a8] sm:$0xff]
    %v2178 = vld [vmem:[#allocation4 + $0x3b0] sm:$0xff]
    %v2179 = vld [vmem:[#allocation4 + $0x3b8] sm:$0xff]
    %v2180 = vld [vmem:[#allocation4 + $0x3c0] sm:$0xff]
    %v2181 = vld [vmem:[#allocation4 + $0x3c8] sm:$0xff]
    %v2182 = vld [vmem:[#allocation4 + $0x3d0] sm:$0xff]
    %v2183 = vld [vmem:[#allocation4 + $0x3d8] sm:$0xff]
    %v2184 = vld [vmem:[#allocation4 + $0x3e0] sm:$0xff]
    %v2185 = vld [vmem:[#allocation4 + $0x3e8] sm:$0xff]
    %v2186 = vld [vmem:[#allocation4 + $0x3f0] sm:$0xff]
    %v2187 = vld [vmem:[#allocation4 + $0x3f8] sm:$0xff]
    %v2188 = vld [vmem:[%s5] sm:$0xf]
    %v2190 = vlaneseq
    %v2191 = vshrl.u32 %v2190, 7
    %v2192 = vsub.s32 0, %v2191
    %v2193 = vrot.slane %v2188, %v2192
    %v2194 = vlaneseq
    %v2195 = vshrl.u32 %v2194, 7
    %v2196 = vsub.s32 1, %v2195
    %v2197 = vrot.slane %v2188, %v2196
    %v2198 = vlaneseq
    %v2199 = vshrl.u32 %v2198, 7
    %v2200 = vsub.s32 2, %v2199
    %v2201 = vrot.slane %v2188, %v2200
    %v2202 = vlaneseq
    %v2203 = vshrl.u32 %v2202, 7
    %v2204 = vsub.s32 3, %v2203
    %v2205 = vrot.slane %v2188, %v2204
    %v2338 = vunpack.c.l.b16 %v2060
    %v2339 = vunpack.c.h.b16 %v2060
    %v2340 = vunpack.c.l.b16 %v2061
    %v2341 = vunpack.c.h.b16 %v2061
    %v2342 = vunpack.c.l.b16 %v2062
    %v2343 = vunpack.c.h.b16 %v2062
    %v2344 = vunpack.c.l.b16 %v2063
    %v2345 = vunpack.c.h.b16 %v2063
    %v2346 = vunpack.c.l.b16 %v2064
    %v2347 = vunpack.c.h.b16 %v2064
    %v2348 = vunpack.c.l.b16 %v2065
    %v2349 = vunpack.c.h.b16 %v2065
    %v2350 = vunpack.c.l.b16 %v2066
    %v2351 = vunpack.c.h.b16 %v2066
    %v2352 = vunpack.c.l.b16 %v2067
    %v2353 = vunpack.c.h.b16 %v2067
    %v2354 = vunpack.c.l.b16 %v2068
    %v2355 = vunpack.c.h.b16 %v2068
    %v2356 = vunpack.c.l.b16 %v2069
    %v2357 = vunpack.c.h.b16 %v2069
    %v2358 = vunpack.c.l.b16 %v2070
    %v2359 = vunpack.c.h.b16 %v2070
    %v2360 = vunpack.c.l.b16 %v2071
    %v2361 = vunpack.c.h.b16 %v2071
    %v2362 = vunpack.c.l.b16 %v2072
    %v2363 = vunpack.c.h.b16 %v2072
    %v2364 = vunpack.c.l.b16 %v2073
    %v2365 = vunpack.c.h.b16 %v2073
    %v2366 = vunpack.c.l.b16 %v2074
    %v2367 = vunpack.c.h.b16 %v2074
    %v2368 = vunpack.c.l.b16 %v2075
    %v2369 = vunpack.c.h.b16 %v2075
    %v2370 = vunpack.c.l.b16 %v2076
    %v2371 = vunpack.c.h.b16 %v2076
    %v2372 = vunpack.c.l.b16 %v2077
    %v2373 = vunpack.c.h.b16 %v2077
    %v2374 = vunpack.c.l.b16 %v2078
    %v2375 = vunpack.c.h.b16 %v2078
    %v2376 = vunpack.c.l.b16 %v2079
    %v2377 = vunpack.c.h.b16 %v2079
    %v2378 = vunpack.c.l.b16 %v2080
    %v2379 = vunpack.c.h.b16 %v2080
    %v2380 = vunpack.c.l.b16 %v2081
    %v2381 = vunpack.c.h.b16 %v2081
    %v2382 = vunpack.c.l.b16 %v2082
    %v2383 = vunpack.c.h.b16 %v2082
    %v2384 = vunpack.c.l.b16 %v2083
    %v2385 = vunpack.c.h.b16 %v2083
    %v2386 = vunpack.c.l.b16 %v2084
    %v2387 = vunpack.c.h.b16 %v2084
    %v2388 = vunpack.c.l.b16 %v2085
    %v2389 = vunpack.c.h.b16 %v2085
    %v2390 = vunpack.c.l.b16 %v2086
    %v2391 = vunpack.c.h.b16 %v2086
    %v2392 = vunpack.c.l.b16 %v2087
    %v2393 = vunpack.c.h.b16 %v2087
    %v2394 = vunpack.c.l.b16 %v2088
    %v2395 = vunpack.c.h.b16 %v2088
    %v2396 = vunpack.c.l.b16 %v2089
    %v2397 = vunpack.c.h.b16 %v2089
    %v2398 = vunpack.c.l.b16 %v2090
    %v2399 = vunpack.c.h.b16 %v2090
    %v2400 = vunpack.c.l.b16 %v2091
    %v2401 = vunpack.c.h.b16 %v2091
    %v2402 = vunpack.c.l.b16 %v2092
    %v2403 = vunpack.c.h.b16 %v2092
    %v2404 = vunpack.c.l.b16 %v2093
    %v2405 = vunpack.c.h.b16 %v2093
    %v2406 = vunpack.c.l.b16 %v2094
    %v2407 = vunpack.c.h.b16 %v2094
    %v2408 = vunpack.c.l.b16 %v2095
    %v2409 = vunpack.c.h.b16 %v2095
    %v2410 = vunpack.c.l.b16 %v2096
    %v2411 = vunpack.c.h.b16 %v2096
    %v2412 = vunpack.c.l.b16 %v2097
    %v2413 = vunpack.c.h.b16 %v2097
    %v2414 = vunpack.c.l.b16 %v2098
    %v2415 = vunpack.c.h.b16 %v2098
    %v2416 = vunpack.c.l.b16 %v2099
    %v2417 = vunpack.c.h.b16 %v2099
    %v2418 = vunpack.c.l.b16 %v2100
    %v2419 = vunpack.c.h.b16 %v2100
    %v2420 = vunpack.c.l.b16 %v2101
    %v2421 = vunpack.c.h.b16 %v2101
    %v2422 = vunpack.c.l.b16 %v2102
    %v2423 = vunpack.c.h.b16 %v2102
    %v2424 = vunpack.c.l.b16 %v2103
    %v2425 = vunpack.c.h.b16 %v2103
    %v2426 = vunpack.c.l.b16 %v2104
    %v2427 = vunpack.c.h.b16 %v2104
    %v2428 = vunpack.c.l.b16 %v2105
    %v2429 = vunpack.c.h.b16 %v2105
    %v2430 = vunpack.c.l.b16 %v2106
    %v2431 = vunpack.c.h.b16 %v2106
    %v2432 = vunpack.c.l.b16 %v2107
    %v2433 = vunpack.c.h.b16 %v2107
    %v2434 = vunpack.c.l.b16 %v2108
    %v2435 = vunpack.c.h.b16 %v2108
    %v2436 = vunpack.c.l.b16 %v2109
    %v2437 = vunpack.c.h.b16 %v2109
    %v2438 = vunpack.c.l.b16 %v2110
    %v2439 = vunpack.c.h.b16 %v2110
    %v2440 = vunpack.c.l.b16 %v2111
    %v2441 = vunpack.c.h.b16 %v2111
    %v2442 = vunpack.c.l.b16 %v2112
    %v2443 = vunpack.c.h.b16 %v2112
    %v2444 = vunpack.c.l.b16 %v2113
    %v2445 = vunpack.c.h.b16 %v2113
    %v2446 = vunpack.c.l.b16 %v2114
    %v2447 = vunpack.c.h.b16 %v2114
    %v2448 = vunpack.c.l.b16 %v2115
    %v2449 = vunpack.c.h.b16 %v2115
    %v2450 = vunpack.c.l.b16 %v2116
    %v2451 = vunpack.c.h.b16 %v2116
    %v2452 = vunpack.c.l.b16 %v2117
    %v2453 = vunpack.c.h.b16 %v2117
    %v2454 = vunpack.c.l.b16 %v2118
    %v2455 = vunpack.c.h.b16 %v2118
    %v2456 = vunpack.c.l.b16 %v2119
    %v2457 = vunpack.c.h.b16 %v2119
    %v2458 = vunpack.c.l.b16 %v2120
    %v2459 = vunpack.c.h.b16 %v2120
    %v2460 = vunpack.c.l.b16 %v2121
    %v2461 = vunpack.c.h.b16 %v2121
    %v2462 = vunpack.c.l.b16 %v2122
    %v2463 = vunpack.c.h.b16 %v2122
    %v2464 = vunpack.c.l.b16 %v2123
    %v2465 = vunpack.c.h.b16 %v2123
    %v2466 = vunpack.c.l.b16 %v2124
    %v2467 = vunpack.c.h.b16 %v2124
    %v2468 = vunpack.c.l.b16 %v2125
    %v2469 = vunpack.c.h.b16 %v2125
    %v2470 = vunpack.c.l.b16 %v2126
    %v2471 = vunpack.c.h.b16 %v2126
    %v2472 = vunpack.c.l.b16 %v2127
    %v2473 = vunpack.c.h.b16 %v2127
    %v2474 = vunpack.c.l.b16 %v2128
    %v2475 = vunpack.c.h.b16 %v2128
    %v2476 = vunpack.c.l.b16 %v2129
    %v2477 = vunpack.c.h.b16 %v2129
    %v2478 = vunpack.c.l.b16 %v2130
    %v2479 = vunpack.c.h.b16 %v2130
    %v2480 = vunpack.c.l.b16 %v2131
    %v2481 = vunpack.c.h.b16 %v2131
    %v2482 = vunpack.c.l.b16 %v2132
    %v2483 = vunpack.c.h.b16 %v2132
    %v2484 = vunpack.c.l.b16 %v2133
    %v2485 = vunpack.c.h.b16 %v2133
    %v2486 = vunpack.c.l.b16 %v2134
    %v2487 = vunpack.c.h.b16 %v2134
    %v2488 = vunpack.c.l.b16 %v2135
    %v2489 = vunpack.c.h.b16 %v2135
    %v2490 = vunpack.c.l.b16 %v2136
    %v2491 = vunpack.c.h.b16 %v2136
    %v2492 = vunpack.c.l.b16 %v2137
    %v2493 = vunpack.c.h.b16 %v2137
    %v2494 = vunpack.c.l.b16 %v2138
    %v2495 = vunpack.c.h.b16 %v2138
    %v2496 = vunpack.c.l.b16 %v2139
    %v2497 = vunpack.c.h.b16 %v2139
    %v2498 = vunpack.c.l.b16 %v2140
    %v2499 = vunpack.c.h.b16 %v2140
    %v2500 = vunpack.c.l.b16 %v2141
    %v2501 = vunpack.c.h.b16 %v2141
    %v2502 = vunpack.c.l.b16 %v2142
    %v2503 = vunpack.c.h.b16 %v2142
    %v2504 = vunpack.c.l.b16 %v2143
    %v2505 = vunpack.c.h.b16 %v2143
    %v2506 = vunpack.c.l.b16 %v2144
    %v2507 = vunpack.c.h.b16 %v2144
    %v2508 = vunpack.c.l.b16 %v2145
    %v2509 = vunpack.c.h.b16 %v2145
    %v2510 = vunpack.c.l.b16 %v2146
    %v2511 = vunpack.c.h.b16 %v2146
    %v2512 = vunpack.c.l.b16 %v2147
    %v2513 = vunpack.c.h.b16 %v2147
    %v2514 = vunpack.c.l.b16 %v2148
    %v2515 = vunpack.c.h.b16 %v2148
    %v2516 = vunpack.c.l.b16 %v2149
    %v2517 = vunpack.c.h.b16 %v2149
    %v2518 = vunpack.c.l.b16 %v2150
    %v2519 = vunpack.c.h.b16 %v2150
    %v2520 = vunpack.c.l.b16 %v2151
    %v2521 = vunpack.c.h.b16 %v2151
    %v2522 = vunpack.c.l.b16 %v2152
    %v2523 = vunpack.c.h.b16 %v2152
    %v2524 = vunpack.c.l.b16 %v2153
    %v2525 = vunpack.c.h.b16 %v2153
    %v2526 = vunpack.c.l.b16 %v2154
    %v2527 = vunpack.c.h.b16 %v2154
    %v2528 = vunpack.c.l.b16 %v2155
    %v2529 = vunpack.c.h.b16 %v2155
    %v2530 = vunpack.c.l.b16 %v2156
    %v2531 = vunpack.c.h.b16 %v2156
    %v2532 = vunpack.c.l.b16 %v2157
    %v2533 = vunpack.c.h.b16 %v2157
    %v2534 = vunpack.c.l.b16 %v2158
    %v2535 = vunpack.c.h.b16 %v2158
    %v2536 = vunpack.c.l.b16 %v2159
    %v2537 = vunpack.c.h.b16 %v2159
    %v2538 = vunpack.c.l.b16 %v2160
    %v2539 = vunpack.c.h.b16 %v2160
    %v2540 = vunpack.c.l.b16 %v2161
    %v2541 = vunpack.c.h.b16 %v2161
    %v2542 = vunpack.c.l.b16 %v2162
    %v2543 = vunpack.c.h.b16 %v2162
    %v2544 = vunpack.c.l.b16 %v2163
    %v2545 = vunpack.c.h.b16 %v2163
    %v2546 = vunpack.c.l.b16 %v2164
    %v2547 = vunpack.c.h.b16 %v2164
    %v2548 = vunpack.c.l.b16 %v2165
    %v2549 = vunpack.c.h.b16 %v2165
    %v2550 = vunpack.c.l.b16 %v2166
    %v2551 = vunpack.c.h.b16 %v2166
    %v2552 = vunpack.c.l.b16 %v2167
    %v2553 = vunpack.c.h.b16 %v2167
    %v2554 = vunpack.c.l.b16 %v2168
    %v2555 = vunpack.c.h.b16 %v2168
    %v2556 = vunpack.c.l.b16 %v2169
    %v2557 = vunpack.c.h.b16 %v2169
    %v2558 = vunpack.c.l.b16 %v2170
    %v2559 = vunpack.c.h.b16 %v2170
    %v2560 = vunpack.c.l.b16 %v2171
    %v2561 = vunpack.c.h.b16 %v2171
    %v2562 = vunpack.c.l.b16 %v2172
    %v2563 = vunpack.c.h.b16 %v2172
    %v2564 = vunpack.c.l.b16 %v2173
    %v2565 = vunpack.c.h.b16 %v2173
    %v2566 = vunpack.c.l.b16 %v2174
    %v2567 = vunpack.c.h.b16 %v2174
    %v2568 = vunpack.c.l.b16 %v2175
    %v2569 = vunpack.c.h.b16 %v2175
    %v2570 = vunpack.c.l.b16 %v2176
    %v2571 = vunpack.c.h.b16 %v2176
    %v2572 = vunpack.c.l.b16 %v2177
    %v2573 = vunpack.c.h.b16 %v2177
    %v2574 = vunpack.c.l.b16 %v2178
    %v2575 = vunpack.c.h.b16 %v2178
    %v2576 = vunpack.c.l.b16 %v2179
    %v2577 = vunpack.c.h.b16 %v2179
    %v2578 = vunpack.c.l.b16 %v2180
    %v2579 = vunpack.c.h.b16 %v2180
    %v2580 = vunpack.c.l.b16 %v2181
    %v2581 = vunpack.c.h.b16 %v2181
    %v2582 = vunpack.c.l.b16 %v2182
    %v2583 = vunpack.c.h.b16 %v2182
    %v2584 = vunpack.c.l.b16 %v2183
    %v2585 = vunpack.c.h.b16 %v2183
    %v2586 = vunpack.c.l.b16 %v2184
    %v2587 = vunpack.c.h.b16 %v2184
    %v2588 = vunpack.c.l.b16 %v2185
    %v2589 = vunpack.c.h.b16 %v2185
    %v2590 = vunpack.c.l.b16 %v2186
    %v2591 = vunpack.c.h.b16 %v2186
    %v2592 = vunpack.c.l.b16 %v2187
    %v2593 = vunpack.c.h.b16 %v2187
    %v2594 = vpack.c.b16 %v2342, %v2338
    %v2595 = vpack.c.b16 %v2343, %v2339
    %v2596 = vpack.c.b16 %v2344, %v2340
    %v2597 = vpack.c.b16 %v2345, %v2341
    %v2598 = vpack.c.b16 %v2350, %v2346
    %v2599 = vpack.c.b16 %v2351, %v2347
    %v2600 = vpack.c.b16 %v2352, %v2348
    %v2601 = vpack.c.b16 %v2353, %v2349
    %v2602 = vpack.c.b16 %v2358, %v2354
    %v2603 = vpack.c.b16 %v2359, %v2355
    %v2604 = vpack.c.b16 %v2360, %v2356
    %v2605 = vpack.c.b16 %v2361, %v2357
    %v2606 = vpack.c.b16 %v2366, %v2362
    %v2607 = vpack.c.b16 %v2367, %v2363
    %v2608 = vpack.c.b16 %v2368, %v2364
    %v2609 = vpack.c.b16 %v2369, %v2365
    %v2610 = vpack.c.b16 %v2374, %v2370
    %v2611 = vpack.c.b16 %v2375, %v2371
    %v2612 = vpack.c.b16 %v2376, %v2372
    %v2613 = vpack.c.b16 %v2377, %v2373
    %v2614 = vpack.c.b16 %v2382, %v2378
    %v2615 = vpack.c.b16 %v2383, %v2379
    %v2616 = vpack.c.b16 %v2384, %v2380
    %v2617 = vpack.c.b16 %v2385, %v2381
    %v2618 = vpack.c.b16 %v2390, %v2386
    %v2619 = vpack.c.b16 %v2391, %v2387
    %v2620 = vpack.c.b16 %v2392, %v2388
    %v2621 = vpack.c.b16 %v2393, %v2389
    %v2622 = vpack.c.b16 %v2398, %v2394
    %v2623 = vpack.c.b16 %v2399, %v2395
    %v2624 = vpack.c.b16 %v2400, %v2396
    %v2625 = vpack.c.b16 %v2401, %v2397
    %v2626 = vpack.c.b16 %v2406, %v2402
    %v2627 = vpack.c.b16 %v2407, %v2403
    %v2628 = vpack.c.b16 %v2408, %v2404
    %v2629 = vpack.c.b16 %v2409, %v2405
    %v2630 = vpack.c.b16 %v2414, %v2410
    %v2631 = vpack.c.b16 %v2415, %v2411
    %v2632 = vpack.c.b16 %v2416, %v2412
    %v2633 = vpack.c.b16 %v2417, %v2413
    %v2634 = vpack.c.b16 %v2422, %v2418
    %v2635 = vpack.c.b16 %v2423, %v2419
    %v2636 = vpack.c.b16 %v2424, %v2420
    %v2637 = vpack.c.b16 %v2425, %v2421
    %v2638 = vpack.c.b16 %v2430, %v2426
    %v2639 = vpack.c.b16 %v2431, %v2427
    %v2640 = vpack.c.b16 %v2432, %v2428
    %v2641 = vpack.c.b16 %v2433, %v2429
    %v2642 = vpack.c.b16 %v2438, %v2434
    %v2643 = vpack.c.b16 %v2439, %v2435
    %v2644 = vpack.c.b16 %v2440, %v2436
    %v2645 = vpack.c.b16 %v2441, %v2437
    %v2646 = vpack.c.b16 %v2446, %v2442
    %v2647 = vpack.c.b16 %v2447, %v2443
    %v2648 = vpack.c.b16 %v2448, %v2444
    %v2649 = vpack.c.b16 %v2449, %v2445
    %v2650 = vpack.c.b16 %v2454, %v2450
    %v2651 = vpack.c.b16 %v2455, %v2451
    %v2652 = vpack.c.b16 %v2456, %v2452
    %v2653 = vpack.c.b16 %v2457, %v2453
    %v2654 = vpack.c.b16 %v2462, %v2458
    %v2655 = vpack.c.b16 %v2463, %v2459
    %v2656 = vpack.c.b16 %v2464, %v2460
    %v2657 = vpack.c.b16 %v2465, %v2461
    %v2658 = vpack.c.b16 %v2470, %v2466
    %v2659 = vpack.c.b16 %v2471, %v2467
    %v2660 = vpack.c.b16 %v2472, %v2468
    %v2661 = vpack.c.b16 %v2473, %v2469
    %v2662 = vpack.c.b16 %v2478, %v2474
    %v2663 = vpack.c.b16 %v2479, %v2475
    %v2664 = vpack.c.b16 %v2480, %v2476
    %v2665 = vpack.c.b16 %v2481, %v2477
    %v2666 = vpack.c.b16 %v2486, %v2482
    %v2667 = vpack.c.b16 %v2487, %v2483
    %v2668 = vpack.c.b16 %v2488, %v2484
    %v2669 = vpack.c.b16 %v2489, %v2485
    %v2670 = vpack.c.b16 %v2494, %v2490
    %v2671 = vpack.c.b16 %v2495, %v2491
    %v2672 = vpack.c.b16 %v2496, %v2492
    %v2673 = vpack.c.b16 %v2497, %v2493
    %v2674 = vpack.c.b16 %v2502, %v2498
    %v2675 = vpack.c.b16 %v2503, %v2499
    %v2676 = vpack.c.b16 %v2504, %v2500
    %v2677 = vpack.c.b16 %v2505, %v2501
    %v2678 = vpack.c.b16 %v2510, %v2506
    %v2679 = vpack.c.b16 %v2511, %v2507
    %v2680 = vpack.c.b16 %v2512, %v2508
    %v2681 = vpack.c.b16 %v2513, %v2509
    %v2682 = vpack.c.b16 %v2518, %v2514
    %v2683 = vpack.c.b16 %v2519, %v2515
    %v2684 = vpack.c.b16 %v2520, %v2516
    %v2685 = vpack.c.b16 %v2521, %v2517
    %v2686 = vpack.c.b16 %v2526, %v2522
    %v2687 = vpack.c.b16 %v2527, %v2523
    %v2688 = vpack.c.b16 %v2528, %v2524
    %v2689 = vpack.c.b16 %v2529, %v2525
    %v2690 = vpack.c.b16 %v2534, %v2530
    %v2691 = vpack.c.b16 %v2535, %v2531
    %v2692 = vpack.c.b16 %v2536, %v2532
    %v2693 = vpack.c.b16 %v2537, %v2533
    %v2694 = vpack.c.b16 %v2542, %v2538
    %v2695 = vpack.c.b16 %v2543, %v2539
    %v2696 = vpack.c.b16 %v2544, %v2540
    %v2697 = vpack.c.b16 %v2545, %v2541
    %v2698 = vpack.c.b16 %v2550, %v2546
    %v2699 = vpack.c.b16 %v2551, %v2547
    %v2700 = vpack.c.b16 %v2552, %v2548
    %v2701 = vpack.c.b16 %v2553, %v2549
    %v2702 = vpack.c.b16 %v2558, %v2554
    %v2703 = vpack.c.b16 %v2559, %v2555
    %v2704 = vpack.c.b16 %v2560, %v2556
    %v2705 = vpack.c.b16 %v2561, %v2557
    %v2706 = vpack.c.b16 %v2566, %v2562
    %v2707 = vpack.c.b16 %v2567, %v2563
    %v2708 = vpack.c.b16 %v2568, %v2564
    %v2709 = vpack.c.b16 %v2569, %v2565
    %v2710 = vpack.c.b16 %v2574, %v2570
    %v2711 = vpack.c.b16 %v2575, %v2571
    %v2712 = vpack.c.b16 %v2576, %v2572
    %v2713 = vpack.c.b16 %v2577, %v2573
    %v2714 = vpack.c.b16 %v2582, %v2578
    %v2715 = vpack.c.b16 %v2583, %v2579
    %v2716 = vpack.c.b16 %v2584, %v2580
    %v2717 = vpack.c.b16 %v2585, %v2581
    %v2718 = vpack.c.b16 %v2590, %v2586
    %v2719 = vpack.c.b16 %v2591, %v2587
    %v2720 = vpack.c.b16 %v2592, %v2588
    %v2721 = vpack.c.b16 %v2593, %v2589
    %2850 = vmatprep.subr.bf16.mxu0 %v2595
    %2851 = vmatpush1.bf16.msra.mxu0 %v2594
    %2852 = vmatprep.subr.bf16.mxu0 %v2599
    %2853 = vmatpush1.bf16.msra.mxu0 %v2598
    %2854 = vmatprep.subr.bf16.mxu0 %v2603
    %2855 = vmatpush1.bf16.msra.mxu0 %v2602
    %2856 = vmatprep.subr.bf16.mxu0 %v2607
    %2857 = vmatpush1.bf16.msra.mxu0 %v2606
    %2858 = vmatprep.subr.bf16.mxu0 %v2611
    %2859 = vmatpush1.bf16.msra.mxu0 %v2610
    %2860 = vmatprep.subr.bf16.mxu0 %v2615
    %2861 = vmatpush1.bf16.msra.mxu0 %v2614
    %2862 = vmatprep.subr.bf16.mxu0 %v2619
    %2863 = vmatpush1.bf16.msra.mxu0 %v2618
    %2864 = vmatprep.subr.bf16.mxu0 %v2623
    %2865 = vmatpush1.bf16.msra.mxu0 %v2622
    %2866 = vmatprep.subr.bf16.mxu0 %v2627
    %2867 = vmatpush1.bf16.msra.mxu0 %v2626
    %2868 = vmatprep.subr.bf16.mxu0 %v2631
    %2869 = vmatpush1.bf16.msra.mxu0 %v2630
    %2870 = vmatprep.subr.bf16.mxu0 %v2635
    %2871 = vmatpush1.bf16.msra.mxu0 %v2634
    %2872 = vmatprep.subr.bf16.mxu0 %v2639
    %2873 = vmatpush1.bf16.msra.mxu0 %v2638
    %2874 = vmatprep.subr.bf16.mxu0 %v2643
    %2875 = vmatpush1.bf16.msra.mxu0 %v2642
    %2876 = vmatprep.subr.bf16.mxu0 %v2647
    %2877 = vmatpush1.bf16.msra.mxu0 %v2646
    %2878 = vmatprep.subr.bf16.mxu0 %v2651
    %2879 = vmatpush1.bf16.msra.mxu0 %v2650
    %2880 = vmatprep.subr.bf16.mxu0 %v2655
    %2881 = vmatpush1.bf16.msra.mxu0 %v2654
    %2882 = vmatprep.mubr.bf16.mxu0 %v2057
    %2883 = vmatmul.mubr.bf16.gmra.mrb[0].mxu0 %v2056
    %v2884 = vpop.f32.mrb[0].mxu0
    %v2885 = vadd.f32 %v2193, %v2884
    %v2886 = vpop.f32.mrb[0].mxu0
    %v2887 = vadd.f32 %v2197, %v2886
    %v2888 = vpop.f32.mrb[0].mxu0
    %v2889 = vpop.f32.mrb[0].mxu0
    %2890 = vdwg.mxu0
    %2891 = vmatprep.subr.bf16.mxu0 %v2659
    %2892 = vmatpush1.bf16.msra.mxu0 %v2658
    %2893 = vmatprep.subr.bf16.mxu0 %v2663
    %2894 = vmatpush1.bf16.msra.mxu0 %v2662
    %2895 = vmatprep.subr.bf16.mxu0 %v2667
    %2896 = vmatpush1.bf16.msra.mxu0 %v2666
    %2897 = vmatprep.subr.bf16.mxu0 %v2671
    %2898 = vmatpush1.bf16.msra.mxu0 %v2670
    %2899 = vmatprep.subr.bf16.mxu0 %v2675
    %2900 = vmatpush1.bf16.msra.mxu0 %v2674
    %2901 = vmatprep.subr.bf16.mxu0 %v2679
    %2902 = vmatpush1.bf16.msra.mxu0 %v2678
    %2903 = vmatprep.subr.bf16.mxu0 %v2683
    %2904 = vmatpush1.bf16.msra.mxu0 %v2682
    %2905 = vmatprep.subr.bf16.mxu0 %v2687
    %2906 = vmatpush1.bf16.msra.mxu0 %v2686
    %2907 = vmatprep.subr.bf16.mxu0 %v2691
    %2908 = vmatpush1.bf16.msra.mxu0 %v2690
    %2909 = vmatprep.subr.bf16.mxu0 %v2695
    %2910 = vmatpush1.bf16.msra.mxu0 %v2694
    %2911 = vmatprep.subr.bf16.mxu0 %v2699
    %2912 = vmatpush1.bf16.msra.mxu0 %v2698
    %2913 = vmatprep.subr.bf16.mxu0 %v2703
    %2914 = vmatpush1.bf16.msra.mxu0 %v2702
    %2915 = vmatprep.subr.bf16.mxu0 %v2707
    %2916 = vmatpush1.bf16.msra.mxu0 %v2706
    %2917 = vmatprep.subr.bf16.mxu0 %v2711
    %2918 = vmatpush1.bf16.msra.mxu0 %v2710
    %2919 = vmatprep.subr.bf16.mxu0 %v2715
    %2920 = vmatpush1.bf16.msra.mxu0 %v2714
    %2921 = vmatprep.subr.bf16.mxu0 %v2719
    %2922 = vmatpush1.bf16.msra.mxu0 %v2718
    %2923 = vmatprep.mubr.bf16.mxu0 %v2059
    %2924 = vmatmul.mubr.bf16.gmra.mrb[0].mxu0 %v2058
    %v2925 = vpop.f32.mrb[0].mxu0
    %v2926 = vadd.f32 %v2885, %v2925
    %v2927 = vpop.f32.mrb[0].mxu0
    %v2928 = vadd.f32 %v2887, %v2927
    %v2929 = vpop.f32.mrb[0].mxu0
    %v2930 = vpop.f32.mrb[0].mxu0
    %2931 = vdwg.mxu0
    %2932 = vmatprep.subr.bf16.mxu0 %v2597
    %2933 = vmatpush1.bf16.msra.mxu0 %v2596
    %2934 = vmatprep.subr.bf16.mxu0 %v2601
    %2935 = vmatpush1.bf16.msra.mxu0 %v2600
    %2936 = vmatprep.subr.bf16.mxu0 %v2605
    %2937 = vmatpush1.bf16.msra.mxu0 %v2604
    %2938 = vmatprep.subr.bf16.mxu0 %v2609
    %2939 = vmatpush1.bf16.msra.mxu0 %v2608
    %2940 = vmatprep.subr.bf16.mxu0 %v2613
    %2941 = vmatpush1.bf16.msra.mxu0 %v2612
    %2942 = vmatprep.subr.bf16.mxu0 %v2617
    %2943 = vmatpush1.bf16.msra.mxu0 %v2616
    %2944 = vmatprep.subr.bf16.mxu0 %v2621
    %2945 = vmatpush1.bf16.msra.mxu0 %v2620
    %2946 = vmatprep.subr.bf16.mxu0 %v2625
    %2947 = vmatpush1.bf16.msra.mxu0 %v2624
    %2948 = vmatprep.subr.bf16.mxu0 %v2629
    %2949 = vmatpush1.bf16.msra.mxu0 %v2628
    %2950 = vmatprep.subr.bf16.mxu0 %v2633
    %2951 = vmatpush1.bf16.msra.mxu0 %v2632
    %2952 = vmatprep.subr.bf16.mxu0 %v2637
    %2953 = vmatpush1.bf16.msra.mxu0 %v2636
    %2954 = vmatprep.subr.bf16.mxu0 %v2641
    %2955 = vmatpush1.bf16.msra.mxu0 %v2640
    %2956 = vmatprep.subr.bf16.mxu0 %v2645
    %2957 = vmatpush1.bf16.msra.mxu0 %v2644
    %2958 = vmatprep.subr.bf16.mxu0 %v2649
    %2959 = vmatpush1.bf16.msra.mxu0 %v2648
    %2960 = vmatprep.subr.bf16.mxu0 %v2653
    %2961 = vmatpush1.bf16.msra.mxu0 %v2652
    %2962 = vmatprep.subr.bf16.mxu0 %v2657
    %2963 = vmatpush1.bf16.msra.mxu0 %v2656
    %2964 = vmatprep.mubr.bf16.mxu0 %v2057
    %2965 = vmatmul.mubr.bf16.gmra.mrb[0].mxu0 %v2056
    %v2966 = vpop.f32.mrb[0].mxu0
    %v2967 = vadd.f32 %v2201, %v2966
    %v2968 = vpop.f32.mrb[0].mxu0
    %v2969 = vadd.f32 %v2205, %v2968
    %v2970 = vpop.f32.mrb[0].mxu0
    %v2971 = vpop.f32.mrb[0].mxu0
    %2972 = vdwg.mxu0
    %2973 = vmatprep.subr.bf16.mxu0 %v2661
    %2974 = vmatpush1.bf16.msra.mxu0 %v2660
    %2975 = vmatprep.subr.bf16.mxu0 %v2665
    %2976 = vmatpush1.bf16.msra.mxu0 %v2664
    %2977 = vmatprep.subr.bf16.mxu0 %v2669
    %2978 = vmatpush1.bf16.msra.mxu0 %v2668
    %2979 = vmatprep.subr.bf16.mxu0 %v2673
    %2980 = vmatpush1.bf16.msra.mxu0 %v2672
    %2981 = vmatprep.subr.bf16.mxu0 %v2677
    %2982 = vmatpush1.bf16.msra.mxu0 %v2676
    %2983 = vmatprep.subr.bf16.mxu0 %v2681
    %2984 = vmatpush1.bf16.msra.mxu0 %v2680
    %2985 = vmatprep.subr.bf16.mxu0 %v2685
    %2986 = vmatpush1.bf16.msra.mxu0 %v2684
    %2987 = vmatprep.subr.bf16.mxu0 %v2689
    %2988 = vmatpush1.bf16.msra.mxu0 %v2688
    %2989 = vmatprep.subr.bf16.mxu0 %v2693
    %2990 = vmatpush1.bf16.msra.mxu0 %v2692
    %2991 = vmatprep.subr.bf16.mxu0 %v2697
    %2992 = vmatpush1.bf16.msra.mxu0 %v2696
    %2993 = vmatprep.subr.bf16.mxu0 %v2701
    %2994 = vmatpush1.bf16.msra.mxu0 %v2700
    %2995 = vmatprep.subr.bf16.mxu0 %v2705
    %2996 = vmatpush1.bf16.msra.mxu0 %v2704
    %2997 = vmatprep.subr.bf16.mxu0 %v2709
    %2998 = vmatpush1.bf16.msra.mxu0 %v2708
    %2999 = vmatprep.subr.bf16.mxu0 %v2713
    %3000 = vmatpush1.bf16.msra.mxu0 %v2712
    %3001 = vmatprep.subr.bf16.mxu0 %v2717
    %3002 = vmatpush1.bf16.msra.mxu0 %v2716
    %3003 = vmatprep.subr.bf16.mxu0 %v2721
    %3004 = vmatpush1.bf16.msra.mxu0 %v2720
    %3005 = vmatprep.mubr.bf16.mxu0 %v2059
    %3006 = vmatmul.mubr.bf16.gmra.mrb[0].mxu0 %v2058
    %v3007 = vpop.f32.mrb[0].mxu0
    %v3008 = vadd.f32 %v2967, %v3007
    %v3009 = vpop.f32.mrb[0].mxu0
    %v3010 = vadd.f32 %v2969, %v3009
    %v3011 = vpop.f32.mrb[0].mxu0
    %v3012 = vpop.f32.mrb[0].mxu0
    %3013 = vdwg.mxu0
    %v3014 = vmax.f32 %v2926, 0.0
    %v3015 = vmax.f32 %v2928, 0.0
    %v3016 = vmax.f32 %v3008, 0.0
    %v3017 = vmax.f32 %v3010, 0.0
    %v3018 = vpack.c.bf16 %v3014, %v3014
    %v3019 = vpack.c.bf16 %v3015, %v3015
    %v3020 = vpack.c.bf16 %v3016, %v3016
    %v3021 = vpack.c.bf16 %v3017, %v3017
    %v3022 = vld [vmem:[#allocation6] sm:$0xff]
    %v3023 = vld [vmem:[#allocation6 + $0x8] sm:$0xff]
    %v3024 = vld [vmem:[#allocation6 + $0x10] sm:$0xff]
    %v3025 = vld [vmem:[#allocation6 + $0x18] sm:$0xff]
    %v3026 = vld [vmem:[#allocation6 + $0x20] sm:$0xff]
    %v3027 = vld [vmem:[#allocation6 + $0x28] sm:$0xff]
    %v3028 = vld [vmem:[#allocation6 + $0x30] sm:$0xff]
    %v3029 = vld [vmem:[#allocation6 + $0x38] sm:$0xff]
    %v3030 = vld [vmem:[#allocation6 + $0x40] sm:$0xff]
    %v3031 = vld [vmem:[#allocation6 + $0x48] sm:$0xff]
    %v3032 = vld [vmem:[#allocation6 + $0x50] sm:$0xff]
    %v3033 = vld [vmem:[#allocation6 + $0x58] sm:$0xff]
    %v3034 = vld [vmem:[#allocation6 + $0x60] sm:$0xff]
    %v3035 = vld [vmem:[#allocation6 + $0x68] sm:$0xff]
    %v3036 = vld [vmem:[#allocation6 + $0x70] sm:$0xff]
    %v3037 = vld [vmem:[#allocation6 + $0x78] sm:$0xff]
    %v3038 = vld [vmem:[#allocation6 + $0x80] sm:$0xff]
    %v3039 = vld [vmem:[#allocation6 + $0x88] sm:$0xff]
    %v3040 = vld [vmem:[#allocation6 + $0x90] sm:$0xff]
    %v3041 = vld [vmem:[#allocation6 + $0x98] sm:$0xff]
    %v3042 = vld [vmem:[#allocation6 + $0xa0] sm:$0xff]
    %v3043 = vld [vmem:[#allocation6 + $0xa8] sm:$0xff]
    %v3044 = vld [vmem:[#allocation6 + $0xb0] sm:$0xff]
    %v3045 = vld [vmem:[#allocation6 + $0xb8] sm:$0xff]
    %v3046 = vld [vmem:[#allocation6 + $0xc0] sm:$0xff]
    %v3047 = vld [vmem:[#allocation6 + $0xc8] sm:$0xff]
    %v3048 = vld [vmem:[#allocation6 + $0xd0] sm:$0xff]
    %v3049 = vld [vmem:[#allocation6 + $0xd8] sm:$0xff]
    %v3050 = vld [vmem:[#allocation6 + $0xe0] sm:$0xff]
    %v3051 = vld [vmem:[#allocation6 + $0xe8] sm:$0xff]
    %v3052 = vld [vmem:[#allocation6 + $0xf0] sm:$0xff]
    %v3053 = vld [vmem:[#allocation6 + $0xf8] sm:$0xff]
    %v3054 = vld [vmem:[#allocation6 + $0x100] sm:$0xff]
    %v3055 = vld [vmem:[#allocation6 + $0x108] sm:$0xff]
    %v3056 = vld [vmem:[#allocation6 + $0x110] sm:$0xff]
    %v3057 = vld [vmem:[#allocation6 + $0x118] sm:$0xff]
    %v3058 = vld [vmem:[#allocation6 + $0x120] sm:$0xff]
    %v3059 = vld [vmem:[#allocation6 + $0x128] sm:$0xff]
    %v3060 = vld [vmem:[#allocation6 + $0x130] sm:$0xff]
    %v3061 = vld [vmem:[#allocation6 + $0x138] sm:$0xff]
    %v3062 = vld [vmem:[#allocation6 + $0x140] sm:$0xff]
    %v3063 = vld [vmem:[#allocation6 + $0x148] sm:$0xff]
    %v3064 = vld [vmem:[#allocation6 + $0x150] sm:$0xff]
    %v3065 = vld [vmem:[#allocation6 + $0x158] sm:$0xff]
    %v3066 = vld [vmem:[#allocation6 + $0x160] sm:$0xff]
    %v3067 = vld [vmem:[#allocation6 + $0x168] sm:$0xff]
    %v3068 = vld [vmem:[#allocation6 + $0x170] sm:$0xff]
    %v3069 = vld [vmem:[#allocation6 + $0x178] sm:$0xff]
    %v3070 = vld [vmem:[#allocation6 + $0x180] sm:$0xff]
    %v3071 = vld [vmem:[#allocation6 + $0x188] sm:$0xff]
    %v3072 = vld [vmem:[#allocation6 + $0x190] sm:$0xff]
    %v3073 = vld [vmem:[#allocation6 + $0x198] sm:$0xff]
    %v3074 = vld [vmem:[#allocation6 + $0x1a0] sm:$0xff]
    %v3075 = vld [vmem:[#allocation6 + $0x1a8] sm:$0xff]
    %v3076 = vld [vmem:[#allocation6 + $0x1b0] sm:$0xff]
    %v3077 = vld [vmem:[#allocation6 + $0x1b8] sm:$0xff]
    %v3078 = vld [vmem:[#allocation6 + $0x1c0] sm:$0xff]
    %v3079 = vld [vmem:[#allocation6 + $0x1c8] sm:$0xff]
    %v3080 = vld [vmem:[#allocation6 + $0x1d0] sm:$0xff]
    %v3081 = vld [vmem:[#allocation6 + $0x1d8] sm:$0xff]
    %v3082 = vld [vmem:[#allocation6 + $0x1e0] sm:$0xff]
    %v3083 = vld [vmem:[#allocation6 + $0x1e8] sm:$0xff]
    %v3084 = vld [vmem:[#allocation6 + $0x1f0] sm:$0xff]
    %v3085 = vld [vmem:[#allocation6 + $0x1f8] sm:$0xff]
    %v3086 = vld [vmem:[%s7] sm:$0x3]
    %v3088 = vlaneseq
    %v3089 = vshrl.u32 %v3088, 7
    %v3090 = vsub.s32 0, %v3089
    %v3091 = vrot.slane %v3086, %v3090
    %v3092 = vlaneseq
    %v3093 = vshrl.u32 %v3092, 7
    %v3094 = vsub.s32 1, %v3093
    %v3095 = vrot.slane %v3086, %v3094
    %v3162 = vunpack.c.l.b16 %v3022
    %v3163 = vunpack.c.h.b16 %v3022
    %v3164 = vunpack.c.l.b16 %v3023
    %v3165 = vunpack.c.h.b16 %v3023
    %v3166 = vunpack.c.l.b16 %v3024
    %v3167 = vunpack.c.h.b16 %v3024
    %v3168 = vunpack.c.l.b16 %v3025
    %v3169 = vunpack.c.h.b16 %v3025
    %v3170 = vunpack.c.l.b16 %v3026
    %v3171 = vunpack.c.h.b16 %v3026
    %v3172 = vunpack.c.l.b16 %v3027
    %v3173 = vunpack.c.h.b16 %v3027
    %v3174 = vunpack.c.l.b16 %v3028
    %v3175 = vunpack.c.h.b16 %v3028
    %v3176 = vunpack.c.l.b16 %v3029
    %v3177 = vunpack.c.h.b16 %v3029
    %v3178 = vunpack.c.l.b16 %v3030
    %v3179 = vunpack.c.h.b16 %v3030
    %v3180 = vunpack.c.l.b16 %v3031
    %v3181 = vunpack.c.h.b16 %v3031
    %v3182 = vunpack.c.l.b16 %v3032
    %v3183 = vunpack.c.h.b16 %v3032
    %v3184 = vunpack.c.l.b16 %v3033
    %v3185 = vunpack.c.h.b16 %v3033
    %v3186 = vunpack.c.l.b16 %v3034
    %v3187 = vunpack.c.h.b16 %v3034
    %v3188 = vunpack.c.l.b16 %v3035
    %v3189 = vunpack.c.h.b16 %v3035
    %v3190 = vunpack.c.l.b16 %v3036
    %v3191 = vunpack.c.h.b16 %v3036
    %v3192 = vunpack.c.l.b16 %v3037
    %v3193 = vunpack.c.h.b16 %v3037
    %v3194 = vunpack.c.l.b16 %v3038
    %v3195 = vunpack.c.h.b16 %v3038
    %v3196 = vunpack.c.l.b16 %v3039
    %v3197 = vunpack.c.h.b16 %v3039
    %v3198 = vunpack.c.l.b16 %v3040
    %v3199 = vunpack.c.h.b16 %v3040
    %v3200 = vunpack.c.l.b16 %v3041
    %v3201 = vunpack.c.h.b16 %v3041
    %v3202 = vunpack.c.l.b16 %v3042
    %v3203 = vunpack.c.h.b16 %v3042
    %v3204 = vunpack.c.l.b16 %v3043
    %v3205 = vunpack.c.h.b16 %v3043
    %v3206 = vunpack.c.l.b16 %v3044
    %v3207 = vunpack.c.h.b16 %v3044
    %v3208 = vunpack.c.l.b16 %v3045
    %v3209 = vunpack.c.h.b16 %v3045
    %v3210 = vunpack.c.l.b16 %v3046
    %v3211 = vunpack.c.h.b16 %v3046
    %v3212 = vunpack.c.l.b16 %v3047
    %v3213 = vunpack.c.h.b16 %v3047
    %v3214 = vunpack.c.l.b16 %v3048
    %v3215 = vunpack.c.h.b16 %v3048
    %v3216 = vunpack.c.l.b16 %v3049
    %v3217 = vunpack.c.h.b16 %v3049
    %v3218 = vunpack.c.l.b16 %v3050
    %v3219 = vunpack.c.h.b16 %v3050
    %v3220 = vunpack.c.l.b16 %v3051
    %v3221 = vunpack.c.h.b16 %v3051
    %v3222 = vunpack.c.l.b16 %v3052
    %v3223 = vunpack.c.h.b16 %v3052
    %v3224 = vunpack.c.l.b16 %v3053
    %v3225 = vunpack.c.h.b16 %v3053
    %v3226 = vunpack.c.l.b16 %v3054
    %v3227 = vunpack.c.h.b16 %v3054
    %v3228 = vunpack.c.l.b16 %v3055
    %v3229 = vunpack.c.h.b16 %v3055
    %v3230 = vunpack.c.l.b16 %v3056
    %v3231 = vunpack.c.h.b16 %v3056
    %v3232 = vunpack.c.l.b16 %v3057
    %v3233 = vunpack.c.h.b16 %v3057
    %v3234 = vunpack.c.l.b16 %v3058
    %v3235 = vunpack.c.h.b16 %v3058
    %v3236 = vunpack.c.l.b16 %v3059
    %v3237 = vunpack.c.h.b16 %v3059
    %v3238 = vunpack.c.l.b16 %v3060
    %v3239 = vunpack.c.h.b16 %v3060
    %v3240 = vunpack.c.l.b16 %v3061
    %v3241 = vunpack.c.h.b16 %v3061
    %v3242 = vunpack.c.l.b16 %v3062
    %v3243 = vunpack.c.h.b16 %v3062
    %v3244 = vunpack.c.l.b16 %v3063
    %v3245 = vunpack.c.h.b16 %v3063
    %v3246 = vunpack.c.l.b16 %v3064
    %v3247 = vunpack.c.h.b16 %v3064
    %v3248 = vunpack.c.l.b16 %v3065
    %v3249 = vunpack.c.h.b16 %v3065
    %v3250 = vunpack.c.l.b16 %v3066
    %v3251 = vunpack.c.h.b16 %v3066
    %v3252 = vunpack.c.l.b16 %v3067
    %v3253 = vunpack.c.h.b16 %v3067
    %v3254 = vunpack.c.l.b16 %v3068
    %v3255 = vunpack.c.h.b16 %v3068
    %v3256 = vunpack.c.l.b16 %v3069
    %v3257 = vunpack.c.h.b16 %v3069
    %v3258 = vunpack.c.l.b16 %v3070
    %v3259 = vunpack.c.h.b16 %v3070
    %v3260 = vunpack.c.l.b16 %v3071
    %v3261 = vunpack.c.h.b16 %v3071
    %v3262 = vunpack.c.l.b16 %v3072
    %v3263 = vunpack.c.h.b16 %v3072
    %v3264 = vunpack.c.l.b16 %v3073
    %v3265 = vunpack.c.h.b16 %v3073
    %v3266 = vunpack.c.l.b16 %v3074
    %v3267 = vunpack.c.h.b16 %v3074
    %v3268 = vunpack.c.l.b16 %v3075
    %v3269 = vunpack.c.h.b16 %v3075
    %v3270 = vunpack.c.l.b16 %v3076
    %v3271 = vunpack.c.h.b16 %v3076
    %v3272 = vunpack.c.l.b16 %v3077
    %v3273 = vunpack.c.h.b16 %v3077
    %v3274 = vunpack.c.l.b16 %v3078
    %v3275 = vunpack.c.h.b16 %v3078
    %v3276 = vunpack.c.l.b16 %v3079
    %v3277 = vunpack.c.h.b16 %v3079
    %v3278 = vunpack.c.l.b16 %v3080
    %v3279 = vunpack.c.h.b16 %v3080
    %v3280 = vunpack.c.l.b16 %v3081
    %v3281 = vunpack.c.h.b16 %v3081
    %v3282 = vunpack.c.l.b16 %v3082
    %v3283 = vunpack.c.h.b16 %v3082
    %v3284 = vunpack.c.l.b16 %v3083
    %v3285 = vunpack.c.h.b16 %v3083
    %v3286 = vunpack.c.l.b16 %v3084
    %v3287 = vunpack.c.h.b16 %v3084
    %v3288 = vunpack.c.l.b16 %v3085
    %v3289 = vunpack.c.h.b16 %v3085
    %v3290 = vpack.c.b16 %v3164, %v3162
    %v3291 = vpack.c.b16 %v3165, %v3163
    %v3292 = vpack.c.b16 %v3168, %v3166
    %v3293 = vpack.c.b16 %v3169, %v3167
    %v3294 = vpack.c.b16 %v3172, %v3170
    %v3295 = vpack.c.b16 %v3173, %v3171
    %v3296 = vpack.c.b16 %v3176, %v3174
    %v3297 = vpack.c.b16 %v3177, %v3175
    %v3298 = vpack.c.b16 %v3180, %v3178
    %v3299 = vpack.c.b16 %v3181, %v3179
    %v3300 = vpack.c.b16 %v3184, %v3182
    %v3301 = vpack.c.b16 %v3185, %v3183
    %v3302 = vpack.c.b16 %v3188, %v3186
    %v3303 = vpack.c.b16 %v3189, %v3187
    %v3304 = vpack.c.b16 %v3192, %v3190
    %v3305 = vpack.c.b16 %v3193, %v3191
    %v3306 = vpack.c.b16 %v3196, %v3194
    %v3307 = vpack.c.b16 %v3197, %v3195
    %v3308 = vpack.c.b16 %v3200, %v3198
    %v3309 = vpack.c.b16 %v3201, %v3199
    %v3310 = vpack.c.b16 %v3204, %v3202
    %v3311 = vpack.c.b16 %v3205, %v3203
    %v3312 = vpack.c.b16 %v3208, %v3206
    %v3313 = vpack.c.b16 %v3209, %v3207
    %v3314 = vpack.c.b16 %v3212, %v3210
    %v3315 = vpack.c.b16 %v3213, %v3211
    %v3316 = vpack.c.b16 %v3216, %v3214
    %v3317 = vpack.c.b16 %v3217, %v3215
    %v3318 = vpack.c.b16 %v3220, %v3218
    %v3319 = vpack.c.b16 %v3221, %v3219
    %v3320 = vpack.c.b16 %v3224, %v3222
    %v3321 = vpack.c.b16 %v3225, %v3223
    %v3322 = vpack.c.b16 %v3228, %v3226
    %v3323 = vpack.c.b16 %v3229, %v3227
    %v3324 = vpack.c.b16 %v3232, %v3230
    %v3325 = vpack.c.b16 %v3233, %v3231
    %v3326 = vpack.c.b16 %v3236, %v3234
    %v3327 = vpack.c.b16 %v3237, %v3235
    %v3328 = vpack.c.b16 %v3240, %v3238
    %v3329 = vpack.c.b16 %v3241, %v3239
    %v3330 = vpack.c.b16 %v3244, %v3242
    %v3331 = vpack.c.b16 %v3245, %v3243
    %v3332 = vpack.c.b16 %v3248, %v3246
    %v3333 = vpack.c.b16 %v3249, %v3247
    %v3334 = vpack.c.b16 %v3252, %v3250
    %v3335 = vpack.c.b16 %v3253, %v3251
    %v3336 = vpack.c.b16 %v3256, %v3254
    %v3337 = vpack.c.b16 %v3257, %v3255
    %v3338 = vpack.c.b16 %v3260, %v3258
    %v3339 = vpack.c.b16 %v3261, %v3259
    %v3340 = vpack.c.b16 %v3264, %v3262
    %v3341 = vpack.c.b16 %v3265, %v3263
    %v3342 = vpack.c.b16 %v3268, %v3266
    %v3343 = vpack.c.b16 %v3269, %v3267
    %v3344 = vpack.c.b16 %v3272, %v3270
    %v3345 = vpack.c.b16 %v3273, %v3271
    %v3346 = vpack.c.b16 %v3276, %v3274
    %v3347 = vpack.c.b16 %v3277, %v3275
    %v3348 = vpack.c.b16 %v3280, %v3278
    %v3349 = vpack.c.b16 %v3281, %v3279
    %v3350 = vpack.c.b16 %v3284, %v3282
    %v3351 = vpack.c.b16 %v3285, %v3283
    %v3352 = vpack.c.b16 %v3288, %v3286
    %v3353 = vpack.c.b16 %v3289, %v3287
    %3418 = vmatprep.subr.bf16.mxu0 %v3291
    %3419 = vmatpush1.bf16.msra.mxu0 %v3290
    %3420 = vmatprep.subr.bf16.mxu0 %v3293
    %3421 = vmatpush1.bf16.msra.mxu0 %v3292
    %3422 = vmatprep.subr.bf16.mxu0 %v3295
    %3423 = vmatpush1.bf16.msra.mxu0 %v3294
    %3424 = vmatprep.subr.bf16.mxu0 %v3297
    %3425 = vmatpush1.bf16.msra.mxu0 %v3296
    %3426 = vmatprep.subr.bf16.mxu0 %v3299
    %3427 = vmatpush1.bf16.msra.mxu0 %v3298
    %3428 = vmatprep.subr.bf16.mxu0 %v3301
    %3429 = vmatpush1.bf16.msra.mxu0 %v3300
    %3430 = vmatprep.subr.bf16.mxu0 %v3303
    %3431 = vmatpush1.bf16.msra.mxu0 %v3302
    %3432 = vmatprep.subr.bf16.mxu0 %v3305
    %3433 = vmatpush1.bf16.msra.mxu0 %v3304
    %3434 = vmatprep.subr.bf16.mxu0 %v3307
    %3435 = vmatpush1.bf16.msra.mxu0 %v3306
    %3436 = vmatprep.subr.bf16.mxu0 %v3309
    %3437 = vmatpush1.bf16.msra.mxu0 %v3308
    %3438 = vmatprep.subr.bf16.mxu0 %v3311
    %3439 = vmatpush1.bf16.msra.mxu0 %v3310
    %3440 = vmatprep.subr.bf16.mxu0 %v3313
    %3441 = vmatpush1.bf16.msra.mxu0 %v3312
    %3442 = vmatprep.subr.bf16.mxu0 %v3315
    %3443 = vmatpush1.bf16.msra.mxu0 %v3314
    %3444 = vmatprep.subr.bf16.mxu0 %v3317
    %3445 = vmatpush1.bf16.msra.mxu0 %v3316
    %3446 = vmatprep.subr.bf16.mxu0 %v3319
    %3447 = vmatpush1.bf16.msra.mxu0 %v3318
    %3448 = vmatprep.subr.bf16.mxu0 %v3321
    %3449 = vmatpush1.bf16.msra.mxu0 %v3320
    %3450 = vmatprep.mubr.bf16.mxu0 %v3019
    %3451 = vmatmul.mubr.bf16.gmra.mrb[0].mxu0 %v3018
    %v3452 = vpop.f32.mrb[0].mxu0
    %v3453 = vadd.f32 %v3091, %v3452
    %v3454 = vpop.f32.mrb[0].mxu0
    %v3455 = vadd.f32 %v3095, %v3454
    %v3456 = vpop.f32.mrb[0].mxu0
    %v3457 = vpop.f32.mrb[0].mxu0
    %3458 = vdwg.mxu0
    %3459 = vmatprep.subr.bf16.mxu0 %v3323
    %3460 = vmatpush1.bf16.msra.mxu0 %v3322
    %3461 = vmatprep.subr.bf16.mxu0 %v3325
    %3462 = vmatpush1.bf16.msra.mxu0 %v3324
    %3463 = vmatprep.subr.bf16.mxu0 %v3327
    %3464 = vmatpush1.bf16.msra.mxu0 %v3326
    %3465 = vmatprep.subr.bf16.mxu0 %v3329
    %3466 = vmatpush1.bf16.msra.mxu0 %v3328
    %3467 = vmatprep.subr.bf16.mxu0 %v3331
    %3468 = vmatpush1.bf16.msra.mxu0 %v3330
    %3469 = vmatprep.subr.bf16.mxu0 %v3333
    %3470 = vmatpush1.bf16.msra.mxu0 %v3332
    %3471 = vmatprep.subr.bf16.mxu0 %v3335
    %3472 = vmatpush1.bf16.msra.mxu0 %v3334
    %3473 = vmatprep.subr.bf16.mxu0 %v3337
    %3474 = vmatpush1.bf16.msra.mxu0 %v3336
    %3475 = vmatprep.subr.bf16.mxu0 %v3339
    %3476 = vmatpush1.bf16.msra.mxu0 %v3338
    %3477 = vmatprep.subr.bf16.mxu0 %v3341
    %3478 = vmatpush1.bf16.msra.mxu0 %v3340
    %3479 = vmatprep.subr.bf16.mxu0 %v3343
    %3480 = vmatpush1.bf16.msra.mxu0 %v3342
    %3481 = vmatprep.subr.bf16.mxu0 %v3345
    %3482 = vmatpush1.bf16.msra.mxu0 %v3344
    %3483 = vmatprep.subr.bf16.mxu0 %v3347
    %3484 = vmatpush1.bf16.msra.mxu0 %v3346
    %3485 = vmatprep.subr.bf16.mxu0 %v3349
    %3486 = vmatpush1.bf16.msra.mxu0 %v3348
    %3487 = vmatprep.subr.bf16.mxu0 %v3351
    %3488 = vmatpush1.bf16.msra.mxu0 %v3350
    %3489 = vmatprep.subr.bf16.mxu0 %v3353
    %3490 = vmatpush1.bf16.msra.mxu0 %v3352
    %3491 = vmatprep.mubr.bf16.mxu0 %v3021
    %3492 = vmatmul.mubr.bf16.gmra.mrb[0].mxu0 %v3020
    %v3493 = vpop.f32.mrb[0].mxu0
    %v3494 = vadd.f32 %v3453, %v3493
    %v3495 = vpop.f32.mrb[0].mxu0
    %v3496 = vadd.f32 %v3455, %v3495
    %v3497 = vpop.f32.mrb[0].mxu0
    %v3498 = vpop.f32.mrb[0].mxu0
    %3499 = vdwg.mxu0
    %v3502 = vcombine.low %v3494, %v3496
    %v3504 = vunpack.c.l.s4 1983009808
    %v3505 = vunpack.c.0.s8 %v3504
    %v3506 = vlaneseq
    %v3507 = vshrl.u32 %v3506, 7
    %v3508 = vsub.s32 %v3505, %v3507
    %v3509 = vrot.slane %v3502, %v3508
    %3511 = vst [vmem:[%s12] sm:$0xf] %v3509
    %v3512 = vmul.f32 %v3496, 0.5
    %v3513 = vmul.f32 %v3512, 1.442695
    %v3514 = vpow.pop %v3513
    %v3515 = vld [vmem:[%s1] sm:$0x3]
    %v3516 = vmul.f32 %v3515, %v3514
    %v3517 = vadd.f32 %v3494, %v3516
    %v3518 = vpack.c.bf16 %v3517, %v3517
    %v3519 = vld [vmem:[#allocation7] sm:$0xff]
    %v3520 = vld [vmem:[#allocation7 + $0x8] sm:$0xff]
    %v3521 = vld [vmem:[#allocation7 + $0x10] sm:$0xff]
    %v3522 = vld [vmem:[#allocation7 + $0x18] sm:$0xff]
    %v3523 = vld [vmem:[#allocation7 + $0x20] sm:$0xff]
    %v3524 = vld [vmem:[#allocation7 + $0x28] sm:$0xff]
    %v3525 = vld [vmem:[#allocation7 + $0x30] sm:$0xff]
    %v3526 = vld [vmem:[#allocation7 + $0x38] sm:$0xff]
    %v3527 = vld [vmem:[#allocation7 + $0x40] sm:$0xff]
    %v3528 = vld [vmem:[#allocation7 + $0x48] sm:$0xff]
    %v3529 = vld [vmem:[#allocation7 + $0x50] sm:$0xff]
    %v3530 = vld [vmem:[#allocation7 + $0x58] sm:$0xff]
    %v3531 = vld [vmem:[#allocation7 + $0x60] sm:$0xff]
    %v3532 = vld [vmem:[#allocation7 + $0x68] sm:$0xff]
    %v3533 = vld [vmem:[#allocation7 + $0x70] sm:$0xff]
    %v3534 = vld [vmem:[#allocation7 + $0x78] sm:$0xff]
    %v3535 = vld [vmem:[#allocation7 + $0x80] sm:$0xff]
    %v3536 = vld [vmem:[#allocation7 + $0x88] sm:$0xff]
    %v3537 = vld [vmem:[#allocation7 + $0x90] sm:$0xff]
    %v3538 = vld [vmem:[#allocation7 + $0x98] sm:$0xff]
    %v3539 = vld [vmem:[#allocation7 + $0xa0] sm:$0xff]
    %v3540 = vld [vmem:[#allocation7 + $0xa8] sm:$0xff]
    %v3541 = vld [vmem:[#allocation7 + $0xb0] sm:$0xff]
    %v3542 = vld [vmem:[#allocation7 + $0xb8] sm:$0xff]
    %v3543 = vld [vmem:[#allocation7 + $0xc0] sm:$0xff]
    %v3544 = vld [vmem:[#allocation7 + $0xc8] sm:$0xff]
    %v3545 = vld [vmem:[#allocation7 + $0xd0] sm:$0xff]
    %v3546 = vld [vmem:[#allocation7 + $0xd8] sm:$0xff]
    %v3547 = vld [vmem:[#allocation7 + $0xe0] sm:$0xff]
    %v3548 = vld [vmem:[#allocation7 + $0xe8] sm:$0xff]
    %v3549 = vld [vmem:[#allocation7 + $0xf0] sm:$0xff]
    %v3550 = vld [vmem:[#allocation7 + $0xf8] sm:$0xff]
    %v3551 = vld [vmem:[%s9] sm:$0xf]
    %v3553 = vlaneseq
    %v3554 = vshrl.u32 %v3553, 7
    %v3555 = vsub.s32 0, %v3554
    %v3556 = vrot.slane %v3551, %v3555
    %v3557 = vlaneseq
    %v3558 = vshrl.u32 %v3557, 7
    %v3559 = vsub.s32 1, %v3558
    %v3560 = vrot.slane %v3551, %v3559
    %v3561 = vlaneseq
    %v3562 = vshrl.u32 %v3561, 7
    %v3563 = vsub.s32 2, %v3562
    %v3564 = vrot.slane %v3551, %v3563
    %v3565 = vlaneseq
    %v3566 = vshrl.u32 %v3565, 7
    %v3567 = vsub.s32 3, %v3566
    %v3568 = vrot.slane %v3551, %v3567
    %v3605 = vunpack.c.l.b16 %v3519
    %v3606 = vunpack.c.h.b16 %v3519
    %v3607 = vunpack.c.l.b16 %v3520
    %v3608 = vunpack.c.h.b16 %v3520
    %v3609 = vunpack.c.l.b16 %v3521
    %v3610 = vunpack.c.h.b16 %v3521
    %v3611 = vunpack.c.l.b16 %v3522
    %v3612 = vunpack.c.h.b16 %v3522
    %v3613 = vunpack.c.l.b16 %v3523
    %v3614 = vunpack.c.h.b16 %v3523
    %v3615 = vunpack.c.l.b16 %v3524
    %v3616 = vunpack.c.h.b16 %v3524
    %v3617 = vunpack.c.l.b16 %v3525
    %v3618 = vunpack.c.h.b16 %v3525
    %v3619 = vunpack.c.l.b16 %v3526
    %v3620 = vunpack.c.h.b16 %v3526
    %v3621 = vunpack.c.l.b16 %v3527
    %v3622 = vunpack.c.h.b16 %v3527
    %v3623 = vunpack.c.l.b16 %v3528
    %v3624 = vunpack.c.h.b16 %v3528
    %v3625 = vunpack.c.l.b16 %v3529
    %v3626 = vunpack.c.h.b16 %v3529
    %v3627 = vunpack.c.l.b16 %v3530
    %v3628 = vunpack.c.h.b16 %v3530
    %v3629 = vunpack.c.l.b16 %v3531
    %v3630 = vunpack.c.h.b16 %v3531
    %v3631 = vunpack.c.l.b16 %v3532
    %v3632 = vunpack.c.h.b16 %v3532
    %v3633 = vunpack.c.l.b16 %v3533
    %v3634 = vunpack.c.h.b16 %v3533
    %v3635 = vunpack.c.l.b16 %v3534
    %v3636 = vunpack.c.h.b16 %v3534
    %v3637 = vunpack.c.l.b16 %v3535
    %v3638 = vunpack.c.h.b16 %v3535
    %v3639 = vunpack.c.l.b16 %v3536
    %v3640 = vunpack.c.h.b16 %v3536
    %v3641 = vunpack.c.l.b16 %v3537
    %v3642 = vunpack.c.h.b16 %v3537
    %v3643 = vunpack.c.l.b16 %v3538
    %v3644 = vunpack.c.h.b16 %v3538
    %v3645 = vunpack.c.l.b16 %v3539
    %v3646 = vunpack.c.h.b16 %v3539
    %v3647 = vunpack.c.l.b16 %v3540
    %v3648 = vunpack.c.h.b16 %v3540
    %v3649 = vunpack.c.l.b16 %v3541
    %v3650 = vunpack.c.h.b16 %v3541
    %v3651 = vunpack.c.l.b16 %v3542
    %v3652 = vunpack.c.h.b16 %v3542
    %v3653 = vunpack.c.l.b16 %v3543
    %v3654 = vunpack.c.h.b16 %v3543
    %v3655 = vunpack.c.l.b16 %v3544
    %v3656 = vunpack.c.h.b16 %v3544
    %v3657 = vunpack.c.l.b16 %v3545
    %v3658 = vunpack.c.h.b16 %v3545
    %v3659 = vunpack.c.l.b16 %v3546
    %v3660 = vunpack.c.h.b16 %v3546
    %v3661 = vunpack.c.l.b16 %v3547
    %v3662 = vunpack.c.h.b16 %v3547
    %v3663 = vunpack.c.l.b16 %v3548
    %v3664 = vunpack.c.h.b16 %v3548
    %v3665 = vunpack.c.l.b16 %v3549
    %v3666 = vunpack.c.h.b16 %v3549
    %v3667 = vunpack.c.l.b16 %v3550
    %v3668 = vunpack.c.h.b16 %v3550
    %v3669 = vpack.c.b16 %v3609, %v3605
    %v3670 = vpack.c.b16 %v3610, %v3606
    %v3671 = vpack.c.b16 %v3611, %v3607
    %v3672 = vpack.c.b16 %v3612, %v3608
    %v3673 = vpack.c.b16 %v3617, %v3613
    %v3674 = vpack.c.b16 %v3618, %v3614
    %v3675 = vpack.c.b16 %v3619, %v3615
    %v3676 = vpack.c.b16 %v3620, %v3616
    %v3677 = vpack.c.b16 %v3625, %v3621
    %v3678 = vpack.c.b16 %v3626, %v3622
    %v3679 = vpack.c.b16 %v3627, %v3623
    %v3680 = vpack.c.b16 %v3628, %v3624
    %v3681 = vpack.c.b16 %v3633, %v3629
    %v3682 = vpack.c.b16 %v3634, %v3630
    %v3683 = vpack.c.b16 %v3635, %v3631
    %v3684 = vpack.c.b16 %v3636, %v3632
    %v3685 = vpack.c.b16 %v3641, %v3637
    %v3686 = vpack.c.b16 %v3642, %v3638
    %v3687 = vpack.c.b16 %v3643, %v3639
    %v3688 = vpack.c.b16 %v3644, %v3640
    %v3689 = vpack.c.b16 %v3649, %v3645
    %v3690 = vpack.c.b16 %v3650, %v3646
    %v3691 = vpack.c.b16 %v3651, %v3647
    %v3692 = vpack.c.b16 %v3652, %v3648
    %v3693 = vpack.c.b16 %v3657, %v3653
    %v3694 = vpack.c.b16 %v3658, %v3654
    %v3695 = vpack.c.b16 %v3659, %v3655
    %v3696 = vpack.c.b16 %v3660, %v3656
    %v3697 = vpack.c.b16 %v3665, %v3661
    %v3698 = vpack.c.b16 %v3666, %v3662
    %v3699 = vpack.c.b16 %v3667, %v3663
    %v3700 = vpack.c.b16 %v3668, %v3664
    %3733 = vmatprep.subr.bf16.mxu0 %v3670
    %3734 = vmatpush1.bf16.msra.mxu0 %v3669
    %3735 = vmatprep.subr.bf16.mxu0 %v3674
    %3736 = vmatpush1.bf16.msra.mxu0 %v3673
    %3737 = vmatprep.subr.bf16.mxu0 %v3678
    %3738 = vmatpush1.bf16.msra.mxu0 %v3677
    %3739 = vmatprep.subr.bf16.mxu0 %v3682
    %3740 = vmatpush1.bf16.msra.mxu0 %v3681
    %3741 = vmatprep.subr.bf16.mxu0 %v3686
    %3742 = vmatpush1.bf16.msra.mxu0 %v3685
    %3743 = vmatprep.subr.bf16.mxu0 %v3690
    %3744 = vmatpush1.bf16.msra.mxu0 %v3689
    %3745 = vmatprep.subr.bf16.mxu0 %v3694
    %3746 = vmatpush1.bf16.msra.mxu0 %v3693
    %3747 = vmatprep.subr.bf16.mxu0 %v3698
    %3748 = vmatpush1.bf16.msra.mxu0 %v3697
    %3749 = vmatprep.subr.bf16.mxu0 0
    %3750 = vmatpush1.bf16.msra.mxu0 0
    %3751 = vmatprep.subr.bf16.mxu0 0
    %3752 = vmatpush1.bf16.msra.mxu0 0
    %3753 = vmatprep.subr.bf16.mxu0 0
    %3754 = vmatpush1.bf16.msra.mxu0 0
    %3755 = vmatprep.subr.bf16.mxu0 0
    %3756 = vmatpush1.bf16.msra.mxu0 0
    %3757 = vmatprep.subr.bf16.mxu0 0
    %3758 = vmatpush1.bf16.msra.mxu0 0
    %3759 = vmatprep.subr.bf16.mxu0 0
    %3760 = vmatpush1.bf16.msra.mxu0 0
    %3761 = vmatprep.subr.bf16.mxu0 0
    %3762 = vmatpush1.bf16.msra.mxu0 0
    %3763 = vmatprep.subr.bf16.mxu0 0
    %3764 = vmatpush1.bf16.msra.mxu0 0
    %3765 = vmatprep.mubr.bf16.mxu0 0
    %3766 = vmatmul.mubr.bf16.gmra.mrb[0].mxu0 %v3518
    %v3767 = vpop.f32.mrb[0].mxu0
    %v3768 = vadd.f32 %v3556, %v3767
    %v3769 = vpop.f32.mrb[0].mxu0
    %v3770 = vadd.f32 %v3560, %v3769
    %v3771 = vpop.f32.mrb[0].mxu0
    %v3772 = vpop.f32.mrb[0].mxu0
    %3773 = vdwg.mxu0
    %3774 = vmatprep.subr.bf16.mxu0 %v3672
    %3775 = vmatpush1.bf16.msra.mxu0 %v3671
    %3776 = vmatprep.subr.bf16.mxu0 %v3676
    %3777 = vmatpush1.bf16.msra.mxu0 %v3675
    %3778 = vmatprep.subr.bf16.mxu0 %v3680
    %3779 = vmatpush1.bf16.msra.mxu0 %v3679
    %3780 = vmatprep.subr.bf16.mxu0 %v3684
    %3781 = vmatpush1.bf16.msra.mxu0 %v3683
    %3782 = vmatprep.subr.bf16.mxu0 %v3688
    %3783 = vmatpush1.bf16.msra.mxu0 %v3687
    %3784 = vmatprep.subr.bf16.mxu0 %v3692
    %3785 = vmatpush1.bf16.msra.mxu0 %v3691
    %3786 = vmatprep.subr.bf16.mxu0 %v3696
    %3787 = vmatpush1.bf16.msra.mxu0 %v3695
    %3788 = vmatprep.subr.bf16.mxu0 %v3700
    %3789 = vmatpush1.bf16.msra.mxu0 %v3699
    %3790 = vmatprep.subr.bf16.mxu0 0
    %3791 = vmatpush1.bf16.msra.mxu0 0
    %3792 = vmatprep.subr.bf16.mxu0 0
    %3793 = vmatpush1.bf16.msra.mxu0 0
    %3794 = vmatprep.subr.bf16.mxu0 0
    %3795 = vmatpush1.bf16.msra.mxu0 0
    %3796 = vmatprep.subr.bf16.mxu0 0
    %3797 = vmatpush1.bf16.msra.mxu0 0
    %3798 = vmatprep.subr.bf16.mxu0 0
    %3799 = vmatpush1.bf16.msra.mxu0 0
    %3800 = vmatprep.subr.bf16.mxu0 0
    %3801 = vmatpush1.bf16.msra.mxu0 0
    %3802 = vmatprep.subr.bf16.mxu0 0
    %3803 = vmatpush1.bf16.msra.mxu0 0
    %3804 = vmatprep.subr.bf16.mxu0 0
    %3805 = vmatpush1.bf16.msra.mxu0 0
    %3806 = vmatprep.mubr.bf16.mxu0 0
    %3807 = vmatmul.mubr.bf16.gmra.mrb[0].mxu0 %v3518
    %v3808 = vpop.f32.mrb[0].mxu0
    %v3809 = vadd.f32 %v3564, %v3808
    %v3810 = vpop.f32.mrb[0].mxu0
    %v3811 = vadd.f32 %v3568, %v3810
    %v3812 = vpop.f32.mrb[0].mxu0
    %v3813 = vpop.f32.mrb[0].mxu0
    %3814 = vdwg.mxu0
    %v3815 = vmax.f32 %v3768, 0.0
    %v3816 = vmax.f32 %v3770, 0.0
    %v3817 = vmax.f32 %v3809, 0.0
    %v3818 = vmax.f32 %v3811, 0.0
    %v3819 = vpack.c.bf16 %v3815, %v3815
    %v3820 = vpack.c.bf16 %v3816, %v3816
    %v3821 = vpack.c.bf16 %v3817, %v3817
    %v3822 = vpack.c.bf16 %v3818, %v3818
    %v3823 = vld [vmem:[#allocation9] sm:$0xff]
    %v3824 = vld [vmem:[#allocation9 + $0x8] sm:$0xff]
    %v3825 = vld [vmem:[#allocation9 + $0x10] sm:$0xff]
    %v3826 = vld [vmem:[#allocation9 + $0x18] sm:$0xff]
    %v3827 = vld [vmem:[#allocation9 + $0x20] sm:$0xff]
    %v3828 = vld [vmem:[#allocation9 + $0x28] sm:$0xff]
    %v3829 = vld [vmem:[#allocation9 + $0x30] sm:$0xff]
    %v3830 = vld [vmem:[#allocation9 + $0x38] sm:$0xff]
    %v3831 = vld [vmem:[#allocation9 + $0x40] sm:$0xff]
    %v3832 = vld [vmem:[#allocation9 + $0x48] sm:$0xff]
    %v3833 = vld [vmem:[#allocation9 + $0x50] sm:$0xff]
    %v3834 = vld [vmem:[#allocation9 + $0x58] sm:$0xff]
    %v3835 = vld [vmem:[#allocation9 + $0x60] sm:$0xff]
    %v3836 = vld [vmem:[#allocation9 + $0x68] sm:$0xff]
    %v3837 = vld [vmem:[#allocation9 + $0x70] sm:$0xff]
    %v3838 = vld [vmem:[#allocation9 + $0x78] sm:$0xff]
    %v3839 = vld [vmem:[#allocation9 + $0x80] sm:$0xff]
    %v3840 = vld [vmem:[#allocation9 + $0x88] sm:$0xff]
    %v3841 = vld [vmem:[#allocation9 + $0x90] sm:$0xff]
    %v3842 = vld [vmem:[#allocation9 + $0x98] sm:$0xff]
    %v3843 = vld [vmem:[#allocation9 + $0xa0] sm:$0xff]
    %v3844 = vld [vmem:[#allocation9 + $0xa8] sm:$0xff]
    %v3845 = vld [vmem:[#allocation9 + $0xb0] sm:$0xff]
    %v3846 = vld [vmem:[#allocation9 + $0xb8] sm:$0xff]
    %v3847 = vld [vmem:[#allocation9 + $0xc0] sm:$0xff]
    %v3848 = vld [vmem:[#allocation9 + $0xc8] sm:$0xff]
    %v3849 = vld [vmem:[#allocation9 + $0xd0] sm:$0xff]
    %v3850 = vld [vmem:[#allocation9 + $0xd8] sm:$0xff]
    %v3851 = vld [vmem:[#allocation9 + $0xe0] sm:$0xff]
    %v3852 = vld [vmem:[#allocation9 + $0xe8] sm:$0xff]
    %v3853 = vld [vmem:[#allocation9 + $0xf0] sm:$0xff]
    %v3854 = vld [vmem:[#allocation9 + $0xf8] sm:$0xff]
    %v3855 = vld [vmem:[#allocation9 + $0x100] sm:$0xff]
    %v3856 = vld [vmem:[#allocation9 + $0x108] sm:$0xff]
    %v3857 = vld [vmem:[#allocation9 + $0x110] sm:$0xff]
    %v3858 = vld [vmem:[#allocation9 + $0x118] sm:$0xff]
    %v3859 = vld [vmem:[#allocation9 + $0x120] sm:$0xff]
    %v3860 = vld [vmem:[#allocation9 + $0x128] sm:$0xff]
    %v3861 = vld [vmem:[#allocation9 + $0x130] sm:$0xff]
    %v3862 = vld [vmem:[#allocation9 + $0x138] sm:$0xff]
    %v3863 = vld [vmem:[#allocation9 + $0x140] sm:$0xff]
    %v3864 = vld [vmem:[#allocation9 + $0x148] sm:$0xff]
    %v3865 = vld [vmem:[#allocation9 + $0x150] sm:$0xff]
    %v3866 = vld [vmem:[#allocation9 + $0x158] sm:$0xff]
    %v3867 = vld [vmem:[#allocation9 + $0x160] sm:$0xff]
    %v3868 = vld [vmem:[#allocation9 + $0x168] sm:$0xff]
    %v3869 = vld [vmem:[#allocation9 + $0x170] sm:$0xff]
    %v3870 = vld [vmem:[#allocation9 + $0x178] sm:$0xff]
    %v3871 = vld [vmem:[#allocation9 + $0x180] sm:$0xff]
    %v3872 = vld [vmem:[#allocation9 + $0x188] sm:$0xff]
    %v3873 = vld [vmem:[#allocation9 + $0x190] sm:$0xff]
    %v3874 = vld [vmem:[#allocation9 + $0x198] sm:$0xff]
    %v3875 = vld [vmem:[#allocation9 + $0x1a0] sm:$0xff]
    %v3876 = vld [vmem:[#allocation9 + $0x1a8] sm:$0xff]
    %v3877 = vld [vmem:[#allocation9 + $0x1b0] sm:$0xff]
    %v3878 = vld [vmem:[#allocation9 + $0x1b8] sm:$0xff]
    %v3879 = vld [vmem:[#allocation9 + $0x1c0] sm:$0xff]
    %v3880 = vld [vmem:[#allocation9 + $0x1c8] sm:$0xff]
    %v3881 = vld [vmem:[#allocation9 + $0x1d0] sm:$0xff]
    %v3882 = vld [vmem:[#allocation9 + $0x1d8] sm:$0xff]
    %v3883 = vld [vmem:[#allocation9 + $0x1e0] sm:$0xff]
    %v3884 = vld [vmem:[#allocation9 + $0x1e8] sm:$0xff]
    %v3885 = vld [vmem:[#allocation9 + $0x1f0] sm:$0xff]
    %v3886 = vld [vmem:[#allocation9 + $0x1f8] sm:$0xff]
    %v3887 = vld [vmem:[#allocation9 + $0x200] sm:$0xff]
    %v3888 = vld [vmem:[#allocation9 + $0x208] sm:$0xff]
    %v3889 = vld [vmem:[#allocation9 + $0x210] sm:$0xff]
    %v3890 = vld [vmem:[#allocation9 + $0x218] sm:$0xff]
    %v3891 = vld [vmem:[#allocation9 + $0x220] sm:$0xff]
    %v3892 = vld [vmem:[#allocation9 + $0x228] sm:$0xff]
    %v3893 = vld [vmem:[#allocation9 + $0x230] sm:$0xff]
    %v3894 = vld [vmem:[#allocation9 + $0x238] sm:$0xff]
    %v3895 = vld [vmem:[#allocation9 + $0x240] sm:$0xff]
    %v3896 = vld [vmem:[#allocation9 + $0x248] sm:$0xff]
    %v3897 = vld [vmem:[#allocation9 + $0x250] sm:$0xff]
    %v3898 = vld [vmem:[#allocation9 + $0x258] sm:$0xff]
    %v3899 = vld [vmem:[#allocation9 + $0x260] sm:$0xff]
    %v3900 = vld [vmem:[#allocation9 + $0x268] sm:$0xff]
    %v3901 = vld [vmem:[#allocation9 + $0x270] sm:$0xff]
    %v3902 = vld [vmem:[#allocation9 + $0x278] sm:$0xff]
    %v3903 = vld [vmem:[#allocation9 + $0x280] sm:$0xff]
    %v3904 = vld [vmem:[#allocation9 + $0x288] sm:$0xff]
    %v3905 = vld [vmem:[#allocation9 + $0x290] sm:$0xff]
    %v3906 = vld [vmem:[#allocation9 + $0x298] sm:$0xff]
    %v3907 = vld [vmem:[#allocation9 + $0x2a0] sm:$0xff]
    %v3908 = vld [vmem:[#allocation9 + $0x2a8] sm:$0xff]
    %v3909 = vld [vmem:[#allocation9 + $0x2b0] sm:$0xff]
    %v3910 = vld [vmem:[#allocation9 + $0x2b8] sm:$0xff]
    %v3911 = vld [vmem:[#allocation9 + $0x2c0] sm:$0xff]
    %v3912 = vld [vmem:[#allocation9 + $0x2c8] sm:$0xff]
    %v3913 = vld [vmem:[#allocation9 + $0x2d0] sm:$0xff]
    %v3914 = vld [vmem:[#allocation9 + $0x2d8] sm:$0xff]
    %v3915 = vld [vmem:[#allocation9 + $0x2e0] sm:$0xff]
    %v3916 = vld [vmem:[#allocation9 + $0x2e8] sm:$0xff]
    %v3917 = vld [vmem:[#allocation9 + $0x2f0] sm:$0xff]
    %v3918 = vld [vmem:[#allocation9 + $0x2f8] sm:$0xff]
    %v3919 = vld [vmem:[#allocation9 + $0x300] sm:$0xff]
    %v3920 = vld [vmem:[#allocation9 + $0x308] sm:$0xff]
    %v3921 = vld [vmem:[#allocation9 + $0x310] sm:$0xff]
    %v3922 = vld [vmem:[#allocation9 + $0x318] sm:$0xff]
    %v3923 = vld [vmem:[#allocation9 + $0x320] sm:$0xff]
    %v3924 = vld [vmem:[#allocation9 + $0x328] sm:$0xff]
    %v3925 = vld [vmem:[#allocation9 + $0x330] sm:$0xff]
    %v3926 = vld [vmem:[#allocation9 + $0x338] sm:$0xff]
    %v3927 = vld [vmem:[#allocation9 + $0x340] sm:$0xff]
    %v3928 = vld [vmem:[#allocation9 + $0x348] sm:$0xff]
    %v3929 = vld [vmem:[#allocation9 + $0x350] sm:$0xff]
    %v3930 = vld [vmem:[#allocation9 + $0x358] sm:$0xff]
    %v3931 = vld [vmem:[#allocation9 + $0x360] sm:$0xff]
    %v3932 = vld [vmem:[#allocation9 + $0x368] sm:$0xff]
    %v3933 = vld [vmem:[#allocation9 + $0x370] sm:$0xff]
    %v3934 = vld [vmem:[#allocation9 + $0x378] sm:$0xff]
    %v3935 = vld [vmem:[#allocation9 + $0x380] sm:$0xff]
    %v3936 = vld [vmem:[#allocation9 + $0x388] sm:$0xff]
    %v3937 = vld [vmem:[#allocation9 + $0x390] sm:$0xff]
    %v3938 = vld [vmem:[#allocation9 + $0x398] sm:$0xff]
    %v3939 = vld [vmem:[#allocation9 + $0x3a0] sm:$0xff]
    %v3940 = vld [vmem:[#allocation9 + $0x3a8] sm:$0xff]
    %v3941 = vld [vmem:[#allocation9 + $0x3b0] sm:$0xff]
    %v3942 = vld [vmem:[#allocation9 + $0x3b8] sm:$0xff]
    %v3943 = vld [vmem:[#allocation9 + $0x3c0] sm:$0xff]
    %v3944 = vld [vmem:[#allocation9 + $0x3c8] sm:$0xff]
    %v3945 = vld [vmem:[#allocation9 + $0x3d0] sm:$0xff]
    %v3946 = vld [vmem:[#allocation9 + $0x3d8] sm:$0xff]
    %v3947 = vld [vmem:[#allocation9 + $0x3e0] sm:$0xff]
    %v3948 = vld [vmem:[#allocation9 + $0x3e8] sm:$0xff]
    %v3949 = vld [vmem:[#allocation9 + $0x3f0] sm:$0xff]
    %v3950 = vld [vmem:[#allocation9 + $0x3f8] sm:$0xff]
    %v3951 = vld [vmem:[#allocation9 + $0x400] sm:$0xff]
    %v3952 = vld [vmem:[#allocation9 + $0x408] sm:$0xff]
    %v3953 = vld [vmem:[#allocation9 + $0x410] sm:$0xff]
    %v3954 = vld [vmem:[#allocation9 + $0x418] sm:$0xff]
    %v3955 = vld [vmem:[#allocation9 + $0x420] sm:$0xff]
    %v3956 = vld [vmem:[#allocation9 + $0x428] sm:$0xff]
    %v3957 = vld [vmem:[#allocation9 + $0x430] sm:$0xff]
    %v3958 = vld [vmem:[#allocation9 + $0x438] sm:$0xff]
    %v3959 = vld [vmem:[#allocation9 + $0x440] sm:$0xff]
    %v3960 = vld [vmem:[#allocation9 + $0x448] sm:$0xff]
    %v3961 = vld [vmem:[#allocation9 + $0x450] sm:$0xff]
    %v3962 = vld [vmem:[#allocation9 + $0x458] sm:$0xff]
    %v3963 = vld [vmem:[#allocation9 + $0x460] sm:$0xff]
    %v3964 = vld [vmem:[#allocation9 + $0x468] sm:$0xff]
    %v3965 = vld [vmem:[#allocation9 + $0x470] sm:$0xff]
    %v3966 = vld [vmem:[#allocation9 + $0x478] sm:$0xff]
    %v3967 = vld [vmem:[#allocation9 + $0x480] sm:$0xff]
    %v3968 = vld [vmem:[#allocation9 + $0x488] sm:$0xff]
    %v3969 = vld [vmem:[#allocation9 + $0x490] sm:$0xff]
    %v3970 = vld [vmem:[#allocation9 + $0x498] sm:$0xff]
    %v3971 = vld [vmem:[#allocation9 + $0x4a0] sm:$0xff]
    %v3972 = vld [vmem:[#allocation9 + $0x4a8] sm:$0xff]
    %v3973 = vld [vmem:[#allocation9 + $0x4b0] sm:$0xff]
    %v3974 = vld [vmem:[#allocation9 + $0x4b8] sm:$0xff]
    %v3975 = vld [vmem:[#allocation9 + $0x4c0] sm:$0xff]
    %v3976 = vld [vmem:[#allocation9 + $0x4c8] sm:$0xff]
    %v3977 = vld [vmem:[#allocation9 + $0x4d0] sm:$0xff]
    %v3978 = vld [vmem:[#allocation9 + $0x4d8] sm:$0xff]
    %v3979 = vld [vmem:[#allocation9 + $0x4e0] sm:$0xff]
    %v3980 = vld [vmem:[#allocation9 + $0x4e8] sm:$0xff]
    %v3981 = vld [vmem:[#allocation9 + $0x4f0] sm:$0xff]
    %v3982 = vld [vmem:[#allocation9 + $0x4f8] sm:$0xff]
    %v3983 = vld [vmem:[#allocation9 + $0x500] sm:$0xff]
    %v3984 = vld [vmem:[#allocation9 + $0x508] sm:$0xff]
    %v3985 = vld [vmem:[#allocation9 + $0x510] sm:$0xff]
    %v3986 = vld [vmem:[#allocation9 + $0x518] sm:$0xff]
    %v3987 = vld [vmem:[#allocation9 + $0x520] sm:$0xff]
    %v3988 = vld [vmem:[#allocation9 + $0x528] sm:$0xff]
    %v3989 = vld [vmem:[#allocation9 + $0x530] sm:$0xff]
    %v3990 = vld [vmem:[#allocation9 + $0x538] sm:$0xff]
    %v3991 = vld [vmem:[#allocation9 + $0x540] sm:$0xff]
    %v3992 = vld [vmem:[#allocation9 + $0x548] sm:$0xff]
    %v3993 = vld [vmem:[#allocation9 + $0x550] sm:$0xff]
    %v3994 = vld [vmem:[#allocation9 + $0x558] sm:$0xff]
    %v3995 = vld [vmem:[#allocation9 + $0x560] sm:$0xff]
    %v3996 = vld [vmem:[#allocation9 + $0x568] sm:$0xff]
    %v3997 = vld [vmem:[#allocation9 + $0x570] sm:$0xff]
    %v3998 = vld [vmem:[#allocation9 + $0x578] sm:$0xff]
    %v3999 = vld [vmem:[#allocation9 + $0x580] sm:$0xff]
    %v4000 = vld [vmem:[#allocation9 + $0x588] sm:$0xff]
    %v4001 = vld [vmem:[#allocation9 + $0x590] sm:$0xff]
    %v4002 = vld [vmem:[#allocation9 + $0x598] sm:$0xff]
    %v4003 = vld [vmem:[#allocation9 + $0x5a0] sm:$0xff]
    %v4004 = vld [vmem:[#allocation9 + $0x5a8] sm:$0xff]
    %v4005 = vld [vmem:[#allocation9 + $0x5b0] sm:$0xff]
    %v4006 = vld [vmem:[#allocation9 + $0x5b8] sm:$0xff]
    %v4007 = vld [vmem:[#allocation9 + $0x5c0] sm:$0xff]
    %v4008 = vld [vmem:[#allocation9 + $0x5c8] sm:$0xff]
    %v4009 = vld [vmem:[#allocation9 + $0x5d0] sm:$0xff]
    %v4010 = vld [vmem:[#allocation9 + $0x5d8] sm:$0xff]
    %v4011 = vld [vmem:[#allocation9 + $0x5e0] sm:$0xff]
    %v4012 = vld [vmem:[#allocation9 + $0x5e8] sm:$0xff]
    %v4013 = vld [vmem:[#allocation9 + $0x5f0] sm:$0xff]
    %v4014 = vld [vmem:[#allocation9 + $0x5f8] sm:$0xff]
    %v4015 = vld [vmem:[#allocation9 + $0x600] sm:$0xff]
    %v4016 = vld [vmem:[#allocation9 + $0x608] sm:$0xff]
    %v4017 = vld [vmem:[#allocation9 + $0x610] sm:$0xff]
    %v4018 = vld [vmem:[#allocation9 + $0x618] sm:$0xff]
    %v4019 = vld [vmem:[#allocation9 + $0x620] sm:$0xff]
    %v4020 = vld [vmem:[#allocation9 + $0x628] sm:$0xff]
    %v4021 = vld [vmem:[#allocation9 + $0x630] sm:$0xff]
    %v4022 = vld [vmem:[#allocation9 + $0x638] sm:$0xff]
    %v4023 = vld [vmem:[#allocation9 + $0x640] sm:$0xff]
    %v4024 = vld [vmem:[#allocation9 + $0x648] sm:$0xff]
    %v4025 = vld [vmem:[#allocation9 + $0x650] sm:$0xff]
    %v4026 = vld [vmem:[#allocation9 + $0x658] sm:$0xff]
    %v4027 = vld [vmem:[#allocation9 + $0x660] sm:$0xff]
    %v4028 = vld [vmem:[#allocation9 + $0x668] sm:$0xff]
    %v4029 = vld [vmem:[#allocation9 + $0x670] sm:$0xff]
    %v4030 = vld [vmem:[#allocation9 + $0x678] sm:$0xff]
    %v4031 = vld [vmem:[#allocation9 + $0x680] sm:$0xff]
    %v4032 = vld [vmem:[#allocation9 + $0x688] sm:$0xff]
    %v4033 = vld [vmem:[#allocation9 + $0x690] sm:$0xff]
    %v4034 = vld [vmem:[#allocation9 + $0x698] sm:$0xff]
    %v4035 = vld [vmem:[#allocation9 + $0x6a0] sm:$0xff]
    %v4036 = vld [vmem:[#allocation9 + $0x6a8] sm:$0xff]
    %v4037 = vld [vmem:[#allocation9 + $0x6b0] sm:$0xff]
    %v4038 = vld [vmem:[#allocation9 + $0x6b8] sm:$0xff]
    %v4039 = vld [vmem:[#allocation9 + $0x6c0] sm:$0xff]
    %v4040 = vld [vmem:[#allocation9 + $0x6c8] sm:$0xff]
    %v4041 = vld [vmem:[#allocation9 + $0x6d0] sm:$0xff]
    %v4042 = vld [vmem:[#allocation9 + $0x6d8] sm:$0xff]
    %v4043 = vld [vmem:[#allocation9 + $0x6e0] sm:$0xff]
    %v4044 = vld [vmem:[#allocation9 + $0x6e8] sm:$0xff]
    %v4045 = vld [vmem:[#allocation9 + $0x6f0] sm:$0xff]
    %v4046 = vld [vmem:[#allocation9 + $0x6f8] sm:$0xff]
    %v4047 = vld [vmem:[#allocation9 + $0x700] sm:$0xff]
    %v4048 = vld [vmem:[#allocation9 + $0x708] sm:$0xff]
    %v4049 = vld [vmem:[#allocation9 + $0x710] sm:$0xff]
    %v4050 = vld [vmem:[#allocation9 + $0x718] sm:$0xff]
    %v4051 = vld [vmem:[#allocation9 + $0x720] sm:$0xff]
    %v4052 = vld [vmem:[#allocation9 + $0x728] sm:$0xff]
    %v4053 = vld [vmem:[#allocation9 + $0x730] sm:$0xff]
    %v4054 = vld [vmem:[#allocation9 + $0x738] sm:$0xff]
    %v4055 = vld [vmem:[#allocation9 + $0x740] sm:$0xff]
    %v4056 = vld [vmem:[#allocation9 + $0x748] sm:$0xff]
    %v4057 = vld [vmem:[#allocation9 + $0x750] sm:$0xff]
    %v4058 = vld [vmem:[#allocation9 + $0x758] sm:$0xff]
    %v4059 = vld [vmem:[#allocation9 + $0x760] sm:$0xff]
    %v4060 = vld [vmem:[#allocation9 + $0x768] sm:$0xff]
    %v4061 = vld [vmem:[#allocation9 + $0x770] sm:$0xff]
    %v4062 = vld [vmem:[#allocation9 + $0x778] sm:$0xff]
    %v4063 = vld [vmem:[#allocation9 + $0x780] sm:$0xff]
    %v4064 = vld [vmem:[#allocation9 + $0x788] sm:$0xff]
    %v4065 = vld [vmem:[#allocation9 + $0x790] sm:$0xff]
    %v4066 = vld [vmem:[#allocation9 + $0x798] sm:$0xff]
    %v4067 = vld [vmem:[#allocation9 + $0x7a0] sm:$0xff]
    %v4068 = vld [vmem:[#allocation9 + $0x7a8] sm:$0xff]
    %v4069 = vld [vmem:[#allocation9 + $0x7b0] sm:$0xff]
    %v4070 = vld [vmem:[#allocation9 + $0x7b8] sm:$0xff]
    %v4071 = vld [vmem:[#allocation9 + $0x7c0] sm:$0xff]
    %v4072 = vld [vmem:[#allocation9 + $0x7c8] sm:$0xff]
    %v4073 = vld [vmem:[#allocation9 + $0x7d0] sm:$0xff]
    %v4074 = vld [vmem:[#allocation9 + $0x7d8] sm:$0xff]
    %v4075 = vld [vmem:[#allocation9 + $0x7e0] sm:$0xff]
    %v4076 = vld [vmem:[#allocation9 + $0x7e8] sm:$0xff]
    %v4077 = vld [vmem:[#allocation9 + $0x7f0] sm:$0xff]
    %v4078 = vld [vmem:[#allocation9 + $0x7f8] sm:$0xff]
    %v4079 = vld [vmem:[%s11] sm:$0xff]
    %v4081 = vlaneseq
    %v4082 = vshrl.u32 %v4081, 7
    %v4083 = vsub.s32 0, %v4082
    %v4084 = vrot.slane %v4079, %v4083
    %v4085 = vlaneseq
    %v4086 = vshrl.u32 %v4085, 7
    %v4087 = vsub.s32 1, %v4086
    %v4088 = vrot.slane %v4079, %v4087
    %v4089 = vlaneseq
    %v4090 = vshrl.u32 %v4089, 7
    %v4091 = vsub.s32 2, %v4090
    %v4092 = vrot.slane %v4079, %v4091
    %v4093 = vlaneseq
    %v4094 = vshrl.u32 %v4093, 7
    %v4095 = vsub.s32 3, %v4094
    %v4096 = vrot.slane %v4079, %v4095
    %v4097 = vlaneseq
    %v4098 = vshrl.u32 %v4097, 7
    %v4099 = vsub.s32 4, %v4098
    %v4100 = vrot.slane %v4079, %v4099
    %v4101 = vlaneseq
    %v4102 = vshrl.u32 %v4101, 7
    %v4103 = vsub.s32 5, %v4102
    %v4104 = vrot.slane %v4079, %v4103
    %v4105 = vlaneseq
    %v4106 = vshrl.u32 %v4105, 7
    %v4107 = vsub.s32 6, %v4106
    %v4108 = vrot.slane %v4079, %v4107
    %v4109 = vlaneseq
    %v4110 = vshrl.u32 %v4109, 7
    %v4111 = vsub.s32 7, %v4110
    %v4112 = vrot.slane %v4079, %v4111
    %v4377 = vunpack.c.l.b16 %v3823
    %v4378 = vunpack.c.h.b16 %v3823
    %v4379 = vunpack.c.l.b16 %v3824
    %v4380 = vunpack.c.h.b16 %v3824
    %v4381 = vunpack.c.l.b16 %v3825
    %v4382 = vunpack.c.h.b16 %v3825
    %v4383 = vunpack.c.l.b16 %v3826
    %v4384 = vunpack.c.h.b16 %v3826
    %v4385 = vunpack.c.l.b16 %v3827
    %v4386 = vunpack.c.h.b16 %v3827
    %v4387 = vunpack.c.l.b16 %v3828
    %v4388 = vunpack.c.h.b16 %v3828
    %v4389 = vunpack.c.l.b16 %v3829
    %v4390 = vunpack.c.h.b16 %v3829
    %v4391 = vunpack.c.l.b16 %v3830
    %v4392 = vunpack.c.h.b16 %v3830
    %v4393 = vunpack.c.l.b16 %v3831
    %v4394 = vunpack.c.h.b16 %v3831
    %v4395 = vunpack.c.l.b16 %v3832
    %v4396 = vunpack.c.h.b16 %v3832
    %v4397 = vunpack.c.l.b16 %v3833
    %v4398 = vunpack.c.h.b16 %v3833
    %v4399 = vunpack.c.l.b16 %v3834
    %v4400 = vunpack.c.h.b16 %v3834
    %v4401 = vunpack.c.l.b16 %v3835
    %v4402 = vunpack.c.h.b16 %v3835
    %v4403 = vunpack.c.l.b16 %v3836
    %v4404 = vunpack.c.h.b16 %v3836
    %v4405 = vunpack.c.l.b16 %v3837
    %v4406 = vunpack.c.h.b16 %v3837
    %v4407 = vunpack.c.l.b16 %v3838
    %v4408 = vunpack.c.h.b16 %v3838
    %v4409 = vunpack.c.l.b16 %v3839
    %v4410 = vunpack.c.h.b16 %v3839
    %v4411 = vunpack.c.l.b16 %v3840
    %v4412 = vunpack.c.h.b16 %v3840
    %v4413 = vunpack.c.l.b16 %v3841
    %v4414 = vunpack.c.h.b16 %v3841
    %v4415 = vunpack.c.l.b16 %v3842
    %v4416 = vunpack.c.h.b16 %v3842
    %v4417 = vunpack.c.l.b16 %v3843
    %v4418 = vunpack.c.h.b16 %v3843
    %v4419 = vunpack.c.l.b16 %v3844
    %v4420 = vunpack.c.h.b16 %v3844
    %v4421 = vunpack.c.l.b16 %v3845
    %v4422 = vunpack.c.h.b16 %v3845
    %v4423 = vunpack.c.l.b16 %v3846
    %v4424 = vunpack.c.h.b16 %v3846
    %v4425 = vunpack.c.l.b16 %v3847
    %v4426 = vunpack.c.h.b16 %v3847
    %v4427 = vunpack.c.l.b16 %v3848
    %v4428 = vunpack.c.h.b16 %v3848
    %v4429 = vunpack.c.l.b16 %v3849
    %v4430 = vunpack.c.h.b16 %v3849
    %v4431 = vunpack.c.l.b16 %v3850
    %v4432 = vunpack.c.h.b16 %v3850
    %v4433 = vunpack.c.l.b16 %v3851
    %v4434 = vunpack.c.h.b16 %v3851
    %v4435 = vunpack.c.l.b16 %v3852
    %v4436 = vunpack.c.h.b16 %v3852
    %v4437 = vunpack.c.l.b16 %v3853
    %v4438 = vunpack.c.h.b16 %v3853
    %v4439 = vunpack.c.l.b16 %v3854
    %v4440 = vunpack.c.h.b16 %v3854
    %v4441 = vunpack.c.l.b16 %v3855
    %v4442 = vunpack.c.h.b16 %v3855
    %v4443 = vunpack.c.l.b16 %v3856
    %v4444 = vunpack.c.h.b16 %v3856
    %v4445 = vunpack.c.l.b16 %v3857
    %v4446 = vunpack.c.h.b16 %v3857
    %v4447 = vunpack.c.l.b16 %v3858
    %v4448 = vunpack.c.h.b16 %v3858
    %v4449 = vunpack.c.l.b16 %v3859
    %v4450 = vunpack.c.h.b16 %v3859
    %v4451 = vunpack.c.l.b16 %v3860
    %v4452 = vunpack.c.h.b16 %v3860
    %v4453 = vunpack.c.l.b16 %v3861
    %v4454 = vunpack.c.h.b16 %v3861
    %v4455 = vunpack.c.l.b16 %v3862
    %v4456 = vunpack.c.h.b16 %v3862
    %v4457 = vunpack.c.l.b16 %v3863
    %v4458 = vunpack.c.h.b16 %v3863
    %v4459 = vunpack.c.l.b16 %v3864
    %v4460 = vunpack.c.h.b16 %v3864
    %v4461 = vunpack.c.l.b16 %v3865
    %v4462 = vunpack.c.h.b16 %v3865
    %v4463 = vunpack.c.l.b16 %v3866
    %v4464 = vunpack.c.h.b16 %v3866
    %v4465 = vunpack.c.l.b16 %v3867
    %v4466 = vunpack.c.h.b16 %v3867
    %v4467 = vunpack.c.l.b16 %v3868
    %v4468 = vunpack.c.h.b16 %v3868
    %v4469 = vunpack.c.l.b16 %v3869
    %v4470 = vunpack.c.h.b16 %v3869
    %v4471 = vunpack.c.l.b16 %v3870
    %v4472 = vunpack.c.h.b16 %v3870
    %v4473 = vunpack.c.l.b16 %v3871
    %v4474 = vunpack.c.h.b16 %v3871
    %v4475 = vunpack.c.l.b16 %v3872
    %v4476 = vunpack.c.h.b16 %v3872
    %v4477 = vunpack.c.l.b16 %v3873
    %v4478 = vunpack.c.h.b16 %v3873
    %v4479 = vunpack.c.l.b16 %v3874
    %v4480 = vunpack.c.h.b16 %v3874
    %v4481 = vunpack.c.l.b16 %v3875
    %v4482 = vunpack.c.h.b16 %v3875
    %v4483 = vunpack.c.l.b16 %v3876
    %v4484 = vunpack.c.h.b16 %v3876
    %v4485 = vunpack.c.l.b16 %v3877
    %v4486 = vunpack.c.h.b16 %v3877
    %v4487 = vunpack.c.l.b16 %v3878
    %v4488 = vunpack.c.h.b16 %v3878
    %v4489 = vunpack.c.l.b16 %v3879
    %v4490 = vunpack.c.h.b16 %v3879
    %v4491 = vunpack.c.l.b16 %v3880
    %v4492 = vunpack.c.h.b16 %v3880
    %v4493 = vunpack.c.l.b16 %v3881
    %v4494 = vunpack.c.h.b16 %v3881
    %v4495 = vunpack.c.l.b16 %v3882
    %v4496 = vunpack.c.h.b16 %v3882
    %v4497 = vunpack.c.l.b16 %v3883
    %v4498 = vunpack.c.h.b16 %v3883
    %v4499 = vunpack.c.l.b16 %v3884
    %v4500 = vunpack.c.h.b16 %v3884
    %v4501 = vunpack.c.l.b16 %v3885
    %v4502 = vunpack.c.h.b16 %v3885
    %v4503 = vunpack.c.l.b16 %v3886
    %v4504 = vunpack.c.h.b16 %v3886
    %v4505 = vunpack.c.l.b16 %v3887
    %v4506 = vunpack.c.h.b16 %v3887
    %v4507 = vunpack.c.l.b16 %v3888
    %v4508 = vunpack.c.h.b16 %v3888
    %v4509 = vunpack.c.l.b16 %v3889
    %v4510 = vunpack.c.h.b16 %v3889
    %v4511 = vunpack.c.l.b16 %v3890
    %v4512 = vunpack.c.h.b16 %v3890
    %v4513 = vunpack.c.l.b16 %v3891
    %v4514 = vunpack.c.h.b16 %v3891
    %v4515 = vunpack.c.l.b16 %v3892
    %v4516 = vunpack.c.h.b16 %v3892
    %v4517 = vunpack.c.l.b16 %v3893
    %v4518 = vunpack.c.h.b16 %v3893
    %v4519 = vunpack.c.l.b16 %v3894
    %v4520 = vunpack.c.h.b16 %v3894
    %v4521 = vunpack.c.l.b16 %v3895
    %v4522 = vunpack.c.h.b16 %v3895
    %v4523 = vunpack.c.l.b16 %v3896
    %v4524 = vunpack.c.h.b16 %v3896
    %v4525 = vunpack.c.l.b16 %v3897
    %v4526 = vunpack.c.h.b16 %v3897
    %v4527 = vunpack.c.l.b16 %v3898
    %v4528 = vunpack.c.h.b16 %v3898
    %v4529 = vunpack.c.l.b16 %v3899
    %v4530 = vunpack.c.h.b16 %v3899
    %v4531 = vunpack.c.l.b16 %v3900
    %v4532 = vunpack.c.h.b16 %v3900
    %v4533 = vunpack.c.l.b16 %v3901
    %v4534 = vunpack.c.h.b16 %v3901
    %v4535 = vunpack.c.l.b16 %v3902
    %v4536 = vunpack.c.h.b16 %v3902
    %v4537 = vunpack.c.l.b16 %v3903
    %v4538 = vunpack.c.h.b16 %v3903
    %v4539 = vunpack.c.l.b16 %v3904
    %v4540 = vunpack.c.h.b16 %v3904
    %v4541 = vunpack.c.l.b16 %v3905
    %v4542 = vunpack.c.h.b16 %v3905
    %v4543 = vunpack.c.l.b16 %v3906
    %v4544 = vunpack.c.h.b16 %v3906
    %v4545 = vunpack.c.l.b16 %v3907
    %v4546 = vunpack.c.h.b16 %v3907
    %v4547 = vunpack.c.l.b16 %v3908
    %v4548 = vunpack.c.h.b16 %v3908
    %v4549 = vunpack.c.l.b16 %v3909
    %v4550 = vunpack.c.h.b16 %v3909
    %v4551 = vunpack.c.l.b16 %v3910
    %v4552 = vunpack.c.h.b16 %v3910
    %v4553 = vunpack.c.l.b16 %v3911
    %v4554 = vunpack.c.h.b16 %v3911
    %v4555 = vunpack.c.l.b16 %v3912
    %v4556 = vunpack.c.h.b16 %v3912
    %v4557 = vunpack.c.l.b16 %v3913
    %v4558 = vunpack.c.h.b16 %v3913
    %v4559 = vunpack.c.l.b16 %v3914
    %v4560 = vunpack.c.h.b16 %v3914
    %v4561 = vunpack.c.l.b16 %v3915
    %v4562 = vunpack.c.h.b16 %v3915
    %v4563 = vunpack.c.l.b16 %v3916
    %v4564 = vunpack.c.h.b16 %v3916
    %v4565 = vunpack.c.l.b16 %v3917
    %v4566 = vunpack.c.h.b16 %v3917
    %v4567 = vunpack.c.l.b16 %v3918
    %v4568 = vunpack.c.h.b16 %v3918
    %v4569 = vunpack.c.l.b16 %v3919
    %v4570 = vunpack.c.h.b16 %v3919
    %v4571 = vunpack.c.l.b16 %v3920
    %v4572 = vunpack.c.h.b16 %v3920
    %v4573 = vunpack.c.l.b16 %v3921
    %v4574 = vunpack.c.h.b16 %v3921
    %v4575 = vunpack.c.l.b16 %v3922
    %v4576 = vunpack.c.h.b16 %v3922
    %v4577 = vunpack.c.l.b16 %v3923
    %v4578 = vunpack.c.h.b16 %v3923
    %v4579 = vunpack.c.l.b16 %v3924
    %v4580 = vunpack.c.h.b16 %v3924
    %v4581 = vunpack.c.l.b16 %v3925
    %v4582 = vunpack.c.h.b16 %v3925
    %v4583 = vunpack.c.l.b16 %v3926
    %v4584 = vunpack.c.h.b16 %v3926
    %v4585 = vunpack.c.l.b16 %v3927
    %v4586 = vunpack.c.h.b16 %v3927
    %v4587 = vunpack.c.l.b16 %v3928
    %v4588 = vunpack.c.h.b16 %v3928
    %v4589 = vunpack.c.l.b16 %v3929
    %v4590 = vunpack.c.h.b16 %v3929
    %v4591 = vunpack.c.l.b16 %v3930
    %v4592 = vunpack.c.h.b16 %v3930
    %v4593 = vunpack.c.l.b16 %v3931
    %v4594 = vunpack.c.h.b16 %v3931
    %v4595 = vunpack.c.l.b16 %v3932
    %v4596 = vunpack.c.h.b16 %v3932
    %v4597 = vunpack.c.l.b16 %v3933
    %v4598 = vunpack.c.h.b16 %v3933
    %v4599 = vunpack.c.l.b16 %v3934
    %v4600 = vunpack.c.h.b16 %v3934
    %v4601 = vunpack.c.l.b16 %v3935
    %v4602 = vunpack.c.h.b16 %v3935
    %v4603 = vunpack.c.l.b16 %v3936
    %v4604 = vunpack.c.h.b16 %v3936
    %v4605 = vunpack.c.l.b16 %v3937
    %v4606 = vunpack.c.h.b16 %v3937
    %v4607 = vunpack.c.l.b16 %v3938
    %v4608 = vunpack.c.h.b16 %v3938
    %v4609 = vunpack.c.l.b16 %v3939
    %v4610 = vunpack.c.h.b16 %v3939
    %v4611 = vunpack.c.l.b16 %v3940
    %v4612 = vunpack.c.h.b16 %v3940
    %v4613 = vunpack.c.l.b16 %v3941
    %v4614 = vunpack.c.h.b16 %v3941
    %v4615 = vunpack.c.l.b16 %v3942
    %v4616 = vunpack.c.h.b16 %v3942
    %v4617 = vunpack.c.l.b16 %v3943
    %v4618 = vunpack.c.h.b16 %v3943
    %v4619 = vunpack.c.l.b16 %v3944
    %v4620 = vunpack.c.h.b16 %v3944
    %v4621 = vunpack.c.l.b16 %v3945
    %v4622 = vunpack.c.h.b16 %v3945
    %v4623 = vunpack.c.l.b16 %v3946
    %v4624 = vunpack.c.h.b16 %v3946
    %v4625 = vunpack.c.l.b16 %v3947
    %v4626 = vunpack.c.h.b16 %v3947
    %v4627 = vunpack.c.l.b16 %v3948
    %v4628 = vunpack.c.h.b16 %v3948
    %v4629 = vunpack.c.l.b16 %v3949
    %v4630 = vunpack.c.h.b16 %v3949
    %v4631 = vunpack.c.l.b16 %v3950
    %v4632 = vunpack.c.h.b16 %v3950
    %v4633 = vunpack.c.l.b16 %v3951
    %v4634 = vunpack.c.h.b16 %v3951
    %v4635 = vunpack.c.l.b16 %v3952
    %v4636 = vunpack.c.h.b16 %v3952
    %v4637 = vunpack.c.l.b16 %v3953
    %v4638 = vunpack.c.h.b16 %v3953
    %v4639 = vunpack.c.l.b16 %v3954
    %v4640 = vunpack.c.h.b16 %v3954
    %v4641 = vunpack.c.l.b16 %v3955
    %v4642 = vunpack.c.h.b16 %v3955
    %v4643 = vunpack.c.l.b16 %v3956
    %v4644 = vunpack.c.h.b16 %v3956
    %v4645 = vunpack.c.l.b16 %v3957
    %v4646 = vunpack.c.h.b16 %v3957
    %v4647 = vunpack.c.l.b16 %v3958
    %v4648 = vunpack.c.h.b16 %v3958
    %v4649 = vunpack.c.l.b16 %v3959
    %v4650 = vunpack.c.h.b16 %v3959
    %v4651 = vunpack.c.l.b16 %v3960
    %v4652 = vunpack.c.h.b16 %v3960
    %v4653 = vunpack.c.l.b16 %v3961
    %v4654 = vunpack.c.h.b16 %v3961
    %v4655 = vunpack.c.l.b16 %v3962
    %v4656 = vunpack.c.h.b16 %v3962
    %v4657 = vunpack.c.l.b16 %v3963
    %v4658 = vunpack.c.h.b16 %v3963
    %v4659 = vunpack.c.l.b16 %v3964
    %v4660 = vunpack.c.h.b16 %v3964
    %v4661 = vunpack.c.l.b16 %v3965
    %v4662 = vunpack.c.h.b16 %v3965
    %v4663 = vunpack.c.l.b16 %v3966
    %v4664 = vunpack.c.h.b16 %v3966
    %v4665 = vunpack.c.l.b16 %v3967
    %v4666 = vunpack.c.h.b16 %v3967
    %v4667 = vunpack.c.l.b16 %v3968
    %v4668 = vunpack.c.h.b16 %v3968
    %v4669 = vunpack.c.l.b16 %v3969
    %v4670 = vunpack.c.h.b16 %v3969
    %v4671 = vunpack.c.l.b16 %v3970
    %v4672 = vunpack.c.h.b16 %v3970
    %v4673 = vunpack.c.l.b16 %v3971
    %v4674 = vunpack.c.h.b16 %v3971
    %v4675 = vunpack.c.l.b16 %v3972
    %v4676 = vunpack.c.h.b16 %v3972
    %v4677 = vunpack.c.l.b16 %v3973
    %v4678 = vunpack.c.h.b16 %v3973
    %v4679 = vunpack.c.l.b16 %v3974
    %v4680 = vunpack.c.h.b16 %v3974
    %v4681 = vunpack.c.l.b16 %v3975
    %v4682 = vunpack.c.h.b16 %v3975
    %v4683 = vunpack.c.l.b16 %v3976
    %v4684 = vunpack.c.h.b16 %v3976
    %v4685 = vunpack.c.l.b16 %v3977
    %v4686 = vunpack.c.h.b16 %v3977
    %v4687 = vunpack.c.l.b16 %v3978
    %v4688 = vunpack.c.h.b16 %v3978
    %v4689 = vunpack.c.l.b16 %v3979
    %v4690 = vunpack.c.h.b16 %v3979
    %v4691 = vunpack.c.l.b16 %v3980
    %v4692 = vunpack.c.h.b16 %v3980
    %v4693 = vunpack.c.l.b16 %v3981
    %v4694 = vunpack.c.h.b16 %v3981
    %v4695 = vunpack.c.l.b16 %v3982
    %v4696 = vunpack.c.h.b16 %v3982
    %v4697 = vunpack.c.l.b16 %v3983
    %v4698 = vunpack.c.h.b16 %v3983
    %v4699 = vunpack.c.l.b16 %v3984
    %v4700 = vunpack.c.h.b16 %v3984
    %v4701 = vunpack.c.l.b16 %v3985
    %v4702 = vunpack.c.h.b16 %v3985
    %v4703 = vunpack.c.l.b16 %v3986
    %v4704 = vunpack.c.h.b16 %v3986
    %v4705 = vunpack.c.l.b16 %v3987
    %v4706 = vunpack.c.h.b16 %v3987
    %v4707 = vunpack.c.l.b16 %v3988
    %v4708 = vunpack.c.h.b16 %v3988
    %v4709 = vunpack.c.l.b16 %v3989
    %v4710 = vunpack.c.h.b16 %v3989
    %v4711 = vunpack.c.l.b16 %v3990
    %v4712 = vunpack.c.h.b16 %v3990
    %v4713 = vunpack.c.l.b16 %v3991
    %v4714 = vunpack.c.h.b16 %v3991
    %v4715 = vunpack.c.l.b16 %v3992
    %v4716 = vunpack.c.h.b16 %v3992
    %v4717 = vunpack.c.l.b16 %v3993
    %v4718 = vunpack.c.h.b16 %v3993
    %v4719 = vunpack.c.l.b16 %v3994
    %v4720 = vunpack.c.h.b16 %v3994
    %v4721 = vunpack.c.l.b16 %v3995
    %v4722 = vunpack.c.h.b16 %v3995
    %v4723 = vunpack.c.l.b16 %v3996
    %v4724 = vunpack.c.h.b16 %v3996
    %v4725 = vunpack.c.l.b16 %v3997
    %v4726 = vunpack.c.h.b16 %v3997
    %v4727 = vunpack.c.l.b16 %v3998
    %v4728 = vunpack.c.h.b16 %v3998
    %v4729 = vunpack.c.l.b16 %v3999
    %v4730 = vunpack.c.h.b16 %v3999
    %v4731 = vunpack.c.l.b16 %v4000
    %v4732 = vunpack.c.h.b16 %v4000
    %v4733 = vunpack.c.l.b16 %v4001
    %v4734 = vunpack.c.h.b16 %v4001
    %v4735 = vunpack.c.l.b16 %v4002
    %v4736 = vunpack.c.h.b16 %v4002
    %v4737 = vunpack.c.l.b16 %v4003
    %v4738 = vunpack.c.h.b16 %v4003
    %v4739 = vunpack.c.l.b16 %v4004
    %v4740 = vunpack.c.h.b16 %v4004
    %v4741 = vunpack.c.l.b16 %v4005
    %v4742 = vunpack.c.h.b16 %v4005
    %v4743 = vunpack.c.l.b16 %v4006
    %v4744 = vunpack.c.h.b16 %v4006
    %v4745 = vunpack.c.l.b16 %v4007
    %v4746 = vunpack.c.h.b16 %v4007
    %v4747 = vunpack.c.l.b16 %v4008
    %v4748 = vunpack.c.h.b16 %v4008
    %v4749 = vunpack.c.l.b16 %v4009
    %v4750 = vunpack.c.h.b16 %v4009
    %v4751 = vunpack.c.l.b16 %v4010
    %v4752 = vunpack.c.h.b16 %v4010
    %v4753 = vunpack.c.l.b16 %v4011
    %v4754 = vunpack.c.h.b16 %v4011
    %v4755 = vunpack.c.l.b16 %v4012
    %v4756 = vunpack.c.h.b16 %v4012
    %v4757 = vunpack.c.l.b16 %v4013
    %v4758 = vunpack.c.h.b16 %v4013
    %v4759 = vunpack.c.l.b16 %v4014
    %v4760 = vunpack.c.h.b16 %v4014
    %v4761 = vunpack.c.l.b16 %v4015
    %v4762 = vunpack.c.h.b16 %v4015
    %v4763 = vunpack.c.l.b16 %v4016
    %v4764 = vunpack.c.h.b16 %v4016
    %v4765 = vunpack.c.l.b16 %v4017
    %v4766 = vunpack.c.h.b16 %v4017
    %v4767 = vunpack.c.l.b16 %v4018
    %v4768 = vunpack.c.h.b16 %v4018
    %v4769 = vunpack.c.l.b16 %v4019
    %v4770 = vunpack.c.h.b16 %v4019
    %v4771 = vunpack.c.l.b16 %v4020
    %v4772 = vunpack.c.h.b16 %v4020
    %v4773 = vunpack.c.l.b16 %v4021
    %v4774 = vunpack.c.h.b16 %v4021
    %v4775 = vunpack.c.l.b16 %v4022
    %v4776 = vunpack.c.h.b16 %v4022
    %v4777 = vunpack.c.l.b16 %v4023
    %v4778 = vunpack.c.h.b16 %v4023
    %v4779 = vunpack.c.l.b16 %v4024
    %v4780 = vunpack.c.h.b16 %v4024
    %v4781 = vunpack.c.l.b16 %v4025
    %v4782 = vunpack.c.h.b16 %v4025
    %v4783 = vunpack.c.l.b16 %v4026
    %v4784 = vunpack.c.h.b16 %v4026
    %v4785 = vunpack.c.l.b16 %v4027
    %v4786 = vunpack.c.h.b16 %v4027
    %v4787 = vunpack.c.l.b16 %v4028
    %v4788 = vunpack.c.h.b16 %v4028
    %v4789 = vunpack.c.l.b16 %v4029
    %v4790 = vunpack.c.h.b16 %v4029
    %v4791 = vunpack.c.l.b16 %v4030
    %v4792 = vunpack.c.h.b16 %v4030
    %v4793 = vunpack.c.l.b16 %v4031
    %v4794 = vunpack.c.h.b16 %v4031
    %v4795 = vunpack.c.l.b16 %v4032
    %v4796 = vunpack.c.h.b16 %v4032
    %v4797 = vunpack.c.l.b16 %v4033
    %v4798 = vunpack.c.h.b16 %v4033
    %v4799 = vunpack.c.l.b16 %v4034
    %v4800 = vunpack.c.h.b16 %v4034
    %v4801 = vunpack.c.l.b16 %v4035
    %v4802 = vunpack.c.h.b16 %v4035
    %v4803 = vunpack.c.l.b16 %v4036
    %v4804 = vunpack.c.h.b16 %v4036
    %v4805 = vunpack.c.l.b16 %v4037
    %v4806 = vunpack.c.h.b16 %v4037
    %v4807 = vunpack.c.l.b16 %v4038
    %v4808 = vunpack.c.h.b16 %v4038
    %v4809 = vunpack.c.l.b16 %v4039
    %v4810 = vunpack.c.h.b16 %v4039
    %v4811 = vunpack.c.l.b16 %v4040
    %v4812 = vunpack.c.h.b16 %v4040
    %v4813 = vunpack.c.l.b16 %v4041
    %v4814 = vunpack.c.h.b16 %v4041
    %v4815 = vunpack.c.l.b16 %v4042
    %v4816 = vunpack.c.h.b16 %v4042
    %v4817 = vunpack.c.l.b16 %v4043
    %v4818 = vunpack.c.h.b16 %v4043
    %v4819 = vunpack.c.l.b16 %v4044
    %v4820 = vunpack.c.h.b16 %v4044
    %v4821 = vunpack.c.l.b16 %v4045
    %v4822 = vunpack.c.h.b16 %v4045
    %v4823 = vunpack.c.l.b16 %v4046
    %v4824 = vunpack.c.h.b16 %v4046
    %v4825 = vunpack.c.l.b16 %v4047
    %v4826 = vunpack.c.h.b16 %v4047
    %v4827 = vunpack.c.l.b16 %v4048
    %v4828 = vunpack.c.h.b16 %v4048
    %v4829 = vunpack.c.l.b16 %v4049
    %v4830 = vunpack.c.h.b16 %v4049
    %v4831 = vunpack.c.l.b16 %v4050
    %v4832 = vunpack.c.h.b16 %v4050
    %v4833 = vunpack.c.l.b16 %v4051
    %v4834 = vunpack.c.h.b16 %v4051
    %v4835 = vunpack.c.l.b16 %v4052
    %v4836 = vunpack.c.h.b16 %v4052
    %v4837 = vunpack.c.l.b16 %v4053
    %v4838 = vunpack.c.h.b16 %v4053
    %v4839 = vunpack.c.l.b16 %v4054
    %v4840 = vunpack.c.h.b16 %v4054
    %v4841 = vunpack.c.l.b16 %v4055
    %v4842 = vunpack.c.h.b16 %v4055
    %v4843 = vunpack.c.l.b16 %v4056
    %v4844 = vunpack.c.h.b16 %v4056
    %v4845 = vunpack.c.l.b16 %v4057
    %v4846 = vunpack.c.h.b16 %v4057
    %v4847 = vunpack.c.l.b16 %v4058
    %v4848 = vunpack.c.h.b16 %v4058
    %v4849 = vunpack.c.l.b16 %v4059
    %v4850 = vunpack.c.h.b16 %v4059
    %v4851 = vunpack.c.l.b16 %v4060
    %v4852 = vunpack.c.h.b16 %v4060
    %v4853 = vunpack.c.l.b16 %v4061
    %v4854 = vunpack.c.h.b16 %v4061
    %v4855 = vunpack.c.l.b16 %v4062
    %v4856 = vunpack.c.h.b16 %v4062
    %v4857 = vunpack.c.l.b16 %v4063
    %v4858 = vunpack.c.h.b16 %v4063
    %v4859 = vunpack.c.l.b16 %v4064
    %v4860 = vunpack.c.h.b16 %v4064
    %v4861 = vunpack.c.l.b16 %v4065
    %v4862 = vunpack.c.h.b16 %v4065
    %v4863 = vunpack.c.l.b16 %v4066
    %v4864 = vunpack.c.h.b16 %v4066
    %v4865 = vunpack.c.l.b16 %v4067
    %v4866 = vunpack.c.h.b16 %v4067
    %v4867 = vunpack.c.l.b16 %v4068
    %v4868 = vunpack.c.h.b16 %v4068
    %v4869 = vunpack.c.l.b16 %v4069
    %v4870 = vunpack.c.h.b16 %v4069
    %v4871 = vunpack.c.l.b16 %v4070
    %v4872 = vunpack.c.h.b16 %v4070
    %v4873 = vunpack.c.l.b16 %v4071
    %v4874 = vunpack.c.h.b16 %v4071
    %v4875 = vunpack.c.l.b16 %v4072
    %v4876 = vunpack.c.h.b16 %v4072
    %v4877 = vunpack.c.l.b16 %v4073
    %v4878 = vunpack.c.h.b16 %v4073
    %v4879 = vunpack.c.l.b16 %v4074
    %v4880 = vunpack.c.h.b16 %v4074
    %v4881 = vunpack.c.l.b16 %v4075
    %v4882 = vunpack.c.h.b16 %v4075
    %v4883 = vunpack.c.l.b16 %v4076
    %v4884 = vunpack.c.h.b16 %v4076
    %v4885 = vunpack.c.l.b16 %v4077
    %v4886 = vunpack.c.h.b16 %v4077
    %v4887 = vunpack.c.l.b16 %v4078
    %v4888 = vunpack.c.h.b16 %v4078
    %v4889 = vpack.c.b16 %v4385, %v4377
    %v4890 = vpack.c.b16 %v4386, %v4378
    %v4891 = vpack.c.b16 %v4387, %v4379
    %v4892 = vpack.c.b16 %v4388, %v4380
    %v4893 = vpack.c.b16 %v4389, %v4381
    %v4894 = vpack.c.b16 %v4390, %v4382
    %v4895 = vpack.c.b16 %v4391, %v4383
    %v4896 = vpack.c.b16 %v4392, %v4384
    %v4897 = vpack.c.b16 %v4401, %v4393
    %v4898 = vpack.c.b16 %v4402, %v4394
    %v4899 = vpack.c.b16 %v4403, %v4395
    %v4900 = vpack.c.b16 %v4404, %v4396
    %v4901 = vpack.c.b16 %v4405, %v4397
    %v4902 = vpack.c.b16 %v4406, %v4398
    %v4903 = vpack.c.b16 %v4407, %v4399
    %v4904 = vpack.c.b16 %v4408, %v4400
    %v4905 = vpack.c.b16 %v4417, %v4409
    %v4906 = vpack.c.b16 %v4418, %v4410
    %v4907 = vpack.c.b16 %v4419, %v4411
    %v4908 = vpack.c.b16 %v4420, %v4412
    %v4909 = vpack.c.b16 %v4421, %v4413
    %v4910 = vpack.c.b16 %v4422, %v4414
    %v4911 = vpack.c.b16 %v4423, %v4415
    %v4912 = vpack.c.b16 %v4424, %v4416
    %v4913 = vpack.c.b16 %v4433, %v4425
    %v4914 = vpack.c.b16 %v4434, %v4426
    %v4915 = vpack.c.b16 %v4435, %v4427
    %v4916 = vpack.c.b16 %v4436, %v4428
    %v4917 = vpack.c.b16 %v4437, %v4429
    %v4918 = vpack.c.b16 %v4438, %v4430
    %v4919 = vpack.c.b16 %v4439, %v4431
    %v4920 = vpack.c.b16 %v4440, %v4432
    %v4921 = vpack.c.b16 %v4449, %v4441
    %v4922 = vpack.c.b16 %v4450, %v4442
    %v4923 = vpack.c.b16 %v4451, %v4443
    %v4924 = vpack.c.b16 %v4452, %v4444
    %v4925 = vpack.c.b16 %v4453, %v4445
    %v4926 = vpack.c.b16 %v4454, %v4446
    %v4927 = vpack.c.b16 %v4455, %v4447
    %v4928 = vpack.c.b16 %v4456, %v4448
    %v4929 = vpack.c.b16 %v4465, %v4457
    %v4930 = vpack.c.b16 %v4466, %v4458
    %v4931 = vpack.c.b16 %v4467, %v4459
    %v4932 = vpack.c.b16 %v4468, %v4460
    %v4933 = vpack.c.b16 %v4469, %v4461
    %v4934 = vpack.c.b16 %v4470, %v4462
    %v4935 = vpack.c.b16 %v4471, %v4463
    %v4936 = vpack.c.b16 %v4472, %v4464
    %v4937 = vpack.c.b16 %v4481, %v4473
    %v4938 = vpack.c.b16 %v4482, %v4474
    %v4939 = vpack.c.b16 %v4483, %v4475
    %v4940 = vpack.c.b16 %v4484, %v4476
    %v4941 = vpack.c.b16 %v4485, %v4477
    %v4942 = vpack.c.b16 %v4486, %v4478
    %v4943 = vpack.c.b16 %v4487, %v4479
    %v4944 = vpack.c.b16 %v4488, %v4480
    %v4945 = vpack.c.b16 %v4497, %v4489
    %v4946 = vpack.c.b16 %v4498, %v4490
    %v4947 = vpack.c.b16 %v4499, %v4491
    %v4948 = vpack.c.b16 %v4500, %v4492
    %v4949 = vpack.c.b16 %v4501, %v4493
    %v4950 = vpack.c.b16 %v4502, %v4494
    %v4951 = vpack.c.b16 %v4503, %v4495
    %v4952 = vpack.c.b16 %v4504, %v4496
    %v4953 = vpack.c.b16 %v4513, %v4505
    %v4954 = vpack.c.b16 %v4514, %v4506
    %v4955 = vpack.c.b16 %v4515, %v4507
    %v4956 = vpack.c.b16 %v4516, %v4508
    %v4957 = vpack.c.b16 %v4517, %v4509
    %v4958 = vpack.c.b16 %v4518, %v4510
    %v4959 = vpack.c.b16 %v4519, %v4511
    %v4960 = vpack.c.b16 %v4520, %v4512
    %v4961 = vpack.c.b16 %v4529, %v4521
    %v4962 = vpack.c.b16 %v4530, %v4522
    %v4963 = vpack.c.b16 %v4531, %v4523
    %v4964 = vpack.c.b16 %v4532, %v4524
    %v4965 = vpack.c.b16 %v4533, %v4525
    %v4966 = vpack.c.b16 %v4534, %v4526
    %v4967 = vpack.c.b16 %v4535, %v4527
    %v4968 = vpack.c.b16 %v4536, %v4528
    %v4969 = vpack.c.b16 %v4545, %v4537
    %v4970 = vpack.c.b16 %v4546, %v4538
    %v4971 = vpack.c.b16 %v4547, %v4539
    %v4972 = vpack.c.b16 %v4548, %v4540
    %v4973 = vpack.c.b16 %v4549, %v4541
    %v4974 = vpack.c.b16 %v4550, %v4542
    %v4975 = vpack.c.b16 %v4551, %v4543
    %v4976 = vpack.c.b16 %v4552, %v4544
    %v4977 = vpack.c.b16 %v4561, %v4553
    %v4978 = vpack.c.b16 %v4562, %v4554
    %v4979 = vpack.c.b16 %v4563, %v4555
    %v4980 = vpack.c.b16 %v4564, %v4556
    %v4981 = vpack.c.b16 %v4565, %v4557
    %v4982 = vpack.c.b16 %v4566, %v4558
    %v4983 = vpack.c.b16 %v4567, %v4559
    %v4984 = vpack.c.b16 %v4568, %v4560
    %v4985 = vpack.c.b16 %v4577, %v4569
    %v4986 = vpack.c.b16 %v4578, %v4570
    %v4987 = vpack.c.b16 %v4579, %v4571
    %v4988 = vpack.c.b16 %v4580, %v4572
    %v4989 = vpack.c.b16 %v4581, %v4573
    %v4990 = vpack.c.b16 %v4582, %v4574
    %v4991 = vpack.c.b16 %v4583, %v4575
    %v4992 = vpack.c.b16 %v4584, %v4576
    %v4993 = vpack.c.b16 %v4593, %v4585
    %v4994 = vpack.c.b16 %v4594, %v4586
    %v4995 = vpack.c.b16 %v4595, %v4587
    %v4996 = vpack.c.b16 %v4596, %v4588
    %v4997 = vpack.c.b16 %v4597, %v4589
    %v4998 = vpack.c.b16 %v4598, %v4590
    %v4999 = vpack.c.b16 %v4599, %v4591
    %v5000 = vpack.c.b16 %v4600, %v4592
    %v5001 = vpack.c.b16 %v4609, %v4601
    %v5002 = vpack.c.b16 %v4610, %v4602
    %v5003 = vpack.c.b16 %v4611, %v4603
    %v5004 = vpack.c.b16 %v4612, %v4604
    %v5005 = vpack.c.b16 %v4613, %v4605
    %v5006 = vpack.c.b16 %v4614, %v4606
    %v5007 = vpack.c.b16 %v4615, %v4607
    %v5008 = vpack.c.b16 %v4616, %v4608
    %v5009 = vpack.c.b16 %v4625, %v4617
    %v5010 = vpack.c.b16 %v4626, %v4618
    %v5011 = vpack.c.b16 %v4627, %v4619
    %v5012 = vpack.c.b16 %v4628, %v4620
    %v5013 = vpack.c.b16 %v4629, %v4621
    %v5014 = vpack.c.b16 %v4630, %v4622
    %v5015 = vpack.c.b16 %v4631, %v4623
    %v5016 = vpack.c.b16 %v4632, %v4624
    %v5017 = vpack.c.b16 %v4641, %v4633
    %v5018 = vpack.c.b16 %v4642, %v4634
    %v5019 = vpack.c.b16 %v4643, %v4635
    %v5020 = vpack.c.b16 %v4644, %v4636
    %v5021 = vpack.c.b16 %v4645, %v4637
    %v5022 = vpack.c.b16 %v4646, %v4638
    %v5023 = vpack.c.b16 %v4647, %v4639
    %v5024 = vpack.c.b16 %v4648, %v4640
    %v5025 = vpack.c.b16 %v4657, %v4649
    %v5026 = vpack.c.b16 %v4658, %v4650
    %v5027 = vpack.c.b16 %v4659, %v4651
    %v5028 = vpack.c.b16 %v4660, %v4652
    %v5029 = vpack.c.b16 %v4661, %v4653
    %v5030 = vpack.c.b16 %v4662, %v4654
    %v5031 = vpack.c.b16 %v4663, %v4655
    %v5032 = vpack.c.b16 %v4664, %v4656
    %v5033 = vpack.c.b16 %v4673, %v4665
    %v5034 = vpack.c.b16 %v4674, %v4666
    %v5035 = vpack.c.b16 %v4675, %v4667
    %v5036 = vpack.c.b16 %v4676, %v4668
    %v5037 = vpack.c.b16 %v4677, %v4669
    %v5038 = vpack.c.b16 %v4678, %v4670
    %v5039 = vpack.c.b16 %v4679, %v4671
    %v5040 = vpack.c.b16 %v4680, %v4672
    %v5041 = vpack.c.b16 %v4689, %v4681
    %v5042 = vpack.c.b16 %v4690, %v4682
    %v5043 = vpack.c.b16 %v4691, %v4683
    %v5044 = vpack.c.b16 %v4692, %v4684
    %v5045 = vpack.c.b16 %v4693, %v4685
    %v5046 = vpack.c.b16 %v4694, %v4686
    %v5047 = vpack.c.b16 %v4695, %v4687
    %v5048 = vpack.c.b16 %v4696, %v4688
    %v5049 = vpack.c.b16 %v4705, %v4697
    %v5050 = vpack.c.b16 %v4706, %v4698
    %v5051 = vpack.c.b16 %v4707, %v4699
    %v5052 = vpack.c.b16 %v4708, %v4700
    %v5053 = vpack.c.b16 %v4709, %v4701
    %v5054 = vpack.c.b16 %v4710, %v4702
    %v5055 = vpack.c.b16 %v4711, %v4703
    %v5056 = vpack.c.b16 %v4712, %v4704
    %v5057 = vpack.c.b16 %v4721, %v4713
    %v5058 = vpack.c.b16 %v4722, %v4714
    %v5059 = vpack.c.b16 %v4723, %v4715
    %v5060 = vpack.c.b16 %v4724, %v4716
    %v5061 = vpack.c.b16 %v4725, %v4717
    %v5062 = vpack.c.b16 %v4726, %v4718
    %v5063 = vpack.c.b16 %v4727, %v4719
    %v5064 = vpack.c.b16 %v4728, %v4720
    %v5065 = vpack.c.b16 %v4737, %v4729
    %v5066 = vpack.c.b16 %v4738, %v4730
    %v5067 = vpack.c.b16 %v4739, %v4731
    %v5068 = vpack.c.b16 %v4740, %v4732
    %v5069 = vpack.c.b16 %v4741, %v4733
    %v5070 = vpack.c.b16 %v4742, %v4734
    %v5071 = vpack.c.b16 %v4743, %v4735
    %v5072 = vpack.c.b16 %v4744, %v4736
    %v5073 = vpack.c.b16 %v4753, %v4745
    %v5074 = vpack.c.b16 %v4754, %v4746
    %v5075 = vpack.c.b16 %v4755, %v4747
    %v5076 = vpack.c.b16 %v4756, %v4748
    %v5077 = vpack.c.b16 %v4757, %v4749
    %v5078 = vpack.c.b16 %v4758, %v4750
    %v5079 = vpack.c.b16 %v4759, %v4751
    %v5080 = vpack.c.b16 %v4760, %v4752
    %v5081 = vpack.c.b16 %v4769, %v4761
    %v5082 = vpack.c.b16 %v4770, %v4762
    %v5083 = vpack.c.b16 %v4771, %v4763
    %v5084 = vpack.c.b16 %v4772, %v4764
    %v5085 = vpack.c.b16 %v4773, %v4765
    %v5086 = vpack.c.b16 %v4774, %v4766
    %v5087 = vpack.c.b16 %v4775, %v4767
    %v5088 = vpack.c.b16 %v4776, %v4768
    %v5089 = vpack.c.b16 %v4785, %v4777
    %v5090 = vpack.c.b16 %v4786, %v4778
    %v5091 = vpack.c.b16 %v4787, %v4779
    %v5092 = vpack.c.b16 %v4788, %v4780
    %v5093 = vpack.c.b16 %v4789, %v4781
    %v5094 = vpack.c.b16 %v4790, %v4782
    %v5095 = vpack.c.b16 %v4791, %v4783
    %v5096 = vpack.c.b16 %v4792, %v4784
    %v5097 = vpack.c.b16 %v4801, %v4793
    %v5098 = vpack.c.b16 %v4802, %v4794
    %v5099 = vpack.c.b16 %v4803, %v4795
    %v5100 = vpack.c.b16 %v4804, %v4796
    %v5101 = vpack.c.b16 %v4805, %v4797
    %v5102 = vpack.c.b16 %v4806, %v4798
    %v5103 = vpack.c.b16 %v4807, %v4799
    %v5104 = vpack.c.b16 %v4808, %v4800
    %v5105 = vpack.c.b16 %v4817, %v4809
    %v5106 = vpack.c.b16 %v4818, %v4810
    %v5107 = vpack.c.b16 %v4819, %v4811
    %v5108 = vpack.c.b16 %v4820, %v4812
    %v5109 = vpack.c.b16 %v4821, %v4813
    %v5110 = vpack.c.b16 %v4822, %v4814
    %v5111 = vpack.c.b16 %v4823, %v4815
    %v5112 = vpack.c.b16 %v4824, %v4816
    %v5113 = vpack.c.b16 %v4833, %v4825
    %v5114 = vpack.c.b16 %v4834, %v4826
    %v5115 = vpack.c.b16 %v4835, %v4827
    %v5116 = vpack.c.b16 %v4836, %v4828
    %v5117 = vpack.c.b16 %v4837, %v4829
    %v5118 = vpack.c.b16 %v4838, %v4830
    %v5119 = vpack.c.b16 %v4839, %v4831
    %v5120 = vpack.c.b16 %v4840, %v4832
    %v5121 = vpack.c.b16 %v4849, %v4841
    %v5122 = vpack.c.b16 %v4850, %v4842
    %v5123 = vpack.c.b16 %v4851, %v4843
    %v5124 = vpack.c.b16 %v4852, %v4844
    %v5125 = vpack.c.b16 %v4853, %v4845
    %v5126 = vpack.c.b16 %v4854, %v4846
    %v5127 = vpack.c.b16 %v4855, %v4847
    %v5128 = vpack.c.b16 %v4856, %v4848
    %v5129 = vpack.c.b16 %v4865, %v4857
    %v5130 = vpack.c.b16 %v4866, %v4858
    %v5131 = vpack.c.b16 %v4867, %v4859
    %v5132 = vpack.c.b16 %v4868, %v4860
    %v5133 = vpack.c.b16 %v4869, %v4861
    %v5134 = vpack.c.b16 %v4870, %v4862
    %v5135 = vpack.c.b16 %v4871, %v4863
    %v5136 = vpack.c.b16 %v4872, %v4864
    %v5137 = vpack.c.b16 %v4881, %v4873
    %v5138 = vpack.c.b16 %v4882, %v4874
    %v5139 = vpack.c.b16 %v4883, %v4875
    %v5140 = vpack.c.b16 %v4884, %v4876
    %v5141 = vpack.c.b16 %v4885, %v4877
    %v5142 = vpack.c.b16 %v4886, %v4878
    %v5143 = vpack.c.b16 %v4887, %v4879
    %v5144 = vpack.c.b16 %v4888, %v4880
    %5401 = vmatprep.subr.bf16.mxu0 %v4890
    %5402 = vmatpush1.bf16.msra.mxu0 %v4889
    %5403 = vmatprep.subr.bf16.mxu0 %v4898
    %5404 = vmatpush1.bf16.msra.mxu0 %v4897
    %5405 = vmatprep.subr.bf16.mxu0 %v4906
    %5406 = vmatpush1.bf16.msra.mxu0 %v4905
    %5407 = vmatprep.subr.bf16.mxu0 %v4914
    %5408 = vmatpush1.bf16.msra.mxu0 %v4913
    %5409 = vmatprep.subr.bf16.mxu0 %v4922
    %5410 = vmatpush1.bf16.msra.mxu0 %v4921
    %5411 = vmatprep.subr.bf16.mxu0 %v4930
    %5412 = vmatpush1.bf16.msra.mxu0 %v4929
    %5413 = vmatprep.subr.bf16.mxu0 %v4938
    %5414 = vmatpush1.bf16.msra.mxu0 %v4937
    %5415 = vmatprep.subr.bf16.mxu0 %v4946
    %5416 = vmatpush1.bf16.msra.mxu0 %v4945
    %5417 = vmatprep.subr.bf16.mxu0 %v4954
    %5418 = vmatpush1.bf16.msra.mxu0 %v4953
    %5419 = vmatprep.subr.bf16.mxu0 %v4962
    %5420 = vmatpush1.bf16.msra.mxu0 %v4961
    %5421 = vmatprep.subr.bf16.mxu0 %v4970
    %5422 = vmatpush1.bf16.msra.mxu0 %v4969
    %5423 = vmatprep.subr.bf16.mxu0 %v4978
    %5424 = vmatpush1.bf16.msra.mxu0 %v4977
    %5425 = vmatprep.subr.bf16.mxu0 %v4986
    %5426 = vmatpush1.bf16.msra.mxu0 %v4985
    %5427 = vmatprep.subr.bf16.mxu0 %v4994
    %5428 = vmatpush1.bf16.msra.mxu0 %v4993
    %5429 = vmatprep.subr.bf16.mxu0 %v5002
    %5430 = vmatpush1.bf16.msra.mxu0 %v5001
    %5431 = vmatprep.subr.bf16.mxu0 %v5010
    %5432 = vmatpush1.bf16.msra.mxu0 %v5009
    %5433 = vmatprep.mubr.bf16.mxu0 %v3820
    %5434 = vmatmul.mubr.bf16.gmra.mrb[0].mxu0 %v3819
    %v5435 = vpop.f32.mrb[0].mxu0
    %v5436 = vadd.f32 %v4084, %v5435
    %v5437 = vpop.f32.mrb[0].mxu0
    %v5438 = vadd.f32 %v4088, %v5437
    %v5439 = vpop.f32.mrb[0].mxu0
    %v5440 = vpop.f32.mrb[0].mxu0
    %5441 = vdwg.mxu0
    %5442 = vmatprep.subr.bf16.mxu0 %v5018
    %5443 = vmatpush1.bf16.msra.mxu0 %v5017
    %5444 = vmatprep.subr.bf16.mxu0 %v5026
    %5445 = vmatpush1.bf16.msra.mxu0 %v5025
    %5446 = vmatprep.subr.bf16.mxu0 %v5034
    %5447 = vmatpush1.bf16.msra.mxu0 %v5033
    %5448 = vmatprep.subr.bf16.mxu0 %v5042
    %5449 = vmatpush1.bf16.msra.mxu0 %v5041
    %5450 = vmatprep.subr.bf16.mxu0 %v5050
    %5451 = vmatpush1.bf16.msra.mxu0 %v5049
    %5452 = vmatprep.subr.bf16.mxu0 %v5058
    %5453 = vmatpush1.bf16.msra.mxu0 %v5057
    %5454 = vmatprep.subr.bf16.mxu0 %v5066
    %5455 = vmatpush1.bf16.msra.mxu0 %v5065
    %5456 = vmatprep.subr.bf16.mxu0 %v5074
    %5457 = vmatpush1.bf16.msra.mxu0 %v5073
    %5458 = vmatprep.subr.bf16.mxu0 %v5082
    %5459 = vmatpush1.bf16.msra.mxu0 %v5081
    %5460 = vmatprep.subr.bf16.mxu0 %v5090
    %5461 = vmatpush1.bf16.msra.mxu0 %v5089
    %5462 = vmatprep.subr.bf16.mxu0 %v5098
    %5463 = vmatpush1.bf16.msra.mxu0 %v5097
    %5464 = vmatprep.subr.bf16.mxu0 %v5106
    %5465 = vmatpush1.bf16.msra.mxu0 %v5105
    %5466 = vmatprep.subr.bf16.mxu0 %v5114
    %5467 = vmatpush1.bf16.msra.mxu0 %v5113
    %5468 = vmatprep.subr.bf16.mxu0 %v5122
    %5469 = vmatpush1.bf16.msra.mxu0 %v5121
    %5470 = vmatprep.subr.bf16.mxu0 %v5130
    %5471 = vmatpush1.bf16.msra.mxu0 %v5129
    %5472 = vmatprep.subr.bf16.mxu0 %v5138
    %5473 = vmatpush1.bf16.msra.mxu0 %v5137
    %5474 = vmatprep.mubr.bf16.mxu0 %v3822
    %5475 = vmatmul.mubr.bf16.gmra.mrb[0].mxu0 %v3821
    %v5476 = vpop.f32.mrb[0].mxu0
    %v5477 = vadd.f32 %v5436, %v5476
    %v5478 = vpop.f32.mrb[0].mxu0
    %v5479 = vadd.f32 %v5438, %v5478
    %v5480 = vpop.f32.mrb[0].mxu0
    %v5481 = vpop.f32.mrb[0].mxu0
    %5482 = vdwg.mxu0
    %5483 = vmatprep.subr.bf16.mxu0 %v4892
    %5484 = vmatpush1.bf16.msra.mxu0 %v4891
    %5485 = vmatprep.subr.bf16.mxu0 %v4900
    %5486 = vmatpush1.bf16.msra.mxu0 %v4899
    %5487 = vmatprep.subr.bf16.mxu0 %v4908
    %5488 = vmatpush1.bf16.msra.mxu0 %v4907
    %5489 = vmatprep.subr.bf16.mxu0 %v4916
    %5490 = vmatpush1.bf16.msra.mxu0 %v4915
    %5491 = vmatprep.subr.bf16.mxu0 %v4924
    %5492 = vmatpush1.bf16.msra.mxu0 %v4923
    %5493 = vmatprep.subr.bf16.mxu0 %v4932
    %5494 = vmatpush1.bf16.msra.mxu0 %v4931
    %5495 = vmatprep.subr.bf16.mxu0 %v4940
    %5496 = vmatpush1.bf16.msra.mxu0 %v4939
    %5497 = vmatprep.subr.bf16.mxu0 %v4948
    %5498 = vmatpush1.bf16.msra.mxu0 %v4947
    %5499 = vmatprep.subr.bf16.mxu0 %v4956
    %5500 = vmatpush1.bf16.msra.mxu0 %v4955
    %5501 = vmatprep.subr.bf16.mxu0 %v4964
    %5502 = vmatpush1.bf16.msra.mxu0 %v4963
    %5503 = vmatprep.subr.bf16.mxu0 %v4972
    %5504 = vmatpush1.bf16.msra.mxu0 %v4971
    %5505 = vmatprep.subr.bf16.mxu0 %v4980
    %5506 = vmatpush1.bf16.msra.mxu0 %v4979
    %5507 = vmatprep.subr.bf16.mxu0 %v4988
    %5508 = vmatpush1.bf16.msra.mxu0 %v4987
    %5509 = vmatprep.subr.bf16.mxu0 %v4996
    %5510 = vmatpush1.bf16.msra.mxu0 %v4995
    %5511 = vmatprep.subr.bf16.mxu0 %v5004
    %5512 = vmatpush1.bf16.msra.mxu0 %v5003
    %5513 = vmatprep.subr.bf16.mxu0 %v5012
    %5514 = vmatpush1.bf16.msra.mxu0 %v5011
    %5515 = vmatprep.mubr.bf16.mxu0 %v3820
    %5516 = vmatmul.mubr.bf16.gmra.mrb[0].mxu0 %v3819
    %v5517 = vpop.f32.mrb[0].mxu0
    %v5518 = vadd.f32 %v4092, %v5517
    %v5519 = vpop.f32.mrb[0].mxu0
    %v5520 = vadd.f32 %v4096, %v5519
    %v5521 = vpop.f32.mrb[0].mxu0
    %v5522 = vpop.f32.mrb[0].mxu0
    %5523 = vdwg.mxu0
    %5524 = vmatprep.subr.bf16.mxu0 %v5020
    %5525 = vmatpush1.bf16.msra.mxu0 %v5019
    %5526 = vmatprep.subr.bf16.mxu0 %v5028
    %5527 = vmatpush1.bf16.msra.mxu0 %v5027
    %5528 = vmatprep.subr.bf16.mxu0 %v5036
    %5529 = vmatpush1.bf16.msra.mxu0 %v5035
    %5530 = vmatprep.subr.bf16.mxu0 %v5044
    %5531 = vmatpush1.bf16.msra.mxu0 %v5043
    %5532 = vmatprep.subr.bf16.mxu0 %v5052
    %5533 = vmatpush1.bf16.msra.mxu0 %v5051
    %5534 = vmatprep.subr.bf16.mxu0 %v5060
    %5535 = vmatpush1.bf16.msra.mxu0 %v5059
    %5536 = vmatprep.subr.bf16.mxu0 %v5068
    %5537 = vmatpush1.bf16.msra.mxu0 %v5067
    %5538 = vmatprep.subr.bf16.mxu0 %v5076
    %5539 = vmatpush1.bf16.msra.mxu0 %v5075
    %5540 = vmatprep.subr.bf16.mxu0 %v5084
    %5541 = vmatpush1.bf16.msra.mxu0 %v5083
    %5542 = vmatprep.subr.bf16.mxu0 %v5092
    %5543 = vmatpush1.bf16.msra.mxu0 %v5091
    %5544 = vmatprep.subr.bf16.mxu0 %v5100
    %5545 = vmatpush1.bf16.msra.mxu0 %v5099
    %5546 = vmatprep.subr.bf16.mxu0 %v5108
    %5547 = vmatpush1.bf16.msra.mxu0 %v5107
    %5548 = vmatprep.subr.bf16.mxu0 %v5116
    %5549 = vmatpush1.bf16.msra.mxu0 %v5115
    %5550 = vmatprep.subr.bf16.mxu0 %v5124
    %5551 = vmatpush1.bf16.msra.mxu0 %v5123
    %5552 = vmatprep.subr.bf16.mxu0 %v5132
    %5553 = vmatpush1.bf16.msra.mxu0 %v5131
    %5554 = vmatprep.subr.bf16.mxu0 %v5140
    %5555 = vmatpush1.bf16.msra.mxu0 %v5139
    %5556 = vmatprep.mubr.bf16.mxu0 %v3822
    %5557 = vmatmul.mubr.bf16.gmra.mrb[0].mxu0 %v3821
    %v5558 = vpop.f32.mrb[0].mxu0
    %v5559 = vadd.f32 %v5518, %v5558
    %v5560 = vpop.f32.mrb[0].mxu0
    %v5561 = vadd.f32 %v5520, %v5560
    %v5562 = vpop.f32.mrb[0].mxu0
    %v5563 = vpop.f32.mrb[0].mxu0
    %5564 = vdwg.mxu0
    %5565 = vmatprep.subr.bf16.mxu0 %v4894
    %5566 = vmatpush1.bf16.msra.mxu0 %v4893
    %5567 = vmatprep.subr.bf16.mxu0 %v4902
    %5568 = vmatpush1.bf16.msra.mxu0 %v4901
    %5569 = vmatprep.subr.bf16.mxu0 %v4910
    %5570 = vmatpush1.bf16.msra.mxu0 %v4909
    %5571 = vmatprep.subr.bf16.mxu0 %v4918
    %5572 = vmatpush1.bf16.msra.mxu0 %v4917
    %5573 = vmatprep.subr.bf16.mxu0 %v4926
    %5574 = vmatpush1.bf16.msra.mxu0 %v4925
    %5575 = vmatprep.subr.bf16.mxu0 %v4934
    %5576 = vmatpush1.bf16.msra.mxu0 %v4933
    %5577 = vmatprep.subr.bf16.mxu0 %v4942
    %5578 = vmatpush1.bf16.msra.mxu0 %v4941
    %5579 = vmatprep.subr.bf16.mxu0 %v4950
    %5580 = vmatpush1.bf16.msra.mxu0 %v4949
    %5581 = vmatprep.subr.bf16.mxu0 %v4958
    %5582 = vmatpush1.bf16.msra.mxu0 %v4957
    %5583 = vmatprep.subr.bf16.mxu0 %v4966
    %5584 = vmatpush1.bf16.msra.mxu0 %v4965
    %5585 = vmatprep.subr.bf16.mxu0 %v4974
    %5586 = vmatpush1.bf16.msra.mxu0 %v4973
    %5587 = vmatprep.subr.bf16.mxu0 %v4982
    %5588 = vmatpush1.bf16.msra.mxu0 %v4981
    %5589 = vmatprep.subr.bf16.mxu0 %v4990
    %5590 = vmatpush1.bf16.msra.mxu0 %v4989
    %5591 = vmatprep.subr.bf16.mxu0 %v4998
    %5592 = vmatpush1.bf16.msra.mxu0 %v4997
    %5593 = vmatprep.subr.bf16.mxu0 %v5006
    %5594 = vmatpush1.bf16.msra.mxu0 %v5005
    %5595 = vmatprep.subr.bf16.mxu0 %v5014
    %5596 = vmatpush1.bf16.msra.mxu0 %v5013
    %5597 = vmatprep.mubr.bf16.mxu0 %v3820
    %5598 = vmatmul.mubr.bf16.gmra.mrb[0].mxu0 %v3819
    %v5599 = vpop.f32.mrb[0].mxu0
    %v5600 = vadd.f32 %v4100, %v5599
    %v5601 = vpop.f32.mrb[0].mxu0
    %v5602 = vadd.f32 %v4104, %v5601
    %v5603 = vpop.f32.mrb[0].mxu0
    %v5604 = vpop.f32.mrb[0].mxu0
    %5605 = vdwg.mxu0
    %5606 = vmatprep.subr.bf16.mxu0 %v5022
    %5607 = vmatpush1.bf16.msra.mxu0 %v5021
    %5608 = vmatprep.subr.bf16.mxu0 %v5030
    %5609 = vmatpush1.bf16.msra.mxu0 %v5029
    %5610 = vmatprep.subr.bf16.mxu0 %v5038
    %5611 = vmatpush1.bf16.msra.mxu0 %v5037
    %5612 = vmatprep.subr.bf16.mxu0 %v5046
    %5613 = vmatpush1.bf16.msra.mxu0 %v5045
    %5614 = vmatprep.subr.bf16.mxu0 %v5054
    %5615 = vmatpush1.bf16.msra.mxu0 %v5053
    %5616 = vmatprep.subr.bf16.mxu0 %v5062
    %5617 = vmatpush1.bf16.msra.mxu0 %v5061
    %5618 = vmatprep.subr.bf16.mxu0 %v5070
    %5619 = vmatpush1.bf16.msra.mxu0 %v5069
    %5620 = vmatprep.subr.bf16.mxu0 %v5078
    %5621 = vmatpush1.bf16.msra.mxu0 %v5077
    %5622 = vmatprep.subr.bf16.mxu0 %v5086
    %5623 = vmatpush1.bf16.msra.mxu0 %v5085
    %5624 = vmatprep.subr.bf16.mxu0 %v5094
    %5625 = vmatpush1.bf16.msra.mxu0 %v5093
    %5626 = vmatprep.subr.bf16.mxu0 %v5102
    %5627 = vmatpush1.bf16.msra.mxu0 %v5101
    %5628 = vmatprep.subr.bf16.mxu0 %v5110
    %5629 = vmatpush1.bf16.msra.mxu0 %v5109
    %5630 = vmatprep.subr.bf16.mxu0 %v5118
    %5631 = vmatpush1.bf16.msra.mxu0 %v5117
    %5632 = vmatprep.subr.bf16.mxu0 %v5126
    %5633 = vmatpush1.bf16.msra.mxu0 %v5125
    %5634 = vmatprep.subr.bf16.mxu0 %v5134
    %5635 = vmatpush1.bf16.msra.mxu0 %v5133
    %5636 = vmatprep.subr.bf16.mxu0 %v5142
    %5637 = vmatpush1.bf16.msra.mxu0 %v5141
    %5638 = vmatprep.mubr.bf16.mxu0 %v3822
    %5639 = vmatmul.mubr.bf16.gmra.mrb[0].mxu0 %v3821
    %v5640 = vpop.f32.mrb[0].mxu0
    %v5641 = vadd.f32 %v5600, %v5640
    %v5642 = vpop.f32.mrb[0].mxu0
    %v5643 = vadd.f32 %v5602, %v5642
    %v5644 = vpop.f32.mrb[0].mxu0
    %v5645 = vpop.f32.mrb[0].mxu0
    %5646 = vdwg.mxu0
    %5647 = vmatprep.subr.bf16.mxu0 %v4896
    %5648 = vmatpush1.bf16.msra.mxu0 %v4895
    %5649 = vmatprep.subr.bf16.mxu0 %v4904
    %5650 = vmatpush1.bf16.msra.mxu0 %v4903
    %5651 = vmatprep.subr.bf16.mxu0 %v4912
    %5652 = vmatpush1.bf16.msra.mxu0 %v4911
    %5653 = vmatprep.subr.bf16.mxu0 %v4920
    %5654 = vmatpush1.bf16.msra.mxu0 %v4919
    %5655 = vmatprep.subr.bf16.mxu0 %v4928
    %5656 = vmatpush1.bf16.msra.mxu0 %v4927
    %5657 = vmatprep.subr.bf16.mxu0 %v4936
    %5658 = vmatpush1.bf16.msra.mxu0 %v4935
    %5659 = vmatprep.subr.bf16.mxu0 %v4944
    %5660 = vmatpush1.bf16.msra.mxu0 %v4943
    %5661 = vmatprep.subr.bf16.mxu0 %v4952
    %5662 = vmatpush1.bf16.msra.mxu0 %v4951
    %5663 = vmatprep.subr.bf16.mxu0 %v4960
    %5664 = vmatpush1.bf16.msra.mxu0 %v4959
    %5665 = vmatprep.subr.bf16.mxu0 %v4968
    %5666 = vmatpush1.bf16.msra.mxu0 %v4967
    %5667 = vmatprep.subr.bf16.mxu0 %v4976
    %5668 = vmatpush1.bf16.msra.mxu0 %v4975
    %5669 = vmatprep.subr.bf16.mxu0 %v4984
    %5670 = vmatpush1.bf16.msra.mxu0 %v4983
    %5671 = vmatprep.subr.bf16.mxu0 %v4992
    %5672 = vmatpush1.bf16.msra.mxu0 %v4991
    %5673 = vmatprep.subr.bf16.mxu0 %v5000
    %5674 = vmatpush1.bf16.msra.mxu0 %v4999
    %5675 = vmatprep.subr.bf16.mxu0 %v5008
    %5676 = vmatpush1.bf16.msra.mxu0 %v5007
    %5677 = vmatprep.subr.bf16.mxu0 %v5016
    %5678 = vmatpush1.bf16.msra.mxu0 %v5015
    %5679 = vmatprep.mubr.bf16.mxu0 %v3820
    %5680 = vmatmul.mubr.bf16.gmra.mrb[0].mxu0 %v3819
    %v5681 = vpop.f32.mrb[0].mxu0
    %v5682 = vadd.f32 %v4108, %v5681
    %v5683 = vpop.f32.mrb[0].mxu0
    %v5684 = vadd.f32 %v4112, %v5683
    %v5685 = vpop.f32.mrb[0].mxu0
    %v5686 = vpop.f32.mrb[0].mxu0
    %5687 = vdwg.mxu0
    %5688 = vmatprep.subr.bf16.mxu0 %v5024
    %5689 = vmatpush1.bf16.msra.mxu0 %v5023
    %5690 = vmatprep.subr.bf16.mxu0 %v5032
    %5691 = vmatpush1.bf16.msra.mxu0 %v5031
    %5692 = vmatprep.subr.bf16.mxu0 %v5040
    %5693 = vmatpush1.bf16.msra.mxu0 %v5039
    %5694 = vmatprep.subr.bf16.mxu0 %v5048
    %5695 = vmatpush1.bf16.msra.mxu0 %v5047
    %5696 = vmatprep.subr.bf16.mxu0 %v5056
    %5697 = vmatpush1.bf16.msra.mxu0 %v5055
    %5698 = vmatprep.subr.bf16.mxu0 %v5064
    %5699 = vmatpush1.bf16.msra.mxu0 %v5063
    %5700 = vmatprep.subr.bf16.mxu0 %v5072
    %5701 = vmatpush1.bf16.msra.mxu0 %v5071
    %5702 = vmatprep.subr.bf16.mxu0 %v5080
    %5703 = vmatpush1.bf16.msra.mxu0 %v5079
    %5704 = vmatprep.subr.bf16.mxu0 %v5088
    %5705 = vmatpush1.bf16.msra.mxu0 %v5087
    %5706 = vmatprep.subr.bf16.mxu0 %v5096
    %5707 = vmatpush1.bf16.msra.mxu0 %v5095
    %5708 = vmatprep.subr.bf16.mxu0 %v5104
    %5709 = vmatpush1.bf16.msra.mxu0 %v5103
    %5710 = vmatprep.subr.bf16.mxu0 %v5112
    %5711 = vmatpush1.bf16.msra.mxu0 %v5111
    %5712 = vmatprep.subr.bf16.mxu0 %v5120
    %5713 = vmatpush1.bf16.msra.mxu0 %v5119
    %5714 = vmatprep.subr.bf16.mxu0 %v5128
    %5715 = vmatpush1.bf16.msra.mxu0 %v5127
    %5716 = vmatprep.subr.bf16.mxu0 %v5136
    %5717 = vmatpush1.bf16.msra.mxu0 %v5135
    %5718 = vmatprep.subr.bf16.mxu0 %v5144
    %5719 = vmatpush1.bf16.msra.mxu0 %v5143
    %5720 = vmatprep.mubr.bf16.mxu0 %v3822
    %5721 = vmatmul.mubr.bf16.gmra.mrb[0].mxu0 %v3821
    %v5722 = vpop.f32.mrb[0].mxu0
    %v5723 = vadd.f32 %v5682, %v5722
    %v5724 = vpop.f32.mrb[0].mxu0
    %v5725 = vadd.f32 %v5684, %v5724
    %v5726 = vpop.f32.mrb[0].mxu0
    %v5727 = vpop.f32.mrb[0].mxu0
    %5728 = vdwg.mxu0
    %v5729 = vxor.u32 %v5477, 2147483648
    %v5730 = vxor.u32 %v5479, 2147483648
    %v5731 = vxor.u32 %v5559, 2147483648
    %v5732 = vxor.u32 %v5561, 2147483648
    %v5733 = vxor.u32 %v5641, 2147483648
    %v5734 = vxor.u32 %v5643, 2147483648
    %v5735 = vxor.u32 %v5723, 2147483648
    %v5736 = vxor.u32 %v5725, 2147483648
    %v5737 = vmul.f32 %v5729, 1.442695
    %v5738 = vpow.pop %v5737
    %v5739 = vmul.f32 %v5730, 1.442695
    %v5740 = vpow.pop %v5739
    %v5741 = vmul.f32 %v5731, 1.442695
    %v5742 = vpow.pop %v5741
    %v5743 = vmul.f32 %v5732, 1.442695
    %v5744 = vpow.pop %v5743
    %v5745 = vmul.f32 %v5733, 1.442695
    %v5746 = vpow.pop %v5745
    %v5747 = vmul.f32 %v5734, 1.442695
    %v5748 = vpow.pop %v5747
    %v5749 = vmul.f32 %v5735, 1.442695
    %v5750 = vpow.pop %v5749
    %v5751 = vmul.f32 %v5736, 1.442695
    %v5752 = vpow.pop %v5751
    %v5753 = vadd.f32 %v5738, 1.0
    %v5754 = vadd.f32 %v5740, 1.0
    %v5755 = vadd.f32 %v5742, 1.0
    %v5756 = vadd.f32 %v5744, 1.0
    %v5757 = vadd.f32 %v5746, 1.0
    %v5758 = vadd.f32 %v5748, 1.0
    %v5759 = vadd.f32 %v5750, 1.0
    %v5760 = vadd.f32 %v5752, 1.0
    %v5761 = vrcp.pop %v5753
    %v5762 = vmul.f32 1.0, %v5761
    %v5763 = vrcp.pop %v5754
    %v5764 = vmul.f32 1.0, %v5763
    %v5765 = vrcp.pop %v5755
    %v5766 = vmul.f32 1.0, %v5765
    %v5767 = vrcp.pop %v5756
    %v5768 = vmul.f32 1.0, %v5767
    %v5769 = vrcp.pop %v5757
    %v5770 = vmul.f32 1.0, %v5769
    %v5771 = vrcp.pop %v5758
    %v5772 = vmul.f32 1.0, %v5771
    %v5773 = vrcp.pop %v5759
    %v5774 = vmul.f32 1.0, %v5773
    %v5775 = vrcp.pop %v5760
    %v5776 = vmul.f32 1.0, %v5775
    %v5785 = vcombine.low %v5762, %v5764
    %v5786 = vcombine.low %v5766, %v5768
    %v5788 = vunpack.c.l.s4 1983009808
    %v5789 = vunpack.c.0.s8 %v5788
    %v5790 = vlaneseq
    %v5791 = vshrl.u32 %v5790, 7
    %v5792 = vsub.s32 %v5789, %v5791
    %v5793 = vrot.slane %v5785, %v5792
    %v5795 = vunpack.c.l.s4 1983009808
    %v5796 = vunpack.c.0.s8 %v5795
    %v5797 = vlaneseq
    %v5798 = vshrl.u32 %v5797, 7
    %v5799 = vsub.s32 %v5796, %v5798
    %v5800 = vrot.slane %v5786, %v5799
    %v5801 = vcombine.low %v5793, %v5800
    %v5802 = vcombine.low %v5770, %v5772
    %v5803 = vcombine.low %v5774, %v5776
    %v5805 = vunpack.c.l.s4 1983009808
    %v5806 = vunpack.c.0.s8 %v5805
    %v5807 = vlaneseq
    %v5808 = vshrl.u32 %v5807, 7
    %v5809 = vsub.s32 %v5806, %v5808
    %v5810 = vrot.slane %v5802, %v5809
    %v5812 = vunpack.c.l.s4 1983009808
    %v5813 = vunpack.c.0.s8 %v5812
    %v5814 = vlaneseq
    %v5815 = vshrl.u32 %v5814, 7
    %v5816 = vsub.s32 %v5813, %v5815
    %v5817 = vrot.slane %v5803, %v5816
    %v5818 = vcombine.low %v5810, %v5817
    %5821 = vst [vmem:[%s13] sm:$0xff] %v5801
    %5822 = vst [vmem:[%s13 + $0x8] sm:$0xff] %v5818
    // Predicated region
    $region70: #{vae_forward.1} parent=1 // pred_check
      _
    $region71: #{vae_forward.1} parent=1 // pred_check_branch
      %5824 = sbr.rel (0) target = $region73
    $region72: #{vae_forward.1} parent=1 // pred_region
      _
    $region73: #{vae_forward.1} parent=1 // pred_fallthru
      _
    // Predicated region
    $region74: #{vae_forward.1} parent=1 // pred_check
      _
    $region75: #{vae_forward.1} parent=1 // pred_check_branch
      %5826 = sbr.rel (0) target = $region77
    $region76: #{vae_forward.1} parent=1 // pred_region
      _
    $region77: #{vae_forward.1} parent=1 // pred_fallthru
      _
    // Predicated region
    $region78: #{vae_forward.1} parent=1 // pred_check
      _
    $region79: #{vae_forward.1} parent=1 // pred_check_branch
      %5828 = sbr.rel (0) target = $region81
    $region80: #{vae_forward.1} parent=1 // pred_region
      _
    $region81: #{vae_forward.1} parent=1 // pred_fallthru
      _
    // Predicated region
    $region82: #{vae_forward.1} parent=1 // pred_check
      _
    $region83: #{vae_forward.1} parent=1 // pred_check_branch
      %5830 = sbr.rel (0) target = $region85
    $region84: #{vae_forward.1} parent=1 // pred_region
      _
    $region85: #{vae_forward.1} parent=1 // pred_fallthru
      _
    %5831 = vsyncpa [#allocation3], 1
    %5832 = vsyncpa [#allocation5], 1
    %5833 = vsyncpa [#allocation8], 1

</llo_original>
